<compile_context>
chip_gen: v7x
topology: tpu7x:2x2x1
jax: 0.10.0
libtpu: 0.0.40
codegen_flags: <defaults>
</compile_context>

<pallas_src>
import math

import numpy as np
import jax
import jax.numpy as jnp
from jax import lax
from jax.experimental import pallas as pl
from jax.experimental.pallas import tpu as pltpu

# ---- problem sizes (small, consistent with the module's __init__) ----
B = 2              # batch
HZN = 8            # planning horizon (sequence length)
OBS = 12           # dynamic_cfg['obs_dim']  (= cond_dim)
ACT = 4            # dynamic_cfg['act_dim']
C = OBS + ACT      # transition_dim = obs_dim + act_dim = 16
HD = 32            # hidden channels of the temporal block
E = 32             # time-embedding dim
GROUPS = 8         # GroupNorm groups
GSZ = HD // GROUPS
K = 5              # temporal conv kernel size (padding = 2)
T_DIFF = 4         # number of reverse diffusion steps
CF = HZN * C       # 128  flattened trajectory width (lanes)
HF = HZN * HD      # 256  flattened hidden width (lanes)


# ---------------------- diffusion schedule (trace-time constants) ----------
def _make_schedule(T):
    betas = np.linspace(1e-4, 0.02, T, dtype=np.float32)
    alphas = 1.0 - betas
    ac = np.cumprod(alphas)
    ac_prev = np.concatenate([np.ones(1, np.float32), ac[:-1]])
    sr = 1.0 / np.sqrt(ac)
    srm1 = np.sqrt(1.0 / ac - 1.0)
    post_var = betas * (1.0 - ac_prev) / (1.0 - ac)
    c1 = betas * np.sqrt(ac_prev) / (1.0 - ac)
    c2 = (1.0 - ac_prev) * np.sqrt(alphas) / (1.0 - ac)
    sigma = np.sqrt(np.maximum(post_var, 1e-20))
    return sr, srm1, c1, c2, sigma


_SR, _SRM1, _C1, _C2, _SIGMA = _make_schedule(T_DIFF)
_STEPS = list(range(T_DIFF - 1, -1, -1))          # t = T-1 .. 0 (reverse order)
# per unrolled step i: (sqrt_recip_ac, sqrt_recipm1_ac, post_coef1, post_coef2)
SCHED = [(float(_SR[t]), float(_SRM1[t]), float(_C1[t]), float(_C2[t])) for t in _STEPS]
# posterior sigma per step, noise gated off on the final step (t == 0)
SIGMA_REV = [float(_SIGMA[t]) for t in _STEPS[:-1]]


def _mish_host(v):
    # plain-JAX mish for the tiny host-side time MLP (not perf critical)
    return v * jnp.tanh(jax.nn.softplus(v))


# ----------------------------- Pallas kernel ------------------------------
def fused_sample_kernel(
    x0_ref,        # (B, CF)          initial (conditioned) noise trajectory
    condslab_ref,  # (B+1, CF)        row0 = keep-mask, rows 1..B = cond (embedded)
    tbias_ref,     # (T_DIFF, B, HF)  precomputed per-step time bias
    noise_ref,     # (T_DIFF-1, B, CF) sigma-prescaled posterior noise
    w1cat_ref,     # (CF, HF+CF) bf16 [conv1 Toeplitz | residual-through-out-conv]
    w2_ref,        # (HF, HF)   bf16  conv2 Toeplitz
    wo_ref,        # (HF, CF)   bf16  output 1x1 (block-diag)
    P_ref,         # (HF, HF)   f32   GroupNorm group-mean projection (1/n folded)
    bias_ref,      # (8, HF)    f32   rows: b1,g1,be1,b2,g2,be2,bo'(padded),0
    out_ref,       # (B, CF)    f32
):
    def mmw(a, w_ref):
        # bf16 MXU issue, f32 accumulate; weights read at point of use
        return jnp.dot(a.astype(w_ref.dtype), w_ref[...],
                       preferred_element_type=jnp.float32)

    def mish(v):
        # v * tanh(softplus(v)) == v * (u^2 + 2u) / (u^2 + 2u + 2), u = exp(v)
        u = jnp.exp(jnp.minimum(v, 20.0))          # clamp: avoid inf/inf -> NaN
        num = u * u + 2.0 * u
        return v * num * pl.reciprocal(num + 2.0, approx=True)

    def groupnorm(y, b_row, g_row, be_row, eps=1e-5):
        # y: (B, HF) flattened (horizon, channel); stats over (HZN x group-chans)
        y = y + bias_ref[b_row:b_row + 1, :]
        # single dot: group mean and E[y^2], already broadcast back to HF lanes
        stats = jnp.dot(jnp.concatenate([y, y * y], axis=0), P_ref[...],
                        preferred_element_type=jnp.float32)       # (2B, HF)
        mean = stats[:B]
        var = jnp.maximum(stats[B:] - mean * mean, 0.0)           # clamp
        yn = (y - mean) * lax.rsqrt(var + eps)
        return yn * bias_ref[g_row:g_row + 1, :] + bias_ref[be_row:be_row + 1, :]

    keep = condslab_ref[0:1, :]              # (1, CF): 0 on conditioned lanes
    condf = condslab_ref[1:1 + B, :]         # (B, CF): cond values, 0 elsewhere

    # x lives in vregs for the whole unrolled reverse-diffusion loop.
    x = x0_ref[...]                          # (B, CF)

    for i in range(T_DIFF):                  # static T_DIFF=4 -> fully unrolled
        sr, srm1, c1, c2 = SCHED[i]          # Python floats -> VPU immediates

        # ---- ResidualTemporalBlock eps-network (5 MXU dots per step) ----
        xc = mmw(x, w1cat_ref)                       # (B, HF+CF): conv1 | residual
        h1 = mish(groupnorm(xc[:, :HF], 0, 1, 2)) + tbias_ref[i]
        h2 = mish(groupnorm(mmw(h1, w2_ref), 3, 4, 5))
        eps_net = mmw(h2, wo_ref) + xc[:, HF:] + bias_ref[6:7, :CF]   # (B, CF)

        # ---- Gaussian diffusion p_sample (clip_denoised=True) ----
        x_recon = jnp.clip(sr * x - srm1 * eps_net, -1.0, 1.0)
        x = c1 * x_recon + c2 * x
        if i < T_DIFF - 1:                   # final step (t=0): no noise term
            x = x + noise_ref[i]
        # apply_conditioning: mask-multiply + add, no partial stores
        x = x * keep + condf

    out_ref[...] = x


def fused_sample(x0, condslab, tbias, noise_scaled, q):
    vmem = pl.BlockSpec(memory_space=pltpu.MemorySpace.VMEM)
    return pl.pallas_call(
        fused_sample_kernel,
        out_shape=jax.ShapeDtypeStruct((B, CF), jnp.float32),
        in_specs=[vmem] * 9,
        out_specs=vmem,
    )(x0, condslab, tbias, noise_scaled,
      q['w1cat'], q['w2'], q['wo'], q['P'], q['bias'])


# ------------------------------- JAX glue ---------------------------------
def init_params(key):
    ks = jax.random.split(key, 8)

    def dense(k, shape, fan_in):
        return (jax.random.normal(k, shape, jnp.float32) /
                jnp.sqrt(jnp.float32(fan_in)))

    p = {}
    p['w1'] = dense(ks[0], (K, C, HD), K * C)
    p['b1'] = jnp.zeros((HD,), jnp.float32)
    p['g1'] = jnp.ones((HD,), jnp.float32)
    p['be1'] = jnp.zeros((HD,), jnp.float32)
    p['wt'] = dense(ks[1], (E, HD), E)
    p['bt'] = jnp.zeros((HD,), jnp.float32)
    p['w2'] = dense(ks[2], (K, HD, HD), K * HD)
    p['b2'] = jnp.zeros((HD,), jnp.float32)
    p['g2'] = jnp.ones((HD,), jnp.float32)
    p['be2'] = jnp.zeros((HD,), jnp.float32)
    p['wr'] = dense(ks[3], (C, HD), C)
    p['br'] = jnp.zeros((HD,), jnp.float32)
    p['wo'] = dense(ks[4], (HD, C), HD)
    p['bo'] = jnp.zeros((C,), jnp.float32)
    # base time MLP (sinusoidal -> Linear -> Mish -> Linear), tiny => JAX glue
    p['wt1'] = dense(ks[5], (E, 4 * E), E)
    p['bt1'] = jnp.zeros((4 * E,), jnp.float32)
    p['wt2'] = dense(ks[6], (4 * E, E), 4 * E)
    p['bt2'] = jnp.zeros((E,), jnp.float32)
    return p


def prepare_kernel_params(p):
    """Precompute (once, in plain JAX) the Toeplitz / block-diag conv matrices,
    the residual-through-output fold, the GroupNorm projection P and the packed
    bias slab. Big matmul weights are stored in bf16; P and biases stay f32."""
    def toeplitz(W):
        # W: (K, Cin, Cout), 'same' padding -> (HZN*Cin, HZN*Cout)
        Kk, Cin, Cout = W.shape
        pad = (Kk - 1) // 2
        hi = jnp.arange(HZN)[:, None]
        ho = jnp.arange(HZN)[None, :]
        k = hi - ho + pad
        valid = ((k >= 0) & (k < Kk)).astype(jnp.float32)
        Wk = W[jnp.clip(k, 0, Kk - 1)] * valid[..., None, None]   # (H,H,Cin,Cout)
        return jnp.transpose(Wk, (0, 2, 1, 3)).reshape(HZN * Cin, HZN * Cout)

    def tile_row(v):
        return jnp.tile(v, HZN)                 # flat idx h*len(v)+c -> v[c]

    w1 = toeplitz(p['w1'])                      # (CF, HF)
    w2 = toeplitz(p['w2'])                      # (HF, HF)
    wr = toeplitz(p['wr'][None])                # block-diag (CF, HF)
    wo = toeplitz(p['wo'][None])                # block-diag (HF, CF)

    # fold residual path through the output conv:  (x@wr + br) @ wo
    wro = wr @ wo                               # (CF, CF)
    boP = tile_row(p['br']) @ wo + tile_row(p['bo'])              # (CF,)
    w1cat = jnp.concatenate([w1, wro], axis=1)  # (CF, HF+CF) = (128, 384)

    # packed bias / gamma / beta slab (one DMA instead of nine)
    bias = jnp.zeros((8, HF), jnp.float32)
    bias = bias.at[0:6].set(jnp.stack([
        tile_row(p['b1']), tile_row(p['g1']), tile_row(p['be1']),
        tile_row(p['b2']), tile_row(p['g2']), tile_row(p['be2'])]))
    bias = bias.at[6, :CF].set(boP)

    # GroupNorm projection: P[i,j] = 1/n if group(i)==group(j) else 0
    ch = jnp.arange(HF) % HD
    mg = (ch[:, None] // GSZ ==
          jnp.arange(GROUPS)[None, :]).astype(jnp.float32)        # (HF, G)
    P = (mg @ mg.T) / float(HZN * GSZ)                            # (HF, HF)

    return {'w1cat': w1cat.astype(jnp.bfloat16),
            'w2': w2.astype(jnp.bfloat16),
            'wo': wo.astype(jnp.bfloat16),
            'P': P,
            'bias': bias}


def time_bias_all(ts, p):
    """Sinusoidal embedding + base time MLP + per-block time linear, for all
    diffusion steps at once -> (T_DIFF, B, HF) additive bias for h1."""
    half = E // 2
    freqs = jnp.exp(jnp.arange(half, dtype=jnp.float32)
                    * (-math.log(10000.0) / (half - 1)))
    ang = ts[:, None].astype(jnp.float32) * freqs[None, :]        # (T, half)
    emb = jnp.concatenate([jnp.sin(ang), jnp.cos(ang)], axis=-1)  # (T, E)
    h = _mish_host(emb @ p['wt1'] + p['bt1'])
    temb = h @ p['wt2'] + p['bt2']                                # (T, E)
    tb = _mish_host(temb) @ p['wt'] + p['bt']                     # (T, HD)
    tb = jnp.tile(tb, (1, HZN))                                   # (T, HF)
    return jnp.broadcast_to(tb[:, None, :], (ts.shape[0], B, HF))


def diffusion_forward(cond, params, key):
    """DiffusionWrapper.forward(cond) == GaussianDiffusion.conditional_sample."""
    key, k0, kn = jax.random.split(key, 3)
    x0 = jax.random.normal(k0, (B, CF), jnp.float32)
    x0 = x0.at[:, ACT:C].set(cond)                   # condition the initial noise

    # posterior noise for steps t = T-1 .. 1, pre-scaled by sigma (nz*sigma fold)
    noise = jax.random.normal(kn, (T_DIFF - 1, B, CF), jnp.float32)
    noise_scaled = noise * jnp.asarray(SIGMA_REV, jnp.float32)[:, None, None]

    # conditioning slab: row 0 keep-mask, rows 1..B cond embedded at lanes [ACT,C)
    keep = jnp.ones((CF,), jnp.float32).at[ACT:C].set(0.0)
    condf = jnp.zeros((B, CF), jnp.float32).at[:, ACT:C].set(cond)
    condslab = jnp.concatenate([keep[None, :], condf], axis=0)    # (B+1, CF)

    steps = jnp.asarray(_STEPS, jnp.int32)           # t = T-1 .. 0
    tbias = time_bias_all(steps, params)             # (T_DIFF, B, HF)

    q = prepare_kernel_params(params)
    out = fused_sample(x0, condslab, tbias, noise_scaled, q)
    return out.reshape(B, HZN, C)

# TODO(synk): the full diffuser TemporalUnet has multiple down/up resolutions;
# a single residual temporal block is used here to keep the synthetic kernel small.


if __name__ == "__main__":
    key = jax.random.PRNGKey(0)
    kp, kc, ks = jax.random.split(key, 3)
    params = init_params(kp)
    cond = jax.random.normal(kc, (B, OBS), jnp.float32)   # conditioning obs at t=0
    out = diffusion_forward(cond, params, ks)
    out = jax.block_until_ready(out)
    assert out.shape == (B, HZN, C)
    assert bool(jnp.all(jnp.isfinite(out)))
    print("KERNEL_OK")
</pallas_src>

<mosaic_0001>
module attributes {stable_mosaic.version = 11 : i64} {
  func.func @fused_sample_kernel(%arg0: memref<2x128xf32, #tpu.memory_space<vmem>>, %arg1: memref<3x128xf32, #tpu.memory_space<vmem>>, %arg2: memref<4x2x256xf32, #tpu.memory_space<vmem>>, %arg3: memref<3x2x128xf32, #tpu.memory_space<vmem>>, %arg4: memref<128x384xbf16, #tpu.memory_space<vmem>>, %arg5: memref<256x256xbf16, #tpu.memory_space<vmem>>, %arg6: memref<256x128xbf16, #tpu.memory_space<vmem>>, %arg7: memref<256x256xf32, #tpu.memory_space<vmem>>, %arg8: memref<8x256xf32, #tpu.memory_space<vmem>>, %arg9: memref<2x128xf32, #tpu.memory_space<vmem>>) attributes {dimension_semantics = [], scalar_prefetch = 0 : i64, scratch_operands = 0 : i64, tpu.core_type = #tpu.core_type<tc>} {
    %c0 = arith.constant 0 : index
    %c0_0 = arith.constant 0 : index
    %0 = vector.load %arg1[%c0, %c0_0] : memref<3x128xf32, #tpu.memory_space<vmem>>, vector<1x128xf32>
    %c1 = arith.constant 1 : index
    %c0_1 = arith.constant 0 : index
    %1 = vector.load %arg1[%c1, %c0_1] : memref<3x128xf32, #tpu.memory_space<vmem>>, vector<2x128xf32>
    %c0_2 = arith.constant 0 : index
    %c0_3 = arith.constant 0 : index
    %2 = vector.load %arg0[%c0_2, %c0_3] : memref<2x128xf32, #tpu.memory_space<vmem>>, vector<2x128xf32>
    %3 = arith.truncf %2 : vector<2x128xf32> to vector<2x128xbf16>
    %c0_4 = arith.constant 0 : index
    %c0_5 = arith.constant 0 : index
    %4 = vector.load %arg4[%c0_4, %c0_5] : memref<128x384xbf16, #tpu.memory_space<vmem>>, vector<128x384xbf16>
    %cst = arith.constant dense<0.000000e+00> : vector<2x384xf32>
    %5 = tpu.matmul %3, %4, %cst {dimension_numbers = #tpu.dot_dimension_numbers<[1], [0], [0], [1], [0, 0, 1, 1], [], []>} : vector<2x128xbf16>, vector<128x384xbf16>, vector<2x384xf32> -> vector<2x384xf32>
    %6 = vector.extract_strided_slice %5 {offsets = [0, 0], sizes = [2, 256], strides = [1, 1]} : vector<2x384xf32> to vector<2x256xf32>
    %c0_6 = arith.constant 0 : index
    %c0_7 = arith.constant 0 : index
    %7 = vector.load %arg8[%c0_6, %c0_7] : memref<8x256xf32, #tpu.memory_space<vmem>>, vector<1x256xf32>
    %8 = vector.broadcast %7 : vector<1x256xf32> to vector<2x256xf32>
    %9 = arith.addf %6, %8 : vector<2x256xf32>
    %10 = arith.mulf %9, %9 : vector<2x256xf32>
    %11 = tpu.concatenate %9, %10 in 0 : vector<2x256xf32>, vector<2x256xf32> -> vector<4x256xf32>
    %c0_8 = arith.constant 0 : index
    %c0_9 = arith.constant 0 : index
    %12 = vector.load %arg7[%c0_8, %c0_9] : memref<256x256xf32, #tpu.memory_space<vmem>>, vector<256x256xf32>
    %cst_10 = arith.constant dense<0.000000e+00> : vector<4x256xf32>
    %13 = tpu.matmul %11, %12, %cst_10 {dimension_numbers = #tpu.dot_dimension_numbers<[1], [0], [0], [1], [0, 0, 1, 1], [], []>} : vector<4x256xf32>, vector<256x256xf32>, vector<4x256xf32> -> vector<4x256xf32>
    %14 = vector.extract_strided_slice %13 {offsets = [0, 0], sizes = [2, 256], strides = [1, 1]} : vector<4x256xf32> to vector<2x256xf32>
    %15 = vector.extract_strided_slice %13 {offsets = [2, 0], sizes = [2, 256], strides = [1, 1]} : vector<4x256xf32> to vector<2x256xf32>
    %16 = arith.mulf %14, %14 : vector<2x256xf32>
    %17 = arith.subf %15, %16 : vector<2x256xf32>
    %cst_11 = arith.constant 0.000000e+00 : f32
    %18 = vector.broadcast %cst_11 : f32 to vector<2x256xf32>
    %19 = arith.maximumf %17, %18 : vector<2x256xf32>
    %20 = arith.subf %9, %14 : vector<2x256xf32>
    %cst_12 = arith.constant 9.99999974E-6 : f32
    %21 = vector.broadcast %cst_12 : f32 to vector<2x256xf32>
    %22 = arith.addf %19, %21 : vector<2x256xf32>
    %23 = math.rsqrt %22 : vector<2x256xf32>
    %24 = arith.mulf %20, %23 : vector<2x256xf32>
    %c1_13 = arith.constant 1 : index
    %c0_14 = arith.constant 0 : index
    %25 = vector.load %arg8[%c1_13, %c0_14] : memref<8x256xf32, #tpu.memory_space<vmem>>, vector<1x256xf32>
    %26 = vector.broadcast %25 : vector<1x256xf32> to vector<2x256xf32>
    %27 = arith.mulf %24, %26 : vector<2x256xf32>
    %c2 = arith.constant 2 : index
    %c0_15 = arith.constant 0 : index
    %28 = vector.load %arg8[%c2, %c0_15] : memref<8x256xf32, #tpu.memory_space<vmem>>, vector<1x256xf32>
    %29 = vector.broadcast %28 : vector<1x256xf32> to vector<2x256xf32>
    %30 = arith.addf %27, %29 : vector<2x256xf32>
    %cst_16 = arith.constant 2.000000e+01 : f32
    %31 = vector.broadcast %cst_16 : f32 to vector<2x256xf32>
    %32 = arith.minimumf %30, %31 : vector<2x256xf32>
    %33 = math.exp %32 : vector<2x256xf32>
    %34 = arith.mulf %33, %33 : vector<2x256xf32>
    %cst_17 = arith.constant 2.000000e+00 : f32
    %35 = vector.broadcast %cst_17 : f32 to vector<2x256xf32>
    %36 = arith.mulf %35, %33 : vector<2x256xf32>
    %37 = arith.addf %34, %36 : vector<2x256xf32>
    %38 = arith.mulf %30, %37 : vector<2x256xf32>
    %cst_18 = arith.constant 2.000000e+00 : f32
    %39 = vector.broadcast %cst_18 : f32 to vector<2x256xf32>
    %40 = arith.addf %37, %39 : vector<2x256xf32>
    %41 = tpu.reciprocal %40 {approx = true} : vector<2x256xf32> -> vector<2x256xf32>
    %42 = arith.mulf %38, %41 : vector<2x256xf32>
    %c0_19 = arith.constant 0 : index
    %c0_20 = arith.constant 0 : index
    %c0_21 = arith.constant 0 : index
    %43 = vector.load %arg2[%c0_19, %c0_20, %c0_21] : memref<4x2x256xf32, #tpu.memory_space<vmem>>, vector<1x2x256xf32>
    %44 = vector.shape_cast %43 : vector<1x2x256xf32> to vector<2x256xf32>
    %45 = arith.addf %42, %44 : vector<2x256xf32>
    %46 = arith.truncf %45 : vector<2x256xf32> to vector<2x256xbf16>
    %c0_22 = arith.constant 0 : index
    %c0_23 = arith.constant 0 : index
    %47 = vector.load %arg5[%c0_22, %c0_23] : memref<256x256xbf16, #tpu.memory_space<vmem>>, vector<256x256xbf16>
    %cst_24 = arith.constant dense<0.000000e+00> : vector<2x256xf32>
    %48 = tpu.matmul %46, %47, %cst_24 {dimension_numbers = #tpu.dot_dimension_numbers<[1], [0], [0], [1], [0, 0, 1, 1], [], []>} : vector<2x256xbf16>, vector<256x256xbf16>, vector<2x256xf32> -> vector<2x256xf32>
    %c3 = arith.constant 3 : index
    %c0_25 = arith.constant 0 : index
    %49 = vector.load %arg8[%c3, %c0_25] : memref<8x256xf32, #tpu.memory_space<vmem>>, vector<1x256xf32>
    %50 = vector.broadcast %49 : vector<1x256xf32> to vector<2x256xf32>
    %51 = arith.addf %48, %50 : vector<2x256xf32>
    %52 = arith.mulf %51, %51 : vector<2x256xf32>
    %53 = tpu.concatenate %51, %52 in 0 : vector<2x256xf32>, vector<2x256xf32> -> vector<4x256xf32>
    %c0_26 = arith.constant 0 : index
    %c0_27 = arith.constant 0 : index
    %54 = vector.load %arg7[%c0_26, %c0_27] : memref<256x256xf32, #tpu.memory_space<vmem>>, vector<256x256xf32>
    %cst_28 = arith.constant dense<0.000000e+00> : vector<4x256xf32>
    %55 = tpu.matmul %53, %54, %cst_28 {dimension_numbers = #tpu.dot_dimension_numbers<[1], [0], [0], [1], [0, 0, 1, 1], [], []>} : vector<4x256xf32>, vector<256x256xf32>, vector<4x256xf32> -> vector<4x256xf32>
    %56 = vector.extract_strided_slice %55 {offsets = [0, 0], sizes = [2, 256], strides = [1, 1]} : vector<4x256xf32> to vector<2x256xf32>
    %57 = vector.extract_strided_slice %55 {offsets = [2, 0], sizes = [2, 256], strides = [1, 1]} : vector<4x256xf32> to vector<2x256xf32>
    %58 = arith.mulf %56, %56 : vector<2x256xf32>
    %59 = arith.subf %57, %58 : vector<2x256xf32>
    %cst_29 = arith.constant 0.000000e+00 : f32
    %60 = vector.broadcast %cst_29 : f32 to vector<2x256xf32>
    %61 = arith.maximumf %59, %60 : vector<2x256xf32>
    %62 = arith.subf %51, %56 : vector<2x256xf32>
    %cst_30 = arith.constant 9.99999974E-6 : f32
    %63 = vector.broadcast %cst_30 : f32 to vector<2x256xf32>
    %64 = arith.addf %61, %63 : vector<2x256xf32>
    %65 = math.rsqrt %64 : vector<2x256xf32>
    %66 = arith.mulf %62, %65 : vector<2x256xf32>
    %c4 = arith.constant 4 : index
    %c0_31 = arith.constant 0 : index
    %67 = vector.load %arg8[%c4, %c0_31] : memref<8x256xf32, #tpu.memory_space<vmem>>, vector<1x256xf32>
    %68 = vector.broadcast %67 : vector<1x256xf32> to vector<2x256xf32>
    %69 = arith.mulf %66, %68 : vector<2x256xf32>
    %c5 = arith.constant 5 : index
    %c0_32 = arith.constant 0 : index
    %70 = vector.load %arg8[%c5, %c0_32] : memref<8x256xf32, #tpu.memory_space<vmem>>, vector<1x256xf32>
    %71 = vector.broadcast %70 : vector<1x256xf32> to vector<2x256xf32>
    %72 = arith.addf %69, %71 : vector<2x256xf32>
    %cst_33 = arith.constant 2.000000e+01 : f32
    %73 = vector.broadcast %cst_33 : f32 to vector<2x256xf32>
    %74 = arith.minimumf %72, %73 : vector<2x256xf32>
    %75 = math.exp %74 : vector<2x256xf32>
    %76 = arith.mulf %75, %75 : vector<2x256xf32>
    %cst_34 = arith.constant 2.000000e+00 : f32
    %77 = vector.broadcast %cst_34 : f32 to vector<2x256xf32>
    %78 = arith.mulf %77, %75 : vector<2x256xf32>
    %79 = arith.addf %76, %78 : vector<2x256xf32>
    %80 = arith.mulf %72, %79 : vector<2x256xf32>
    %cst_35 = arith.constant 2.000000e+00 : f32
    %81 = vector.broadcast %cst_35 : f32 to vector<2x256xf32>
    %82 = arith.addf %79, %81 : vector<2x256xf32>
    %83 = tpu.reciprocal %82 {approx = true} : vector<2x256xf32> -> vector<2x256xf32>
    %84 = arith.mulf %80, %83 : vector<2x256xf32>
    %85 = arith.truncf %84 : vector<2x256xf32> to vector<2x256xbf16>
    %c0_36 = arith.constant 0 : index
    %c0_37 = arith.constant 0 : index
    %86 = vector.load %arg6[%c0_36, %c0_37] : memref<256x128xbf16, #tpu.memory_space<vmem>>, vector<256x128xbf16>
    %cst_38 = arith.constant dense<0.000000e+00> : vector<2x128xf32>
    %87 = tpu.matmul %85, %86, %cst_38 {dimension_numbers = #tpu.dot_dimension_numbers<[1], [0], [0], [1], [0, 0, 1, 1], [], []>} : vector<2x256xbf16>, vector<256x128xbf16>, vector<2x128xf32> -> vector<2x128xf32>
    %88 = vector.extract_strided_slice %5 {offsets = [0, 256], sizes = [2, 128], strides = [1, 1]} : vector<2x384xf32> to vector<2x128xf32>
    %89 = arith.addf %87, %88 : vector<2x128xf32>
    %c6 = arith.constant 6 : index
    %c0_39 = arith.constant 0 : index
    %90 = vector.load %arg8[%c6, %c0_39] : memref<8x256xf32, #tpu.memory_space<vmem>>, vector<1x128xf32>
    %91 = vector.broadcast %90 : vector<1x128xf32> to vector<2x128xf32>
    %92 = arith.addf %89, %91 : vector<2x128xf32>
    %cst_40 = arith.constant 1.02046442 : f32
    %93 = vector.broadcast %cst_40 : f32 to vector<2x128xf32>
    %94 = arith.mulf %93, %2 : vector<2x128xf32>
    %cst_41 = arith.constant 0.203341156 : f32
    %95 = vector.broadcast %cst_41 : f32 to vector<2x128xf32>
    %96 = arith.mulf %95, %92 : vector<2x128xf32>
    %97 = arith.subf %94, %96 : vector<2x128xf32>
    %cst_42 = arith.constant -1.000000e+00 : f32
    %cst_43 = arith.constant 1.000000e+00 : f32
    %98 = vector.broadcast %cst_42 : f32 to vector<2x128xf32>
    %99 = arith.maximumf %98, %97 : vector<2x128xf32>
    %100 = vector.broadcast %cst_43 : f32 to vector<2x128xf32>
    %101 = arith.minimumf %100, %99 : vector<2x128xf32>
    %cst_44 = arith.constant 0.498613864 : f32
    %102 = vector.broadcast %cst_44 : f32 to vector<2x128xf32>
    %103 = arith.mulf %102, %101 : vector<2x128xf32>
    %cst_45 = arith.constant 0.501335144 : f32
    %104 = vector.broadcast %cst_45 : f32 to vector<2x128xf32>
    %105 = arith.mulf %104, %2 : vector<2x128xf32>
    %106 = arith.addf %103, %105 : vector<2x128xf32>
    %c0_46 = arith.constant 0 : index
    %c0_47 = arith.constant 0 : index
    %c0_48 = arith.constant 0 : index
    %107 = vector.load %arg3[%c0_46, %c0_47, %c0_48] : memref<3x2x128xf32, #tpu.memory_space<vmem>>, vector<1x2x128xf32>
    %108 = vector.shape_cast %107 : vector<1x2x128xf32> to vector<2x128xf32>
    %109 = arith.addf %106, %108 : vector<2x128xf32>
    %110 = vector.broadcast %0 : vector<1x128xf32> to vector<2x128xf32>
    %111 = arith.mulf %109, %110 : vector<2x128xf32>
    %112 = arith.addf %111, %1 : vector<2x128xf32>
    %113 = arith.truncf %112 : vector<2x128xf32> to vector<2x128xbf16>
    %c0_49 = arith.constant 0 : index
    %c0_50 = arith.constant 0 : index
    %114 = vector.load %arg4[%c0_49, %c0_50] : memref<128x384xbf16, #tpu.memory_space<vmem>>, vector<128x384xbf16>
    %cst_51 = arith.constant dense<0.000000e+00> : vector<2x384xf32>
    %115 = tpu.matmul %113, %114, %cst_51 {dimension_numbers = #tpu.dot_dimension_numbers<[1], [0], [0], [1], [0, 0, 1, 1], [], []>} : vector<2x128xbf16>, vector<128x384xbf16>, vector<2x384xf32> -> vector<2x384xf32>
    %116 = vector.extract_strided_slice %115 {offsets = [0, 0], sizes = [2, 256], strides = [1, 1]} : vector<2x384xf32> to vector<2x256xf32>
    %c0_52 = arith.constant 0 : index
    %c0_53 = arith.constant 0 : index
    %117 = vector.load %arg8[%c0_52, %c0_53] : memref<8x256xf32, #tpu.memory_space<vmem>>, vector<1x256xf32>
    %118 = vector.broadcast %117 : vector<1x256xf32> to vector<2x256xf32>
    %119 = arith.addf %116, %118 : vector<2x256xf32>
    %120 = arith.mulf %119, %119 : vector<2x256xf32>
    %121 = tpu.concatenate %119, %120 in 0 : vector<2x256xf32>, vector<2x256xf32> -> vector<4x256xf32>
    %c0_54 = arith.constant 0 : index
    %c0_55 = arith.constant 0 : index
    %122 = vector.load %arg7[%c0_54, %c0_55] : memref<256x256xf32, #tpu.memory_space<vmem>>, vector<256x256xf32>
    %cst_56 = arith.constant dense<0.000000e+00> : vector<4x256xf32>
    %123 = tpu.matmul %121, %122, %cst_56 {dimension_numbers = #tpu.dot_dimension_numbers<[1], [0], [0], [1], [0, 0, 1, 1], [], []>} : vector<4x256xf32>, vector<256x256xf32>, vector<4x256xf32> -> vector<4x256xf32>
    %124 = vector.extract_strided_slice %123 {offsets = [0, 0], sizes = [2, 256], strides = [1, 1]} : vector<4x256xf32> to vector<2x256xf32>
    %125 = vector.extract_strided_slice %123 {offsets = [2, 0], sizes = [2, 256], strides = [1, 1]} : vector<4x256xf32> to vector<2x256xf32>
    %126 = arith.mulf %124, %124 : vector<2x256xf32>
    %127 = arith.subf %125, %126 : vector<2x256xf32>
    %cst_57 = arith.constant 0.000000e+00 : f32
    %128 = vector.broadcast %cst_57 : f32 to vector<2x256xf32>
    %129 = arith.maximumf %127, %128 : vector<2x256xf32>
    %130 = arith.subf %119, %124 : vector<2x256xf32>
    %cst_58 = arith.constant 9.99999974E-6 : f32
    %131 = vector.broadcast %cst_58 : f32 to vector<2x256xf32>
    %132 = arith.addf %129, %131 : vector<2x256xf32>
    %133 = math.rsqrt %132 : vector<2x256xf32>
    %134 = arith.mulf %130, %133 : vector<2x256xf32>
    %c1_59 = arith.constant 1 : index
    %c0_60 = arith.constant 0 : index
    %135 = vector.load %arg8[%c1_59, %c0_60] : memref<8x256xf32, #tpu.memory_space<vmem>>, vector<1x256xf32>
    %136 = vector.broadcast %135 : vector<1x256xf32> to vector<2x256xf32>
    %137 = arith.mulf %134, %136 : vector<2x256xf32>
    %c2_61 = arith.constant 2 : index
    %c0_62 = arith.constant 0 : index
    %138 = vector.load %arg8[%c2_61, %c0_62] : memref<8x256xf32, #tpu.memory_space<vmem>>, vector<1x256xf32>
    %139 = vector.broadcast %138 : vector<1x256xf32> to vector<2x256xf32>
    %140 = arith.addf %137, %139 : vector<2x256xf32>
    %cst_63 = arith.constant 2.000000e+01 : f32
    %141 = vector.broadcast %cst_63 : f32 to vector<2x256xf32>
    %142 = arith.minimumf %140, %141 : vector<2x256xf32>
    %143 = math.exp %142 : vector<2x256xf32>
    %144 = arith.mulf %143, %143 : vector<2x256xf32>
    %cst_64 = arith.constant 2.000000e+00 : f32
    %145 = vector.broadcast %cst_64 : f32 to vector<2x256xf32>
    %146 = arith.mulf %145, %143 : vector<2x256xf32>
    %147 = arith.addf %144, %146 : vector<2x256xf32>
    %148 = arith.mulf %140, %147 : vector<2x256xf32>
    %cst_65 = arith.constant 2.000000e+00 : f32
    %149 = vector.broadcast %cst_65 : f32 to vector<2x256xf32>
    %150 = arith.addf %147, %149 : vector<2x256xf32>
    %151 = tpu.reciprocal %150 {approx = true} : vector<2x256xf32> -> vector<2x256xf32>
    %152 = arith.mulf %148, %151 : vector<2x256xf32>
    %c1_66 = arith.constant 1 : index
    %c0_67 = arith.constant 0 : index
    %c0_68 = arith.constant 0 : index
    %153 = vector.load %arg2[%c1_66, %c0_67, %c0_68] : memref<4x2x256xf32, #tpu.memory_space<vmem>>, vector<1x2x256xf32>
    %154 = vector.shape_cast %153 : vector<1x2x256xf32> to vector<2x256xf32>
    %155 = arith.addf %152, %154 : vector<2x256xf32>
    %156 = arith.truncf %155 : vector<2x256xf32> to vector<2x256xbf16>
    %c0_69 = arith.constant 0 : index
    %c0_70 = arith.constant 0 : index
    %157 = vector.load %arg5[%c0_69, %c0_70] : memref<256x256xbf16, #tpu.memory_space<vmem>>, vector<256x256xbf16>
    %cst_71 = arith.constant dense<0.000000e+00> : vector<2x256xf32>
    %158 = tpu.matmul %156, %157, %cst_71 {dimension_numbers = #tpu.dot_dimension_numbers<[1], [0], [0], [1], [0, 0, 1, 1], [], []>} : vector<2x256xbf16>, vector<256x256xbf16>, vector<2x256xf32> -> vector<2x256xf32>
    %c3_72 = arith.constant 3 : index
    %c0_73 = arith.constant 0 : index
    %159 = vector.load %arg8[%c3_72, %c0_73] : memref<8x256xf32, #tpu.memory_space<vmem>>, vector<1x256xf32>
    %160 = vector.broadcast %159 : vector<1x256xf32> to vector<2x256xf32>
    %161 = arith.addf %158, %160 : vector<2x256xf32>
    %162 = arith.mulf %161, %161 : vector<2x256xf32>
    %163 = tpu.concatenate %161, %162 in 0 : vector<2x256xf32>, vector<2x256xf32> -> vector<4x256xf32>
    %c0_74 = arith.constant 0 : index
    %c0_75 = arith.constant 0 : index
    %164 = vector.load %arg7[%c0_74, %c0_75] : memref<256x256xf32, #tpu.memory_space<vmem>>, vector<256x256xf32>
    %cst_76 = arith.constant dense<0.000000e+00> : vector<4x256xf32>
    %165 = tpu.matmul %163, %164, %cst_76 {dimension_numbers = #tpu.dot_dimension_numbers<[1], [0], [0], [1], [0, 0, 1, 1], [], []>} : vector<4x256xf32>, vector<256x256xf32>, vector<4x256xf32> -> vector<4x256xf32>
    %166 = vector.extract_strided_slice %165 {offsets = [0, 0], sizes = [2, 256], strides = [1, 1]} : vector<4x256xf32> to vector<2x256xf32>
    %167 = vector.extract_strided_slice %165 {offsets = [2, 0], sizes = [2, 256], strides = [1, 1]} : vector<4x256xf32> to vector<2x256xf32>
    %168 = arith.mulf %166, %166 : vector<2x256xf32>
    %169 = arith.subf %167, %168 : vector<2x256xf32>
    %cst_77 = arith.constant 0.000000e+00 : f32
    %170 = vector.broadcast %cst_77 : f32 to vector<2x256xf32>
    %171 = arith.maximumf %169, %170 : vector<2x256xf32>
    %172 = arith.subf %161, %166 : vector<2x256xf32>
    %cst_78 = arith.constant 9.99999974E-6 : f32
    %173 = vector.broadcast %cst_78 : f32 to vector<2x256xf32>
    %174 = arith.addf %171, %173 : vector<2x256xf32>
    %175 = math.rsqrt %174 : vector<2x256xf32>
    %176 = arith.mulf %172, %175 : vector<2x256xf32>
    %c4_79 = arith.constant 4 : index
    %c0_80 = arith.constant 0 : index
    %177 = vector.load %arg8[%c4_79, %c0_80] : memref<8x256xf32, #tpu.memory_space<vmem>>, vector<1x256xf32>
    %178 = vector.broadcast %177 : vector<1x256xf32> to vector<2x256xf32>
    %179 = arith.mulf %176, %178 : vector<2x256xf32>
    %c5_81 = arith.constant 5 : index
    %c0_82 = arith.constant 0 : index
    %180 = vector.load %arg8[%c5_81, %c0_82] : memref<8x256xf32, #tpu.memory_space<vmem>>, vector<1x256xf32>
    %181 = vector.broadcast %180 : vector<1x256xf32> to vector<2x256xf32>
    %182 = arith.addf %179, %181 : vector<2x256xf32>
    %cst_83 = arith.constant 2.000000e+01 : f32
    %183 = vector.broadcast %cst_83 : f32 to vector<2x256xf32>
    %184 = arith.minimumf %182, %183 : vector<2x256xf32>
    %185 = math.exp %184 : vector<2x256xf32>
    %186 = arith.mulf %185, %185 : vector<2x256xf32>
    %cst_84 = arith.constant 2.000000e+00 : f32
    %187 = vector.broadcast %cst_84 : f32 to vector<2x256xf32>
    %188 = arith.mulf %187, %185 : vector<2x256xf32>
    %189 = arith.addf %186, %188 : vector<2x256xf32>
    %190 = arith.mulf %182, %189 : vector<2x256xf32>
    %cst_85 = arith.constant 2.000000e+00 : f32
    %191 = vector.broadcast %cst_85 : f32 to vector<2x256xf32>
    %192 = arith.addf %189, %191 : vector<2x256xf32>
    %193 = tpu.reciprocal %192 {approx = true} : vector<2x256xf32> -> vector<2x256xf32>
    %194 = arith.mulf %190, %193 : vector<2x256xf32>
    %195 = arith.truncf %194 : vector<2x256xf32> to vector<2x256xbf16>
    %c0_86 = arith.constant 0 : index
    %c0_87 = arith.constant 0 : index
    %196 = vector.load %arg6[%c0_86, %c0_87] : memref<256x128xbf16, #tpu.memory_space<vmem>>, vector<256x128xbf16>
    %cst_88 = arith.constant dense<0.000000e+00> : vector<2x128xf32>
    %197 = tpu.matmul %195, %196, %cst_88 {dimension_numbers = #tpu.dot_dimension_numbers<[1], [0], [0], [1], [0, 0, 1, 1], [], []>} : vector<2x256xbf16>, vector<256x128xbf16>, vector<2x128xf32> -> vector<2x128xf32>
    %198 = vector.extract_strided_slice %115 {offsets = [0, 256], sizes = [2, 128], strides = [1, 1]} : vector<2x384xf32> to vector<2x128xf32>
    %199 = arith.addf %197, %198 : vector<2x128xf32>
    %c6_89 = arith.constant 6 : index
    %c0_90 = arith.constant 0 : index
    %200 = vector.load %arg8[%c6_89, %c0_90] : memref<8x256xf32, #tpu.memory_space<vmem>>, vector<1x128xf32>
    %201 = vector.broadcast %200 : vector<1x128xf32> to vector<2x128xf32>
    %202 = arith.addf %199, %201 : vector<2x128xf32>
    %cst_91 = arith.constant 1.01020825 : f32
    %203 = vector.broadcast %cst_91 : f32 to vector<2x128xf32>
    %204 = arith.mulf %203, %112 : vector<2x128xf32>
    %cst_92 = arith.constant 0.143250436 : f32
    %205 = vector.broadcast %cst_92 : f32 to vector<2x128xf32>
    %206 = arith.mulf %205, %202 : vector<2x128xf32>
    %207 = arith.subf %204, %206 : vector<2x128xf32>
    %cst_93 = arith.constant -1.000000e+00 : f32
    %cst_94 = arith.constant 1.000000e+00 : f32
    %208 = vector.broadcast %cst_93 : f32 to vector<2x128xf32>
    %209 = arith.maximumf %208, %207 : vector<2x128xf32>
    %210 = vector.broadcast %cst_94 : f32 to vector<2x128xf32>
    %211 = arith.minimumf %210, %209 : vector<2x128xf32>
    %cst_95 = arith.constant 0.66246736 : f32
    %212 = vector.broadcast %cst_95 : f32 to vector<2x128xf32>
    %213 = arith.mulf %212, %211 : vector<2x128xf32>
    %cst_96 = arith.constant 0.337521613 : f32
    %214 = vector.broadcast %cst_96 : f32 to vector<2x128xf32>
    %215 = arith.mulf %214, %112 : vector<2x128xf32>
    %216 = arith.addf %213, %215 : vector<2x128xf32>
    %c1_97 = arith.constant 1 : index
    %c0_98 = arith.constant 0 : index
    %c0_99 = arith.constant 0 : index
    %217 = vector.load %arg3[%c1_97, %c0_98, %c0_99] : memref<3x2x128xf32, #tpu.memory_space<vmem>>, vector<1x2x128xf32>
    %218 = vector.shape_cast %217 : vector<1x2x128xf32> to vector<2x128xf32>
    %219 = arith.addf %216, %218 : vector<2x128xf32>
    %220 = vector.broadcast %0 : vector<1x128xf32> to vector<2x128xf32>
    %221 = arith.mulf %219, %220 : vector<2x128xf32>
    %222 = arith.addf %221, %1 : vector<2x128xf32>
    %223 = arith.truncf %222 : vector<2x128xf32> to vector<2x128xbf16>
    %c0_100 = arith.constant 0 : index
    %c0_101 = arith.constant 0 : index
    %224 = vector.load %arg4[%c0_100, %c0_101] : memref<128x384xbf16, #tpu.memory_space<vmem>>, vector<128x384xbf16>
    %cst_102 = arith.constant dense<0.000000e+00> : vector<2x384xf32>
    %225 = tpu.matmul %223, %224, %cst_102 {dimension_numbers = #tpu.dot_dimension_numbers<[1], [0], [0], [1], [0, 0, 1, 1], [], []>} : vector<2x128xbf16>, vector<128x384xbf16>, vector<2x384xf32> -> vector<2x384xf32>
    %226 = vector.extract_strided_slice %225 {offsets = [0, 0], sizes = [2, 256], strides = [1, 1]} : vector<2x384xf32> to vector<2x256xf32>
    %c0_103 = arith.constant 0 : index
    %c0_104 = arith.constant 0 : index
    %227 = vector.load %arg8[%c0_103, %c0_104] : memref<8x256xf32, #tpu.memory_space<vmem>>, vector<1x256xf32>
    %228 = vector.broadcast %227 : vector<1x256xf32> to vector<2x256xf32>
    %229 = arith.addf %226, %228 : vector<2x256xf32>
    %230 = arith.mulf %229, %229 : vector<2x256xf32>
    %231 = tpu.concatenate %229, %230 in 0 : vector<2x256xf32>, vector<2x256xf32> -> vector<4x256xf32>
    %c0_105 = arith.constant 0 : index
    %c0_106 = arith.constant 0 : index
    %232 = vector.load %arg7[%c0_105, %c0_106] : memref<256x256xf32, #tpu.memory_space<vmem>>, vector<256x256xf32>
    %cst_107 = arith.constant dense<0.000000e+00> : vector<4x256xf32>
    %233 = tpu.matmul %231, %232, %cst_107 {dimension_numbers = #tpu.dot_dimension_numbers<[1], [0], [0], [1], [0, 0, 1, 1], [], []>} : vector<4x256xf32>, vector<256x256xf32>, vector<4x256xf32> -> vector<4x256xf32>
    %234 = vector.extract_strided_slice %233 {offsets = [0, 0], sizes = [2, 256], strides = [1, 1]} : vector<4x256xf32> to vector<2x256xf32>
    %235 = vector.extract_strided_slice %233 {offsets = [2, 0], sizes = [2, 256], strides = [1, 1]} : vector<4x256xf32> to vector<2x256xf32>
    %236 = arith.mulf %234, %234 : vector<2x256xf32>
    %237 = arith.subf %235, %236 : vector<2x256xf32>
    %cst_108 = arith.constant 0.000000e+00 : f32
    %238 = vector.broadcast %cst_108 : f32 to vector<2x256xf32>
    %239 = arith.maximumf %237, %238 : vector<2x256xf32>
    %240 = arith.subf %229, %234 : vector<2x256xf32>
    %cst_109 = arith.constant 9.99999974E-6 : f32
    %241 = vector.broadcast %cst_109 : f32 to vector<2x256xf32>
    %242 = arith.addf %239, %241 : vector<2x256xf32>
    %243 = math.rsqrt %242 : vector<2x256xf32>
    %244 = arith.mulf %240, %243 : vector<2x256xf32>
    %c1_110 = arith.constant 1 : index
    %c0_111 = arith.constant 0 : index
    %245 = vector.load %arg8[%c1_110, %c0_111] : memref<8x256xf32, #tpu.memory_space<vmem>>, vector<1x256xf32>
    %246 = vector.broadcast %245 : vector<1x256xf32> to vector<2x256xf32>
    %247 = arith.mulf %244, %246 : vector<2x256xf32>
    %c2_112 = arith.constant 2 : index
    %c0_113 = arith.constant 0 : index
    %248 = vector.load %arg8[%c2_112, %c0_113] : memref<8x256xf32, #tpu.memory_space<vmem>>, vector<1x256xf32>
    %249 = vector.broadcast %248 : vector<1x256xf32> to vector<2x256xf32>
    %250 = arith.addf %247, %249 : vector<2x256xf32>
    %cst_114 = arith.constant 2.000000e+01 : f32
    %251 = vector.broadcast %cst_114 : f32 to vector<2x256xf32>
    %252 = arith.minimumf %250, %251 : vector<2x256xf32>
    %253 = math.exp %252 : vector<2x256xf32>
    %254 = arith.mulf %253, %253 : vector<2x256xf32>
    %cst_115 = arith.constant 2.000000e+00 : f32
    %255 = vector.broadcast %cst_115 : f32 to vector<2x256xf32>
    %256 = arith.mulf %255, %253 : vector<2x256xf32>
    %257 = arith.addf %254, %256 : vector<2x256xf32>
    %258 = arith.mulf %250, %257 : vector<2x256xf32>
    %cst_116 = arith.constant 2.000000e+00 : f32
    %259 = vector.broadcast %cst_116 : f32 to vector<2x256xf32>
    %260 = arith.addf %257, %259 : vector<2x256xf32>
    %261 = tpu.reciprocal %260 {approx = true} : vector<2x256xf32> -> vector<2x256xf32>
    %262 = arith.mulf %258, %261 : vector<2x256xf32>
    %c2_117 = arith.constant 2 : index
    %c0_118 = arith.constant 0 : index
    %c0_119 = arith.constant 0 : index
    %263 = vector.load %arg2[%c2_117, %c0_118, %c0_119] : memref<4x2x256xf32, #tpu.memory_space<vmem>>, vector<1x2x256xf32>
    %264 = vector.shape_cast %263 : vector<1x2x256xf32> to vector<2x256xf32>
    %265 = arith.addf %262, %264 : vector<2x256xf32>
    %266 = arith.truncf %265 : vector<2x256xf32> to vector<2x256xbf16>
    %c0_120 = arith.constant 0 : index
    %c0_121 = arith.constant 0 : index
    %267 = vector.load %arg5[%c0_120, %c0_121] : memref<256x256xbf16, #tpu.memory_space<vmem>>, vector<256x256xbf16>
    %cst_122 = arith.constant dense<0.000000e+00> : vector<2x256xf32>
    %268 = tpu.matmul %266, %267, %cst_122 {dimension_numbers = #tpu.dot_dimension_numbers<[1], [0], [0], [1], [0, 0, 1, 1], [], []>} : vector<2x256xbf16>, vector<256x256xbf16>, vector<2x256xf32> -> vector<2x256xf32>
    %c3_123 = arith.constant 3 : index
    %c0_124 = arith.constant 0 : index
    %269 = vector.load %arg8[%c3_123, %c0_124] : memref<8x256xf32, #tpu.memory_space<vmem>>, vector<1x256xf32>
    %270 = vector.broadcast %269 : vector<1x256xf32> to vector<2x256xf32>
    %271 = arith.addf %268, %270 : vector<2x256xf32>
    %272 = arith.mulf %271, %271 : vector<2x256xf32>
    %273 = tpu.concatenate %271, %272 in 0 : vector<2x256xf32>, vector<2x256xf32> -> vector<4x256xf32>
    %c0_125 = arith.constant 0 : index
    %c0_126 = arith.constant 0 : index
    %274 = vector.load %arg7[%c0_125, %c0_126] : memref<256x256xf32, #tpu.memory_space<vmem>>, vector<256x256xf32>
    %cst_127 = arith.constant dense<0.000000e+00> : vector<4x256xf32>
    %275 = tpu.matmul %273, %274, %cst_127 {dimension_numbers = #tpu.dot_dimension_numbers<[1], [0], [0], [1], [0, 0, 1, 1], [], []>} : vector<4x256xf32>, vector<256x256xf32>, vector<4x256xf32> -> vector<4x256xf32>
    %276 = vector.extract_strided_slice %275 {offsets = [0, 0], sizes = [2, 256], strides = [1, 1]} : vector<4x256xf32> to vector<2x256xf32>
    %277 = vector.extract_strided_slice %275 {offsets = [2, 0], sizes = [2, 256], strides = [1, 1]} : vector<4x256xf32> to vector<2x256xf32>
    %278 = arith.mulf %276, %276 : vector<2x256xf32>
    %279 = arith.subf %277, %278 : vector<2x256xf32>
    %cst_128 = arith.constant 0.000000e+00 : f32
    %280 = vector.broadcast %cst_128 : f32 to vector<2x256xf32>
    %281 = arith.maximumf %279, %280 : vector<2x256xf32>
    %282 = arith.subf %271, %276 : vector<2x256xf32>
    %cst_129 = arith.constant 9.99999974E-6 : f32
    %283 = vector.broadcast %cst_129 : f32 to vector<2x256xf32>
    %284 = arith.addf %281, %283 : vector<2x256xf32>
    %285 = math.rsqrt %284 : vector<2x256xf32>
    %286 = arith.mulf %282, %285 : vector<2x256xf32>
    %c4_130 = arith.constant 4 : index
    %c0_131 = arith.constant 0 : index
    %287 = vector.load %arg8[%c4_130, %c0_131] : memref<8x256xf32, #tpu.memory_space<vmem>>, vector<1x256xf32>
    %288 = vector.broadcast %287 : vector<1x256xf32> to vector<2x256xf32>
    %289 = arith.mulf %286, %288 : vector<2x256xf32>
    %c5_132 = arith.constant 5 : index
    %c0_133 = arith.constant 0 : index
    %290 = vector.load %arg8[%c5_132, %c0_133] : memref<8x256xf32, #tpu.memory_space<vmem>>, vector<1x256xf32>
    %291 = vector.broadcast %290 : vector<1x256xf32> to vector<2x256xf32>
    %292 = arith.addf %289, %291 : vector<2x256xf32>
    %cst_134 = arith.constant 2.000000e+01 : f32
    %293 = vector.broadcast %cst_134 : f32 to vector<2x256xf32>
    %294 = arith.minimumf %292, %293 : vector<2x256xf32>
    %295 = math.exp %294 : vector<2x256xf32>
    %296 = arith.mulf %295, %295 : vector<2x256xf32>
    %cst_135 = arith.constant 2.000000e+00 : f32
    %297 = vector.broadcast %cst_135 : f32 to vector<2x256xf32>
    %298 = arith.mulf %297, %295 : vector<2x256xf32>
    %299 = arith.addf %296, %298 : vector<2x256xf32>
    %300 = arith.mulf %292, %299 : vector<2x256xf32>
    %cst_136 = arith.constant 2.000000e+00 : f32
    %301 = vector.broadcast %cst_136 : f32 to vector<2x256xf32>
    %302 = arith.addf %299, %301 : vector<2x256xf32>
    %303 = tpu.reciprocal %302 {approx = true} : vector<2x256xf32> -> vector<2x256xf32>
    %304 = arith.mulf %300, %303 : vector<2x256xf32>
    %305 = arith.truncf %304 : vector<2x256xf32> to vector<2x256xbf16>
    %c0_137 = arith.constant 0 : index
    %c0_138 = arith.constant 0 : index
    %306 = vector.load %arg6[%c0_137, %c0_138] : memref<256x128xbf16, #tpu.memory_space<vmem>>, vector<256x128xbf16>
    %cst_139 = arith.constant dense<0.000000e+00> : vector<2x128xf32>
    %307 = tpu.matmul %305, %306, %cst_139 {dimension_numbers = #tpu.dot_dimension_numbers<[1], [0], [0], [1], [0, 0, 1, 1], [], []>} : vector<2x256xbf16>, vector<256x128xbf16>, vector<2x128xf32> -> vector<2x128xf32>
    %308 = vector.extract_strided_slice %225 {offsets = [0, 256], sizes = [2, 128], strides = [1, 1]} : vector<2x384xf32> to vector<2x128xf32>
    %309 = arith.addf %307, %308 : vector<2x128xf32>
    %c6_140 = arith.constant 6 : index
    %c0_141 = arith.constant 0 : index
    %310 = vector.load %arg8[%c6_140, %c0_141] : memref<8x256xf32, #tpu.memory_space<vmem>>, vector<1x128xf32>
    %311 = vector.broadcast %310 : vector<1x128xf32> to vector<2x128xf32>
    %312 = arith.addf %309, %311 : vector<2x128xf32>
    %cst_142 = arith.constant 1.00343394 : f32
    %313 = vector.broadcast %cst_142 : f32 to vector<2x128xf32>
    %314 = arith.mulf %313, %222 : vector<2x128xf32>
    %cst_143 = arith.constant 0.082943879 : f32
    %315 = vector.broadcast %cst_143 : f32 to vector<2x128xf32>
    %316 = arith.mulf %315, %312 : vector<2x128xf32>
    %317 = arith.subf %314, %316 : vector<2x128xf32>
    %cst_144 = arith.constant -1.000000e+00 : f32
    %cst_145 = arith.constant 1.000000e+00 : f32
    %318 = vector.broadcast %cst_144 : f32 to vector<2x128xf32>
    %319 = arith.maximumf %318, %317 : vector<2x128xf32>
    %320 = vector.broadcast %cst_145 : f32 to vector<2x128xf32>
    %321 = arith.minimumf %320, %319 : vector<2x128xf32>
    %cst_146 = arith.constant 0.985405206 : f32
    %322 = vector.broadcast %cst_146 : f32 to vector<2x128xf32>
    %323 = arith.mulf %322, %321 : vector<2x128xf32>
    %cst_147 = arith.constant 0.0145885265 : f32
    %324 = vector.broadcast %cst_147 : f32 to vector<2x128xf32>
    %325 = arith.mulf %324, %222 : vector<2x128xf32>
    %326 = arith.addf %323, %325 : vector<2x128xf32>
    %c2_148 = arith.constant 2 : index
    %c0_149 = arith.constant 0 : index
    %c0_150 = arith.constant 0 : index
    %327 = vector.load %arg3[%c2_148, %c0_149, %c0_150] : memref<3x2x128xf32, #tpu.memory_space<vmem>>, vector<1x2x128xf32>
    %328 = vector.shape_cast %327 : vector<1x2x128xf32> to vector<2x128xf32>
    %329 = arith.addf %326, %328 : vector<2x128xf32>
    %330 = vector.broadcast %0 : vector<1x128xf32> to vector<2x128xf32>
    %331 = arith.mulf %329, %330 : vector<2x128xf32>
    %332 = arith.addf %331, %1 : vector<2x128xf32>
    %333 = arith.truncf %332 : vector<2x128xf32> to vector<2x128xbf16>
    %c0_151 = arith.constant 0 : index
    %c0_152 = arith.constant 0 : index
    %334 = vector.load %arg4[%c0_151, %c0_152] : memref<128x384xbf16, #tpu.memory_space<vmem>>, vector<128x384xbf16>
    %cst_153 = arith.constant dense<0.000000e+00> : vector<2x384xf32>
    %335 = tpu.matmul %333, %334, %cst_153 {dimension_numbers = #tpu.dot_dimension_numbers<[1], [0], [0], [1], [0, 0, 1, 1], [], []>} : vector<2x128xbf16>, vector<128x384xbf16>, vector<2x384xf32> -> vector<2x384xf32>
    %336 = vector.extract_strided_slice %335 {offsets = [0, 0], sizes = [2, 256], strides = [1, 1]} : vector<2x384xf32> to vector<2x256xf32>
    %c0_154 = arith.constant 0 : index
    %c0_155 = arith.constant 0 : index
    %337 = vector.load %arg8[%c0_154, %c0_155] : memref<8x256xf32, #tpu.memory_space<vmem>>, vector<1x256xf32>
    %338 = vector.broadcast %337 : vector<1x256xf32> to vector<2x256xf32>
    %339 = arith.addf %336, %338 : vector<2x256xf32>
    %340 = arith.mulf %339, %339 : vector<2x256xf32>
    %341 = tpu.concatenate %339, %340 in 0 : vector<2x256xf32>, vector<2x256xf32> -> vector<4x256xf32>
    %c0_156 = arith.constant 0 : index
    %c0_157 = arith.constant 0 : index
    %342 = vector.load %arg7[%c0_156, %c0_157] : memref<256x256xf32, #tpu.memory_space<vmem>>, vector<256x256xf32>
    %cst_158 = arith.constant dense<0.000000e+00> : vector<4x256xf32>
    %343 = tpu.matmul %341, %342, %cst_158 {dimension_numbers = #tpu.dot_dimension_numbers<[1], [0], [0], [1], [0, 0, 1, 1], [], []>} : vector<4x256xf32>, vector<256x256xf32>, vector<4x256xf32> -> vector<4x256xf32>
    %344 = vector.extract_strided_slice %343 {offsets = [0, 0], sizes = [2, 256], strides = [1, 1]} : vector<4x256xf32> to vector<2x256xf32>
    %345 = vector.extract_strided_slice %343 {offsets = [2, 0], sizes = [2, 256], strides = [1, 1]} : vector<4x256xf32> to vector<2x256xf32>
    %346 = arith.mulf %344, %344 : vector<2x256xf32>
    %347 = arith.subf %345, %346 : vector<2x256xf32>
    %cst_159 = arith.constant 0.000000e+00 : f32
    %348 = vector.broadcast %cst_159 : f32 to vector<2x256xf32>
    %349 = arith.maximumf %347, %348 : vector<2x256xf32>
    %350 = arith.subf %339, %344 : vector<2x256xf32>
    %cst_160 = arith.constant 9.99999974E-6 : f32
    %351 = vector.broadcast %cst_160 : f32 to vector<2x256xf32>
    %352 = arith.addf %349, %351 : vector<2x256xf32>
    %353 = math.rsqrt %352 : vector<2x256xf32>
    %354 = arith.mulf %350, %353 : vector<2x256xf32>
    %c1_161 = arith.constant 1 : index
    %c0_162 = arith.constant 0 : index
    %355 = vector.load %arg8[%c1_161, %c0_162] : memref<8x256xf32, #tpu.memory_space<vmem>>, vector<1x256xf32>
    %356 = vector.broadcast %355 : vector<1x256xf32> to vector<2x256xf32>
    %357 = arith.mulf %354, %356 : vector<2x256xf32>
    %c2_163 = arith.constant 2 : index
    %c0_164 = arith.constant 0 : index
    %358 = vector.load %arg8[%c2_163, %c0_164] : memref<8x256xf32, #tpu.memory_space<vmem>>, vector<1x256xf32>
    %359 = vector.broadcast %358 : vector<1x256xf32> to vector<2x256xf32>
    %360 = arith.addf %357, %359 : vector<2x256xf32>
    %cst_165 = arith.constant 2.000000e+01 : f32
    %361 = vector.broadcast %cst_165 : f32 to vector<2x256xf32>
    %362 = arith.minimumf %360, %361 : vector<2x256xf32>
    %363 = math.exp %362 : vector<2x256xf32>
    %364 = arith.mulf %363, %363 : vector<2x256xf32>
    %cst_166 = arith.constant 2.000000e+00 : f32
    %365 = vector.broadcast %cst_166 : f32 to vector<2x256xf32>
    %366 = arith.mulf %365, %363 : vector<2x256xf32>
    %367 = arith.addf %364, %366 : vector<2x256xf32>
    %368 = arith.mulf %360, %367 : vector<2x256xf32>
    %cst_167 = arith.constant 2.000000e+00 : f32
    %369 = vector.broadcast %cst_167 : f32 to vector<2x256xf32>
    %370 = arith.addf %367, %369 : vector<2x256xf32>
    %371 = tpu.reciprocal %370 {approx = true} : vector<2x256xf32> -> vector<2x256xf32>
    %372 = arith.mulf %368, %371 : vector<2x256xf32>
    %c3_168 = arith.constant 3 : index
    %c0_169 = arith.constant 0 : index
    %c0_170 = arith.constant 0 : index
    %373 = vector.load %arg2[%c3_168, %c0_169, %c0_170] : memref<4x2x256xf32, #tpu.memory_space<vmem>>, vector<1x2x256xf32>
    %374 = vector.shape_cast %373 : vector<1x2x256xf32> to vector<2x256xf32>
    %375 = arith.addf %372, %374 : vector<2x256xf32>
    %376 = arith.truncf %375 : vector<2x256xf32> to vector<2x256xbf16>
    %c0_171 = arith.constant 0 : index
    %c0_172 = arith.constant 0 : index
    %377 = vector.load %arg5[%c0_171, %c0_172] : memref<256x256xbf16, #tpu.memory_space<vmem>>, vector<256x256xbf16>
    %cst_173 = arith.constant dense<0.000000e+00> : vector<2x256xf32>
    %378 = tpu.matmul %376, %377, %cst_173 {dimension_numbers = #tpu.dot_dimension_numbers<[1], [0], [0], [1], [0, 0, 1, 1], [], []>} : vector<2x256xbf16>, vector<256x256xbf16>, vector<2x256xf32> -> vector<2x256xf32>
    %c3_174 = arith.constant 3 : index
    %c0_175 = arith.constant 0 : index
    %379 = vector.load %arg8[%c3_174, %c0_175] : memref<8x256xf32, #tpu.memory_space<vmem>>, vector<1x256xf32>
    %380 = vector.broadcast %379 : vector<1x256xf32> to vector<2x256xf32>
    %381 = arith.addf %378, %380 : vector<2x256xf32>
    %382 = arith.mulf %381, %381 : vector<2x256xf32>
    %383 = tpu.concatenate %381, %382 in 0 : vector<2x256xf32>, vector<2x256xf32> -> vector<4x256xf32>
    %c0_176 = arith.constant 0 : index
    %c0_177 = arith.constant 0 : index
    %384 = vector.load %arg7[%c0_176, %c0_177] : memref<256x256xf32, #tpu.memory_space<vmem>>, vector<256x256xf32>
    %cst_178 = arith.constant dense<0.000000e+00> : vector<4x256xf32>
    %385 = tpu.matmul %383, %384, %cst_178 {dimension_numbers = #tpu.dot_dimension_numbers<[1], [0], [0], [1], [0, 0, 1, 1], [], []>} : vector<4x256xf32>, vector<256x256xf32>, vector<4x256xf32> -> vector<4x256xf32>
    %386 = vector.extract_strided_slice %385 {offsets = [0, 0], sizes = [2, 256], strides = [1, 1]} : vector<4x256xf32> to vector<2x256xf32>
    %387 = vector.extract_strided_slice %385 {offsets = [2, 0], sizes = [2, 256], strides = [1, 1]} : vector<4x256xf32> to vector<2x256xf32>
    %388 = arith.mulf %386, %386 : vector<2x256xf32>
    %389 = arith.subf %387, %388 : vector<2x256xf32>
    %cst_179 = arith.constant 0.000000e+00 : f32
    %390 = vector.broadcast %cst_179 : f32 to vector<2x256xf32>
    %391 = arith.maximumf %389, %390 : vector<2x256xf32>
    %392 = arith.subf %381, %386 : vector<2x256xf32>
    %cst_180 = arith.constant 9.99999974E-6 : f32
    %393 = vector.broadcast %cst_180 : f32 to vector<2x256xf32>
    %394 = arith.addf %391, %393 : vector<2x256xf32>
    %395 = math.rsqrt %394 : vector<2x256xf32>
    %396 = arith.mulf %392, %395 : vector<2x256xf32>
    %c4_181 = arith.constant 4 : index
    %c0_182 = arith.constant 0 : index
    %397 = vector.load %arg8[%c4_181, %c0_182] : memref<8x256xf32, #tpu.memory_space<vmem>>, vector<1x256xf32>
    %398 = vector.broadcast %397 : vector<1x256xf32> to vector<2x256xf32>
    %399 = arith.mulf %396, %398 : vector<2x256xf32>
    %c5_183 = arith.constant 5 : index
    %c0_184 = arith.constant 0 : index
    %400 = vector.load %arg8[%c5_183, %c0_184] : memref<8x256xf32, #tpu.memory_space<vmem>>, vector<1x256xf32>
    %401 = vector.broadcast %400 : vector<1x256xf32> to vector<2x256xf32>
    %402 = arith.addf %399, %401 : vector<2x256xf32>
    %cst_185 = arith.constant 2.000000e+01 : f32
    %403 = vector.broadcast %cst_185 : f32 to vector<2x256xf32>
    %404 = arith.minimumf %402, %403 : vector<2x256xf32>
    %405 = math.exp %404 : vector<2x256xf32>
    %406 = arith.mulf %405, %405 : vector<2x256xf32>
    %cst_186 = arith.constant 2.000000e+00 : f32
    %407 = vector.broadcast %cst_186 : f32 to vector<2x256xf32>
    %408 = arith.mulf %407, %405 : vector<2x256xf32>
    %409 = arith.addf %406, %408 : vector<2x256xf32>
    %410 = arith.mulf %402, %409 : vector<2x256xf32>
    %cst_187 = arith.constant 2.000000e+00 : f32
    %411 = vector.broadcast %cst_187 : f32 to vector<2x256xf32>
    %412 = arith.addf %409, %411 : vector<2x256xf32>
    %413 = tpu.reciprocal %412 {approx = true} : vector<2x256xf32> -> vector<2x256xf32>
    %414 = arith.mulf %410, %413 : vector<2x256xf32>
    %415 = arith.truncf %414 : vector<2x256xf32> to vector<2x256xbf16>
    %c0_188 = arith.constant 0 : index
    %c0_189 = arith.constant 0 : index
    %416 = vector.load %arg6[%c0_188, %c0_189] : memref<256x128xbf16, #tpu.memory_space<vmem>>, vector<256x128xbf16>
    %cst_190 = arith.constant dense<0.000000e+00> : vector<2x128xf32>
    %417 = tpu.matmul %415, %416, %cst_190 {dimension_numbers = #tpu.dot_dimension_numbers<[1], [0], [0], [1], [0, 0, 1, 1], [], []>} : vector<2x256xbf16>, vector<256x128xbf16>, vector<2x128xf32> -> vector<2x128xf32>
    %418 = vector.extract_strided_slice %335 {offsets = [0, 256], sizes = [2, 128], strides = [1, 1]} : vector<2x384xf32> to vector<2x128xf32>
    %419 = arith.addf %417, %418 : vector<2x128xf32>
    %c6_191 = arith.constant 6 : index
    %c0_192 = arith.constant 0 : index
    %420 = vector.load %arg8[%c6_191, %c0_192] : memref<8x256xf32, #tpu.memory_space<vmem>>, vector<1x128xf32>
    %421 = vector.broadcast %420 : vector<1x128xf32> to vector<2x128xf32>
    %422 = arith.addf %419, %421 : vector<2x128xf32>
    %cst_193 = arith.constant 1.00005007 : f32
    %423 = vector.broadcast %cst_193 : f32 to vector<2x128xf32>
    %424 = arith.mulf %423, %332 : vector<2x128xf32>
    %cst_194 = arith.constant 0.0100008296 : f32
    %425 = vector.broadcast %cst_194 : f32 to vector<2x128xf32>
    %426 = arith.mulf %425, %422 : vector<2x128xf32>
    %427 = arith.subf %424, %426 : vector<2x128xf32>
    %cst_195 = arith.constant -1.000000e+00 : f32
    %cst_196 = arith.constant 1.000000e+00 : f32
    %428 = vector.broadcast %cst_195 : f32 to vector<2x128xf32>
    %429 = arith.maximumf %428, %427 : vector<2x128xf32>
    %430 = vector.broadcast %cst_196 : f32 to vector<2x128xf32>
    %431 = arith.minimumf %430, %429 : vector<2x128xf32>
    %cst_197 = arith.constant 0.99983406 : f32
    %432 = vector.broadcast %cst_197 : f32 to vector<2x128xf32>
    %433 = arith.mulf %432, %431 : vector<2x128xf32>
    %cst_198 = arith.constant 0.000000e+00 : f32
    %434 = vector.broadcast %cst_198 : f32 to vector<2x128xf32>
    %435 = arith.mulf %434, %332 : vector<2x128xf32>
    %436 = arith.addf %433, %435 : vector<2x128xf32>
    %437 = vector.broadcast %0 : vector<1x128xf32> to vector<2x128xf32>
    %438 = arith.mulf %436, %437 : vector<2x128xf32>
    %439 = arith.addf %438, %1 : vector<2x128xf32>
    %c0_199 = arith.constant 0 : index
    %c0_200 = arith.constant 0 : index
    %440 = vector.load %arg9[%c0_199, %c0_200] : memref<2x128xf32, #tpu.memory_space<vmem>>, vector<2x128xf32>
    tpu.vector_store %arg9[%c0_199, %c0_200], %439 {strides = array<i32>} : memref<2x128xf32, #tpu.memory_space<vmem>>, vector<2x128xf32>,
    return
  }
}

</mosaic_0001>

<llo_original>
// kernel: tpu_custom_call.1
$region0: #{tpu_custom_call.1}
  #allocation0 [shape = 'u32[]', space=smem, size = 0x4, offset = 0x4, fixed_abs, tag = 'smem constant byte address 0x4 - core index']
  #allocation1 [shape = 'u32[144,128]{1,0:T(1,128)}', space=vmem, size = 0x12000, scoped, tag = 'internal scratch']
  %s0 = inlined_call_operand.hbm [shape: f32[2,128], index: 0, kind: input, shape index: {}]
  %s1 = inlined_call_operand.hbm [shape: f32[3,128], index: 1, kind: input, shape index: {}]
  %s2 = inlined_call_operand.hbm [shape: f32[4,2,256], index: 2, kind: input, shape index: {}]
  %s3 = inlined_call_operand.vmem [shape: f32[3,2,128], index: 3, kind: input, shape index: {}]
  %s4 = inlined_call_operand.hbm [shape: bf16[128,384], index: 4, kind: input, shape index: {}]
  %s5 = inlined_call_operand.hbm [shape: bf16[256,256], index: 5, kind: input, shape index: {}]
  %s6 = inlined_call_operand.hbm [shape: bf16[256,128], index: 6, kind: input, shape index: {}]
  %s7 = inlined_call_operand.hbm [shape: f32[256,256], index: 7, kind: input, shape index: {}]
  %s8 = inlined_call_operand.vmem [shape: f32[8,256], index: 8, kind: input, shape index: {}]
  %s9 = inlined_call_operand.hbm [shape: f32[2,128], index: 9, kind: output, shape index: {}]
  %s10 = sld [smem:[#allocation0]]
  $region74: #{tpu_custom_call.1} parent=0
    _
  %s12 = ssub.s32 1, %s10
  %s13 = scalar_select 0, %s12, %s10
  $region1: #{tpu_custom_call.1} parent=0
    #allocation2 [shape = 'u8[1024]{0}', space=vmem, size = 0x400, scoped, tag = 'input window, operand 0, single buffered']
    #allocation3 [shape = 's32[1]{0}', space=sflag, size = 0x4, scoped, tag = 'scoped memory for tpu_custom_call.1']
    #allocation4 [shape = 's32[1]{0}', space=sflag, size = 0x4, scoped, tag = 'scoped memory for tpu_custom_call.1']
    #allocation5 [shape = 'u8[2048]{0}', space=vmem, size = 0x800, scoped, tag = 'input window, operand 1, single buffered']
    #allocation6 [shape = 's32[1]{0}', space=sflag, size = 0x4, scoped, tag = 'scoped memory for tpu_custom_call.1']
    #allocation7 [shape = 'u8[8192]{0}', space=vmem, size = 0x2000, scoped, tag = 'input window, operand 2, single buffered']
    #allocation8 [shape = 'u8[98304]{0}', space=vmem, size = 0x18000, scoped, tag = 'input window, operand 4, single buffered']
    #allocation9 [shape = 's32[1]{0}', space=sflag, size = 0x4, scoped, tag = 'scoped memory for tpu_custom_call.1']
    #allocation10 [shape = 'u8[131072]{0}', space=vmem, size = 0x20000, scoped, tag = 'input window, operand 5, single buffered']
    #allocation11 [shape = 'u8[65536]{0}', space=vmem, size = 0x10000, scoped, tag = 'input window, operand 6, single buffered']
    #allocation12 [shape = 's32[1]{0}', space=sflag, size = 0x4, scoped, tag = 'scoped memory for tpu_custom_call.1']
    #allocation13 [shape = 'u8[262144]{0}', space=vmem, size = 0x40000, scoped, tag = 'input window, operand 7, single buffered']
    #allocation14 [shape = 'u8[1024]{0}', space=vmem, size = 0x400, scoped, tag = 'output window, operand 0, single buffered']
    %14 = vsyncpa [#allocation3], 0
    %15 = vsyncpa [#allocation6], 0
    %16 = vsyncpa [#allocation9], 0
    %17 = vsyncpa [#allocation12], 0
    %18 = vsyncpa [#allocation4], 0
    // Predicated region
    $region2: #{tpu_custom_call.1} parent=1 // pred_check
      _
    $region3: #{tpu_custom_call.1} parent=1 // pred_check_branch
      %20 = sbr.rel (0) target = $region5
    $region4: #{tpu_custom_call.1} parent=1 // pred_region
      %s22 = ssub.s32 32, 32
      %23 = vsyncadd [#allocation3], %s22
      %s25 = sshll.u32 [#allocation2], 4
      %s26 = int_to_ptr.vmem [resolvable:$true] %s25
      %28 = dma.hbm_to_vmem [thread:$0]  %s0, 32, %s26, [#allocation3]
    $region5: #{tpu_custom_call.1} parent=1 // pred_fallthru
      _
    // Predicated region
    $region6: #{tpu_custom_call.1} parent=1 // pred_check
      _
    $region7: #{tpu_custom_call.1} parent=1 // pred_check_branch
      %30 = sbr.rel (0) target = $region9
    $region8: #{tpu_custom_call.1} parent=1 // pred_region
      %s32 = ssub.s32 64, 64
      %33 = vsyncadd [#allocation6], %s32
      %s35 = sshll.u32 [#allocation5], 4
      %s36 = int_to_ptr.vmem [resolvable:$true] %s35
      %38 = dma.hbm_to_vmem [thread:$0]  %s1, 64, %s36, [#allocation6]
    $region9: #{tpu_custom_call.1} parent=1 // pred_fallthru
      _
    // Predicated region
    $region10: #{tpu_custom_call.1} parent=1 // pred_check
      _
    $region11: #{tpu_custom_call.1} parent=1 // pred_check_branch
      %40 = sbr.rel (0) target = $region13
    $region12: #{tpu_custom_call.1} parent=1 // pred_region
      %s42 = ssub.s32 256, 256
      %43 = vsyncadd [#allocation6], %s42
      %s44 = sshll.u32 [#allocation7], 4
      %s45 = int_to_ptr.vmem [resolvable:$true] %s44
      %50 = dma.hbm_to_vmem [thread:$0]  %s2, 256, %s45, [#allocation6], 64, 64, 4
    $region13: #{tpu_custom_call.1} parent=1 // pred_fallthru
      _
    // Predicated region
    $region14: #{tpu_custom_call.1} parent=1 // pred_check
      _
    $region15: #{tpu_custom_call.1} parent=1 // pred_check_branch
      %52 = sbr.rel (0) target = $region17
    $region16: #{tpu_custom_call.1} parent=1 // pred_region
      _
    $region17: #{tpu_custom_call.1} parent=1 // pred_fallthru
      _
    // Predicated region
    $region18: #{tpu_custom_call.1} parent=1 // pred_check
      _
    $region19: #{tpu_custom_call.1} parent=1 // pred_check_branch
      %54 = sbr.rel (0) target = $region21
    $region20: #{tpu_custom_call.1} parent=1 // pred_region
      %s56 = ssub.s32 3072, 3072
      %57 = vsyncadd [#allocation9], %s56
      %s58 = sshll.u32 [#allocation8], 4
      %s59 = int_to_ptr.vmem [resolvable:$true] %s58
      %64 = dma.hbm_to_vmem [thread:$0]  %s4, 3072, %s59, [#allocation9], 192, 192, 12
    $region21: #{tpu_custom_call.1} parent=1 // pred_fallthru
      _
    // Predicated region
    $region22: #{tpu_custom_call.1} parent=1 // pred_check
      _
    $region23: #{tpu_custom_call.1} parent=1 // pred_check_branch
      %66 = sbr.rel (0) target = $region25
    $region24: #{tpu_custom_call.1} parent=1 // pred_region
      %s68 = ssub.s32 4096, 4096
      %69 = vsyncadd [#allocation9], %s68
      %s70 = sshll.u32 [#allocation10], 4
      %s71 = int_to_ptr.vmem [resolvable:$true] %s70
      %76 = dma.hbm_to_vmem [thread:$0]  %s5, 4096, %s71, [#allocation9], 128, 128, 8
    $region25: #{tpu_custom_call.1} parent=1 // pred_fallthru
      _
    // Predicated region
    $region26: #{tpu_custom_call.1} parent=1 // pred_check
      _
    $region27: #{tpu_custom_call.1} parent=1 // pred_check_branch
      %78 = sbr.rel (0) target = $region29
    $region28: #{tpu_custom_call.1} parent=1 // pred_region
      %s80 = ssub.s32 2048, 2048
      %81 = vsyncadd [#allocation12], %s80
      %s82 = sshll.u32 [#allocation11], 4
      %s83 = int_to_ptr.vmem [resolvable:$true] %s82
      %88 = dma.hbm_to_vmem [thread:$0]  %s6, 2048, %s83, [#allocation12], 64, 64, 4
    $region29: #{tpu_custom_call.1} parent=1 // pred_fallthru
      _
    // Predicated region
    $region30: #{tpu_custom_call.1} parent=1 // pred_check
      _
    $region31: #{tpu_custom_call.1} parent=1 // pred_check_branch
      %90 = sbr.rel (0) target = $region33
    $region32: #{tpu_custom_call.1} parent=1 // pred_region
      %s92 = ssub.s32 8192, 8192
      %93 = vsyncadd [#allocation12], %s92
      %s94 = sshll.u32 [#allocation13], 4
      %s95 = int_to_ptr.vmem [resolvable:$true] %s94
      %100 = dma.hbm_to_vmem [thread:$0]  %s7, 8192, %s95, [#allocation12], 256, 256, 16
    $region33: #{tpu_custom_call.1} parent=1 // pred_fallthru
      _
    // Predicated region
    $region34: #{tpu_custom_call.1} parent=1 // pred_check
      _
    $region35: #{tpu_custom_call.1} parent=1 // pred_check_branch
      %102 = sbr.rel (0) target = $region37
    $region36: #{tpu_custom_call.1} parent=1 // pred_region
      _
    $region37: #{tpu_custom_call.1} parent=1 // pred_fallthru
      _
    // Predicated region
    $region38: #{tpu_custom_call.1} parent=1 // pred_check
      _
    $region39: #{tpu_custom_call.1} parent=1 // pred_check_branch
      %104 = sbr.rel (0) target = $region41
    $region40: #{tpu_custom_call.1} parent=1 // pred_region
      %105 = dma.done [#allocation3], 32
    $region41: #{tpu_custom_call.1} parent=1 // pred_fallthru
      _
    // Predicated region
    $region42: #{tpu_custom_call.1} parent=1 // pred_check
      _
    $region43: #{tpu_custom_call.1} parent=1 // pred_check_branch
      %107 = sbr.rel (0) target = $region45
    $region44: #{tpu_custom_call.1} parent=1 // pred_region
      %108 = dma.done [#allocation6], 64
    $region45: #{tpu_custom_call.1} parent=1 // pred_fallthru
      _
    // Predicated region
    $region46: #{tpu_custom_call.1} parent=1 // pred_check
      _
    $region47: #{tpu_custom_call.1} parent=1 // pred_check_branch
      %110 = sbr.rel (0) target = $region49
    $region48: #{tpu_custom_call.1} parent=1 // pred_region
      %111 = dma.done [#allocation6], 256
    $region49: #{tpu_custom_call.1} parent=1 // pred_fallthru
      _
    // Predicated region
    $region50: #{tpu_custom_call.1} parent=1 // pred_check
      _
    $region51: #{tpu_custom_call.1} parent=1 // pred_check_branch
      %113 = sbr.rel (0) target = $region53
    $region52: #{tpu_custom_call.1} parent=1 // pred_region
      %114 = dma.done [#allocation9], 3072
    $region53: #{tpu_custom_call.1} parent=1 // pred_fallthru
      _
    // Predicated region
    $region54: #{tpu_custom_call.1} parent=1 // pred_check
      _
    $region55: #{tpu_custom_call.1} parent=1 // pred_check_branch
      %116 = sbr.rel (0) target = $region57
    $region56: #{tpu_custom_call.1} parent=1 // pred_region
      %117 = dma.done [#allocation9], 4096
    $region57: #{tpu_custom_call.1} parent=1 // pred_fallthru
      _
    // Predicated region
    $region58: #{tpu_custom_call.1} parent=1 // pred_check
      _
    $region59: #{tpu_custom_call.1} parent=1 // pred_check_branch
      %119 = sbr.rel (0) target = $region61
    $region60: #{tpu_custom_call.1} parent=1 // pred_region
      %120 = dma.done [#allocation12], 2048
    $region61: #{tpu_custom_call.1} parent=1 // pred_fallthru
      _
    // Predicated region
    $region62: #{tpu_custom_call.1} parent=1 // pred_check
      _
    $region63: #{tpu_custom_call.1} parent=1 // pred_check_branch
      %122 = sbr.rel (0) target = $region65
    $region64: #{tpu_custom_call.1} parent=1 // pred_region
      %123 = dma.done [#allocation12], 8192
    $region65: #{tpu_custom_call.1} parent=1 // pred_fallthru
      _
    %v125 = vld [vmem:[#allocation5] sm:$0x1]
    %v126 = vld [vmem:[#allocation5 + $0x1] sm:$0x3]
    %v127 = vld [vmem:[#allocation2] sm:$0x3]
    %v128 = vpack.c.bf16 %v127, %v127
    %v129 = vld [vmem:[#allocation8] sm:$0xff]
    %v130 = vld [vmem:[#allocation8 + $0x8] sm:$0xf]
    %v131 = vld [vmem:[#allocation8 + $0xc] sm:$0xff]
    %v132 = vld [vmem:[#allocation8 + $0x14] sm:$0xf]
    %v133 = vld [vmem:[#allocation8 + $0x18] sm:$0xff]
    %v134 = vld [vmem:[#allocation8 + $0x20] sm:$0xf]
    %v135 = vld [vmem:[#allocation8 + $0x24] sm:$0xff]
    %v136 = vld [vmem:[#allocation8 + $0x2c] sm:$0xf]
    %v137 = vld [vmem:[#allocation8 + $0x30] sm:$0xff]
    %v138 = vld [vmem:[#allocation8 + $0x38] sm:$0xf]
    %v139 = vld [vmem:[#allocation8 + $0x3c] sm:$0xff]
    %v140 = vld [vmem:[#allocation8 + $0x44] sm:$0xf]
    %v141 = vld [vmem:[#allocation8 + $0x48] sm:$0xff]
    %v142 = vld [vmem:[#allocation8 + $0x50] sm:$0xf]
    %v143 = vld [vmem:[#allocation8 + $0x54] sm:$0xff]
    %v144 = vld [vmem:[#allocation8 + $0x5c] sm:$0xf]
    %v145 = vld [vmem:[#allocation8 + $0x60] sm:$0xff]
    %v146 = vld [vmem:[#allocation8 + $0x68] sm:$0xf]
    %v147 = vld [vmem:[#allocation8 + $0x6c] sm:$0xff]
    %v148 = vld [vmem:[#allocation8 + $0x74] sm:$0xf]
    %v149 = vld [vmem:[#allocation8 + $0x78] sm:$0xff]
    %v150 = vld [vmem:[#allocation8 + $0x80] sm:$0xf]
    %v151 = vld [vmem:[#allocation8 + $0x84] sm:$0xff]
    %v152 = vld [vmem:[#allocation8 + $0x8c] sm:$0xf]
    %v153 = vld [vmem:[#allocation8 + $0x90] sm:$0xff]
    %v154 = vld [vmem:[#allocation8 + $0x98] sm:$0xf]
    %v155 = vld [vmem:[#allocation8 + $0x9c] sm:$0xff]
    %v156 = vld [vmem:[#allocation8 + $0xa4] sm:$0xf]
    %v157 = vld [vmem:[#allocation8 + $0xa8] sm:$0xff]
    %v158 = vld [vmem:[#allocation8 + $0xb0] sm:$0xf]
    %v159 = vld [vmem:[#allocation8 + $0xb4] sm:$0xff]
    %v160 = vld [vmem:[#allocation8 + $0xbc] sm:$0xf]
    %v193 = vunpack.c.l.b16 %v129
    %v194 = vunpack.c.h.b16 %v129
    %v195 = vunpack.c.l.b16 %v130
    %v196 = vunpack.c.l.b16 %v131
    %v197 = vunpack.c.h.b16 %v131
    %v198 = vunpack.c.l.b16 %v132
    %v199 = vunpack.c.l.b16 %v133
    %v200 = vunpack.c.h.b16 %v133
    %v201 = vunpack.c.l.b16 %v134
    %v202 = vunpack.c.l.b16 %v135
    %v203 = vunpack.c.h.b16 %v135
    %v204 = vunpack.c.l.b16 %v136
    %v205 = vunpack.c.l.b16 %v137
    %v206 = vunpack.c.h.b16 %v137
    %v207 = vunpack.c.l.b16 %v138
    %v208 = vunpack.c.l.b16 %v139
    %v209 = vunpack.c.h.b16 %v139
    %v210 = vunpack.c.l.b16 %v140
    %v211 = vunpack.c.l.b16 %v141
    %v212 = vunpack.c.h.b16 %v141
    %v213 = vunpack.c.l.b16 %v142
    %v214 = vunpack.c.l.b16 %v143
    %v215 = vunpack.c.h.b16 %v143
    %v216 = vunpack.c.l.b16 %v144
    %v217 = vunpack.c.l.b16 %v145
    %v218 = vunpack.c.h.b16 %v145
    %v219 = vunpack.c.l.b16 %v146
    %v220 = vunpack.c.l.b16 %v147
    %v221 = vunpack.c.h.b16 %v147
    %v222 = vunpack.c.l.b16 %v148
    %v223 = vunpack.c.l.b16 %v149
    %v224 = vunpack.c.h.b16 %v149
    %v225 = vunpack.c.l.b16 %v150
    %v226 = vunpack.c.l.b16 %v151
    %v227 = vunpack.c.h.b16 %v151
    %v228 = vunpack.c.l.b16 %v152
    %v229 = vunpack.c.l.b16 %v153
    %v230 = vunpack.c.h.b16 %v153
    %v231 = vunpack.c.l.b16 %v154
    %v232 = vunpack.c.l.b16 %v155
    %v233 = vunpack.c.h.b16 %v155
    %v234 = vunpack.c.l.b16 %v156
    %v235 = vunpack.c.l.b16 %v157
    %v236 = vunpack.c.h.b16 %v157
    %v237 = vunpack.c.l.b16 %v158
    %v238 = vunpack.c.l.b16 %v159
    %v239 = vunpack.c.h.b16 %v159
    %v240 = vunpack.c.l.b16 %v160
    %v241 = vpack.c.b16 %v196, %v193
    %v242 = vpack.c.b16 %v197, %v194
    %v243 = vpack.c.b16 %v198, %v195
    %v244 = vpack.c.b16 %v202, %v199
    %v245 = vpack.c.b16 %v203, %v200
    %v246 = vpack.c.b16 %v204, %v201
    %v247 = vpack.c.b16 %v208, %v205
    %v248 = vpack.c.b16 %v209, %v206
    %v249 = vpack.c.b16 %v210, %v207
    %v250 = vpack.c.b16 %v214, %v211
    %v251 = vpack.c.b16 %v215, %v212
    %v252 = vpack.c.b16 %v216, %v213
    %v253 = vpack.c.b16 %v220, %v217
    %v254 = vpack.c.b16 %v221, %v218
    %v255 = vpack.c.b16 %v222, %v219
    %v256 = vpack.c.b16 %v226, %v223
    %v257 = vpack.c.b16 %v227, %v224
    %v258 = vpack.c.b16 %v228, %v225
    %v259 = vpack.c.b16 %v232, %v229
    %v260 = vpack.c.b16 %v233, %v230
    %v261 = vpack.c.b16 %v234, %v231
    %v262 = vpack.c.b16 %v238, %v235
    %v263 = vpack.c.b16 %v239, %v236
    %v264 = vpack.c.b16 %v240, %v237
    %289 = vmatprep.subr.bf16.mxu0 %v242
    %290 = vmatpush1.bf16.msra.mxu0 %v241
    %291 = vmatprep.subr.bf16.mxu0 %v245
    %292 = vmatpush1.bf16.msra.mxu0 %v244
    %293 = vmatprep.subr.bf16.mxu0 %v248
    %294 = vmatpush1.bf16.msra.mxu0 %v247
    %295 = vmatprep.subr.bf16.mxu0 %v251
    %296 = vmatpush1.bf16.msra.mxu0 %v250
    %297 = vmatprep.subr.bf16.mxu0 %v254
    %298 = vmatpush1.bf16.msra.mxu0 %v253
    %299 = vmatprep.subr.bf16.mxu0 %v257
    %300 = vmatpush1.bf16.msra.mxu0 %v256
    %301 = vmatprep.subr.bf16.mxu0 %v260
    %302 = vmatpush1.bf16.msra.mxu0 %v259
    %303 = vmatprep.subr.bf16.mxu0 %v263
    %304 = vmatpush1.bf16.msra.mxu0 %v262
    %305 = vmatprep.subr.bf16.mxu0 0
    %306 = vmatpush1.bf16.msra.mxu0 0
    %307 = vmatprep.subr.bf16.mxu0 0
    %308 = vmatpush1.bf16.msra.mxu0 0
    %309 = vmatprep.subr.bf16.mxu0 0
    %310 = vmatpush1.bf16.msra.mxu0 0
    %311 = vmatprep.subr.bf16.mxu0 0
    %312 = vmatpush1.bf16.msra.mxu0 0
    %313 = vmatprep.subr.bf16.mxu0 0
    %314 = vmatpush1.bf16.msra.mxu0 0
    %315 = vmatprep.subr.bf16.mxu0 0
    %316 = vmatpush1.bf16.msra.mxu0 0
    %317 = vmatprep.subr.bf16.mxu0 0
    %318 = vmatpush1.bf16.msra.mxu0 0
    %319 = vmatprep.subr.bf16.mxu0 0
    %320 = vmatpush1.bf16.msra.mxu0 0
    %321 = vmatprep.mubr.bf16.mxu0 0
    %322 = vmatmul.mubr.bf16.gmra.mrb[0].mxu0 %v128
    %v323 = vpop.f32.mrb[0].mxu0
    %v324 = vadd.f32 0.0, %v323
    %v325 = vpop.f32.mrb[0].mxu0
    %v326 = vadd.f32 0.0, %v325
    %v327 = vpop.f32.mrb[0].mxu0
    %v328 = vpop.f32.mrb[0].mxu0
    %329 = vdwg.mxu0
    %330 = vmatprep.subr.bf16.mxu0 0
    %331 = vmatpush1.bf16.msra.mxu0 %v243
    %332 = vmatprep.subr.bf16.mxu0 0
    %333 = vmatpush1.bf16.msra.mxu0 %v246
    %334 = vmatprep.subr.bf16.mxu0 0
    %335 = vmatpush1.bf16.msra.mxu0 %v249
    %336 = vmatprep.subr.bf16.mxu0 0
    %337 = vmatpush1.bf16.msra.mxu0 %v252
    %338 = vmatprep.subr.bf16.mxu0 0
    %339 = vmatpush1.bf16.msra.mxu0 %v255
    %340 = vmatprep.subr.bf16.mxu0 0
    %341 = vmatpush1.bf16.msra.mxu0 %v258
    %342 = vmatprep.subr.bf16.mxu0 0
    %343 = vmatpush1.bf16.msra.mxu0 %v261
    %344 = vmatprep.subr.bf16.mxu0 0
    %345 = vmatpush1.bf16.msra.mxu0 %v264
    %346 = vmatprep.subr.bf16.mxu0 0
    %347 = vmatpush1.bf16.msra.mxu0 0
    %348 = vmatprep.subr.bf16.mxu0 0
    %349 = vmatpush1.bf16.msra.mxu0 0
    %350 = vmatprep.subr.bf16.mxu0 0
    %351 = vmatpush1.bf16.msra.mxu0 0
    %352 = vmatprep.subr.bf16.mxu0 0
    %353 = vmatpush1.bf16.msra.mxu0 0
    %354 = vmatprep.subr.bf16.mxu0 0
    %355 = vmatpush1.bf16.msra.mxu0 0
    %356 = vmatprep.subr.bf16.mxu0 0
    %357 = vmatpush1.bf16.msra.mxu0 0
    %358 = vmatprep.subr.bf16.mxu0 0
    %359 = vmatpush1.bf16.msra.mxu0 0
    %360 = vmatprep.subr.bf16.mxu0 0
    %361 = vmatpush1.bf16.msra.mxu0 0
    %362 = vmatprep.mubr.bf16.mxu0 0
    %363 = vmatmul.mubr.bf16.gmra.mrb[0].mxu0 %v128
    %v364 = vpop.f32.mrb[0].mxu0
    %v365 = vadd.f32 0.0, %v364
    %v366 = vpop.f32.mrb[0].mxu0
    %v367 = vpop.f32.mrb[0].mxu0
    %v368 = vpop.f32.mrb[0].mxu0
    %369 = vdwg.mxu0
    %v370 = vld [vmem:[%s8] ss:$8 sm:$0x3]
    %v372 = vlaneseq
    %v373 = vshrl.u32 %v372, 7
    %v374 = vsub.s32 0, %v373
    %v375 = vrot.slane %v370, %v374
    %v376 = vlaneseq
    %v377 = vshrl.u32 %v376, 7
    %v378 = vsub.s32 1, %v377
    %v379 = vrot.slane %v370, %v378
    %v382 = vadd.f32 %v324, %v375
    %v383 = vadd.f32 %v326, %v379
    %v384 = vmul.f32 %v382, %v382
    %v385 = vmul.f32 %v383, %v383
    %v388 = vrot.slane %v384, 6
    %v389 = vrot.slane %v385, 6
    %vm392 = vcmask 1041408
    %v393 = vsel %vm392, %v382, %v388
    %v394 = vsel %vm392, %v383, %v389
    %v395 = vld [vmem:[#allocation13] sm:$0xff]
    %v396 = vld [vmem:[#allocation13 + $0x8] sm:$0xff]
    %v397 = vld [vmem:[#allocation13 + $0x10] sm:$0xff]
    %v398 = vld [vmem:[#allocation13 + $0x18] sm:$0xff]
    %v399 = vld [vmem:[#allocation13 + $0x20] sm:$0xff]
    %v400 = vld [vmem:[#allocation13 + $0x28] sm:$0xff]
    %v401 = vld [vmem:[#allocation13 + $0x30] sm:$0xff]
    %v402 = vld [vmem:[#allocation13 + $0x38] sm:$0xff]
    %v403 = vld [vmem:[#allocation13 + $0x40] sm:$0xff]
    %v404 = vld [vmem:[#allocation13 + $0x48] sm:$0xff]
    %v405 = vld [vmem:[#allocation13 + $0x50] sm:$0xff]
    %v406 = vld [vmem:[#allocation13 + $0x58] sm:$0xff]
    %v407 = vld [vmem:[#allocation13 + $0x60] sm:$0xff]
    %v408 = vld [vmem:[#allocation13 + $0x68] sm:$0xff]
    %v409 = vld [vmem:[#allocation13 + $0x70] sm:$0xff]
    %v410 = vld [vmem:[#allocation13 + $0x78] sm:$0xff]
    %v411 = vld [vmem:[#allocation13 + $0x80] sm:$0xff]
    %v412 = vld [vmem:[#allocation13 + $0x88] sm:$0xff]
    %v413 = vld [vmem:[#allocation13 + $0x90] sm:$0xff]
    %v414 = vld [vmem:[#allocation13 + $0x98] sm:$0xff]
    %v415 = vld [vmem:[#allocation13 + $0xa0] sm:$0xff]
    %v416 = vld [vmem:[#allocation13 + $0xa8] sm:$0xff]
    %v417 = vld [vmem:[#allocation13 + $0xb0] sm:$0xff]
    %v418 = vld [vmem:[#allocation13 + $0xb8] sm:$0xff]
    %v419 = vld [vmem:[#allocation13 + $0xc0] sm:$0xff]
    %v420 = vld [vmem:[#allocation13 + $0xc8] sm:$0xff]
    %v421 = vld [vmem:[#allocation13 + $0xd0] sm:$0xff]
    %v422 = vld [vmem:[#allocation13 + $0xd8] sm:$0xff]
    %v423 = vld [vmem:[#allocation13 + $0xe0] sm:$0xff]
    %v424 = vld [vmem:[#allocation13 + $0xe8] sm:$0xff]
    %v425 = vld [vmem:[#allocation13 + $0xf0] sm:$0xff]
    %v426 = vld [vmem:[#allocation13 + $0xf8] sm:$0xff]
    %v427 = vld [vmem:[#allocation13 + $0x100] sm:$0xff]
    %v428 = vld [vmem:[#allocation13 + $0x108] sm:$0xff]
    %v429 = vld [vmem:[#allocation13 + $0x110] sm:$0xff]
    %v430 = vld [vmem:[#allocation13 + $0x118] sm:$0xff]
    %v431 = vld [vmem:[#allocation13 + $0x120] sm:$0xff]
    %v432 = vld [vmem:[#allocation13 + $0x128] sm:$0xff]
    %v433 = vld [vmem:[#allocation13 + $0x130] sm:$0xff]
    %v434 = vld [vmem:[#allocation13 + $0x138] sm:$0xff]
    %v435 = vld [vmem:[#allocation13 + $0x140] sm:$0xff]
    %v436 = vld [vmem:[#allocation13 + $0x148] sm:$0xff]
    %v437 = vld [vmem:[#allocation13 + $0x150] sm:$0xff]
    %v438 = vld [vmem:[#allocation13 + $0x158] sm:$0xff]
    %v439 = vld [vmem:[#allocation13 + $0x160] sm:$0xff]
    %v440 = vld [vmem:[#allocation13 + $0x168] sm:$0xff]
    %v441 = vld [vmem:[#allocation13 + $0x170] sm:$0xff]
    %v442 = vld [vmem:[#allocation13 + $0x178] sm:$0xff]
    %v443 = vld [vmem:[#allocation13 + $0x180] sm:$0xff]
    %v444 = vld [vmem:[#allocation13 + $0x188] sm:$0xff]
    %v445 = vld [vmem:[#allocation13 + $0x190] sm:$0xff]
    %v446 = vld [vmem:[#allocation13 + $0x198] sm:$0xff]
    %v447 = vld [vmem:[#allocation13 + $0x1a0] sm:$0xff]
    %v448 = vld [vmem:[#allocation13 + $0x1a8] sm:$0xff]
    %v449 = vld [vmem:[#allocation13 + $0x1b0] sm:$0xff]
    %v450 = vld [vmem:[#allocation13 + $0x1b8] sm:$0xff]
    %v451 = vld [vmem:[#allocation13 + $0x1c0] sm:$0xff]
    %v452 = vld [vmem:[#allocation13 + $0x1c8] sm:$0xff]
    %v453 = vld [vmem:[#allocation13 + $0x1d0] sm:$0xff]
    %v454 = vld [vmem:[#allocation13 + $0x1d8] sm:$0xff]
    %v455 = vld [vmem:[#allocation13 + $0x1e0] sm:$0xff]
    %v456 = vld [vmem:[#allocation13 + $0x1e8] sm:$0xff]
    %v457 = vld [vmem:[#allocation13 + $0x1f0] sm:$0xff]
    %v458 = vld [vmem:[#allocation13 + $0x1f8] sm:$0xff]
    %459 = vmatprep.subr.mxu0 %v396
    %460 = vmatpush1.msra.mxu0 %v395
    %461 = vmatprep.subr.mxu0 %v398
    %462 = vmatpush1.msra.mxu0 %v397
    %463 = vmatprep.subr.mxu0 %v400
    %464 = vmatpush1.msra.mxu0 %v399
    %465 = vmatprep.subr.mxu0 %v402
    %466 = vmatpush1.msra.mxu0 %v401
    %467 = vmatprep.subr.mxu0 %v404
    %468 = vmatpush1.msra.mxu0 %v403
    %469 = vmatprep.subr.mxu0 %v406
    %470 = vmatpush1.msra.mxu0 %v405
    %471 = vmatprep.subr.mxu0 %v408
    %472 = vmatpush1.msra.mxu0 %v407
    %473 = vmatprep.subr.mxu0 %v410
    %474 = vmatpush1.msra.mxu0 %v409
    %475 = vmatprep.subr.mxu0 %v412
    %476 = vmatpush1.msra.mxu0 %v411
    %477 = vmatprep.subr.mxu0 %v414
    %478 = vmatpush1.msra.mxu0 %v413
    %479 = vmatprep.subr.mxu0 %v416
    %480 = vmatpush1.msra.mxu0 %v415
    %481 = vmatprep.subr.mxu0 %v418
    %482 = vmatpush1.msra.mxu0 %v417
    %483 = vmatprep.subr.mxu0 %v420
    %484 = vmatpush1.msra.mxu0 %v419
    %485 = vmatprep.subr.mxu0 %v422
    %486 = vmatpush1.msra.mxu0 %v421
    %487 = vmatprep.subr.mxu0 %v424
    %488 = vmatpush1.msra.mxu0 %v423
    %489 = vmatprep.subr.mxu0 %v426
    %490 = vmatpush1.msra.mxu0 %v425
    %491 = vmatprep.subr.mxu0 %v428
    %492 = vmatpush1.msra.mxu0 %v427
    %493 = vmatprep.subr.mxu0 %v430
    %494 = vmatpush1.msra.mxu0 %v429
    %495 = vmatprep.subr.mxu0 %v432
    %496 = vmatpush1.msra.mxu0 %v431
    %497 = vmatprep.subr.mxu0 %v434
    %498 = vmatpush1.msra.mxu0 %v433
    %499 = vmatprep.subr.mxu0 %v436
    %500 = vmatpush1.msra.mxu0 %v435
    %501 = vmatprep.subr.mxu0 %v438
    %502 = vmatpush1.msra.mxu0 %v437
    %503 = vmatprep.subr.mxu0 %v440
    %504 = vmatpush1.msra.mxu0 %v439
    %505 = vmatprep.subr.mxu0 %v442
    %506 = vmatpush1.msra.mxu0 %v441
    %507 = vmatprep.subr.mxu0 %v444
    %508 = vmatpush1.msra.mxu0 %v443
    %509 = vmatprep.subr.mxu0 %v446
    %510 = vmatpush1.msra.mxu0 %v445
    %511 = vmatprep.subr.mxu0 %v448
    %512 = vmatpush1.msra.mxu0 %v447
    %513 = vmatprep.subr.mxu0 %v450
    %514 = vmatpush1.msra.mxu0 %v449
    %515 = vmatprep.subr.mxu0 %v452
    %516 = vmatpush1.msra.mxu0 %v451
    %517 = vmatprep.subr.mxu0 %v454
    %518 = vmatpush1.msra.mxu0 %v453
    %519 = vmatprep.subr.mxu0 %v456
    %520 = vmatpush1.msra.mxu0 %v455
    %521 = vmatprep.subr.mxu0 %v458
    %522 = vmatpush1.msra.mxu0 %v457
    %523 = vmatprep.mubr.f32.mxu0 %v394
    %524 = vmatmul.mubr.f32.gmra.mrb[0].mxu0 %v393
    %v525 = vpop.f32.mrb[0].mxu0
    %v526 = vadd.f32 0.0, %v525
    %v527 = vpop.f32.mrb[0].mxu0
    %v528 = vadd.f32 0.0, %v527
    %529 = vdwg.mxu0
    %v530 = vmul.f32 %v526, %v526
    %v531 = vmul.f32 %v528, %v528
    %v534 = vrot.slane %v530, 6
    %v535 = vrot.slane %v531, 6
    %v538 = vsub.f32 %v526, %v534
    %v539 = vsub.f32 %v528, %v535
    %v540 = vmax.f32 %v538, 0.0
    %v541 = vmax.f32 %v539, 0.0
    %v542 = vsub.f32 %v382, %v526
    %v543 = vsub.f32 %v383, %v528
    %v544 = vadd.f32 %v540, 1e-05
    %v545 = vadd.f32 %v541, 1e-05
    %v546 = vrsqrt.pop %v544
    %v547 = vrsqrt.pop %v545
    %v550 = vrot.slane %v546, 2
    %v551 = vrot.slane %v547, 2
    %v554 = vmul.f32 %v542, %v550
    %v555 = vmul.f32 %v543, %v551
    %s556 = scalar_lea.vmem %s8, 1
    %v557 = vld [vmem:[%s556] ss:$8 sm:$0x3]
    %v559 = vlaneseq
    %v560 = vshrl.u32 %v559, 7
    %v561 = vsub.s32 0, %v560
    %v562 = vrot.slane %v557, %v561
    %v563 = vlaneseq
    %v564 = vshrl.u32 %v563, 7
    %v565 = vsub.s32 1, %v564
    %v566 = vrot.slane %v557, %v565
    %v569 = vmul.f32 %v554, %v562
    %v570 = vmul.f32 %v555, %v566
    %s571 = scalar_lea.vmem %s8, 2
    %v572 = vld [vmem:[%s571] ss:$8 sm:$0x3]
    %v574 = vlaneseq
    %v575 = vshrl.u32 %v574, 7
    %v576 = vsub.s32 0, %v575
    %v577 = vrot.slane %v572, %v576
    %v578 = vlaneseq
    %v579 = vshrl.u32 %v578, 7
    %v580 = vsub.s32 1, %v579
    %v581 = vrot.slane %v572, %v580
    %v584 = vadd.f32 %v569, %v577
    %v585 = vadd.f32 %v570, %v581
    %v586 = vmin.f32 %v584, 20.0
    %v587 = vmin.f32 %v585, 20.0
    %v588 = vmul.f32 %v586, 1.442695
    %v589 = vpow.pop %v588
    %v590 = vmul.f32 %v587, 1.442695
    %v591 = vpow.pop %v590
    %v592 = vmul.f32 %v589, %v589
    %v593 = vmul.f32 %v591, %v591
    %v594 = vmul.f32 %v589, 2.0
    %v595 = vmul.f32 %v591, 2.0
    %v596 = vadd.f32 %v592, %v594
    %v597 = vadd.f32 %v593, %v595
    %v598 = vmul.f32 %v584, %v596
    %v599 = vmul.f32 %v585, %v597
    %v600 = vadd.f32 %v596, 2.0
    %v601 = vadd.f32 %v597, 2.0
    %v602 = vrcp.pop %v600
    %v603 = vrcp.pop %v601
    %v604 = vmul.f32 %v598, %v602
    %v605 = vmul.f32 %v599, %v603
    %v606 = vld [vmem:[#allocation7] sm:$0xf]
    %v609 = vunpack.c.l.s4 1983009808
    %v610 = vunpack.c.0.s8 %v609
    %v611 = vlaneseq
    %v612 = vshrl.u32 %v611, 7
    %v613 = vsub.s32 %v610, %v612
    %v614 = vrot.slane %v606, %v613
    %v615 = vcombine.high %v614, %v614
    %v618 = vadd.f32 %v604, %v614
    %v619 = vadd.f32 %v605, %v615
    %v620 = vpack.c.bf16 %v618, %v618
    %v621 = vpack.c.bf16 %v619, %v619
    %v622 = vld [vmem:[#allocation10] sm:$0xff]
    %v623 = vld [vmem:[#allocation10 + $0x8] sm:$0xff]
    %v624 = vld [vmem:[#allocation10 + $0x10] sm:$0xff]
    %v625 = vld [vmem:[#allocation10 + $0x18] sm:$0xff]
    %v626 = vld [vmem:[#allocation10 + $0x20] sm:$0xff]
    %v627 = vld [vmem:[#allocation10 + $0x28] sm:$0xff]
    %v628 = vld [vmem:[#allocation10 + $0x30] sm:$0xff]
    %v629 = vld [vmem:[#allocation10 + $0x38] sm:$0xff]
    %v630 = vld [vmem:[#allocation10 + $0x40] sm:$0xff]
    %v631 = vld [vmem:[#allocation10 + $0x48] sm:$0xff]
    %v632 = vld [vmem:[#allocation10 + $0x50] sm:$0xff]
    %v633 = vld [vmem:[#allocation10 + $0x58] sm:$0xff]
    %v634 = vld [vmem:[#allocation10 + $0x60] sm:$0xff]
    %v635 = vld [vmem:[#allocation10 + $0x68] sm:$0xff]
    %v636 = vld [vmem:[#allocation10 + $0x70] sm:$0xff]
    %v637 = vld [vmem:[#allocation10 + $0x78] sm:$0xff]
    %v638 = vld [vmem:[#allocation10 + $0x80] sm:$0xff]
    %v639 = vld [vmem:[#allocation10 + $0x88] sm:$0xff]
    %v640 = vld [vmem:[#allocation10 + $0x90] sm:$0xff]
    %v641 = vld [vmem:[#allocation10 + $0x98] sm:$0xff]
    %v642 = vld [vmem:[#allocation10 + $0xa0] sm:$0xff]
    %v643 = vld [vmem:[#allocation10 + $0xa8] sm:$0xff]
    %v644 = vld [vmem:[#allocation10 + $0xb0] sm:$0xff]
    %v645 = vld [vmem:[#allocation10 + $0xb8] sm:$0xff]
    %v646 = vld [vmem:[#allocation10 + $0xc0] sm:$0xff]
    %v647 = vld [vmem:[#allocation10 + $0xc8] sm:$0xff]
    %v648 = vld [vmem:[#allocation10 + $0xd0] sm:$0xff]
    %v649 = vld [vmem:[#allocation10 + $0xd8] sm:$0xff]
    %v650 = vld [vmem:[#allocation10 + $0xe0] sm:$0xff]
    %v651 = vld [vmem:[#allocation10 + $0xe8] sm:$0xff]
    %v652 = vld [vmem:[#allocation10 + $0xf0] sm:$0xff]
    %v653 = vld [vmem:[#allocation10 + $0xf8] sm:$0xff]
    %s654 = scalar_lea.vmem %s8, 3
    %v655 = vld [vmem:[%s654] ss:$8 sm:$0x3]
    %v657 = vlaneseq
    %v658 = vshrl.u32 %v657, 7
    %v659 = vsub.s32 0, %v658
    %v660 = vrot.slane %v655, %v659
    %v661 = vlaneseq
    %v662 = vshrl.u32 %v661, 7
    %v663 = vsub.s32 1, %v662
    %v664 = vrot.slane %v655, %v663
    %v699 = vunpack.c.l.b16 %v622
    %v700 = vunpack.c.h.b16 %v622
    %v701 = vunpack.c.l.b16 %v623
    %v702 = vunpack.c.h.b16 %v623
    %v703 = vunpack.c.l.b16 %v624
    %v704 = vunpack.c.h.b16 %v624
    %v705 = vunpack.c.l.b16 %v625
    %v706 = vunpack.c.h.b16 %v625
    %v707 = vunpack.c.l.b16 %v626
    %v708 = vunpack.c.h.b16 %v626
    %v709 = vunpack.c.l.b16 %v627
    %v710 = vunpack.c.h.b16 %v627
    %v711 = vunpack.c.l.b16 %v628
    %v712 = vunpack.c.h.b16 %v628
    %v713 = vunpack.c.l.b16 %v629
    %v714 = vunpack.c.h.b16 %v629
    %v715 = vunpack.c.l.b16 %v630
    %v716 = vunpack.c.h.b16 %v630
    %v717 = vunpack.c.l.b16 %v631
    %v718 = vunpack.c.h.b16 %v631
    %v719 = vunpack.c.l.b16 %v632
    %v720 = vunpack.c.h.b16 %v632
    %v721 = vunpack.c.l.b16 %v633
    %v722 = vunpack.c.h.b16 %v633
    %v723 = vunpack.c.l.b16 %v634
    %v724 = vunpack.c.h.b16 %v634
    %v725 = vunpack.c.l.b16 %v635
    %v726 = vunpack.c.h.b16 %v635
    %v727 = vunpack.c.l.b16 %v636
    %v728 = vunpack.c.h.b16 %v636
    %v729 = vunpack.c.l.b16 %v637
    %v730 = vunpack.c.h.b16 %v637
    %v731 = vunpack.c.l.b16 %v638
    %v732 = vunpack.c.h.b16 %v638
    %v733 = vunpack.c.l.b16 %v639
    %v734 = vunpack.c.h.b16 %v639
    %v735 = vunpack.c.l.b16 %v640
    %v736 = vunpack.c.h.b16 %v640
    %v737 = vunpack.c.l.b16 %v641
    %v738 = vunpack.c.h.b16 %v641
    %v739 = vunpack.c.l.b16 %v642
    %v740 = vunpack.c.h.b16 %v642
    %v741 = vunpack.c.l.b16 %v643
    %v742 = vunpack.c.h.b16 %v643
    %v743 = vunpack.c.l.b16 %v644
    %v744 = vunpack.c.h.b16 %v644
    %v745 = vunpack.c.l.b16 %v645
    %v746 = vunpack.c.h.b16 %v645
    %v747 = vunpack.c.l.b16 %v646
    %v748 = vunpack.c.h.b16 %v646
    %v749 = vunpack.c.l.b16 %v647
    %v750 = vunpack.c.h.b16 %v647
    %v751 = vunpack.c.l.b16 %v648
    %v752 = vunpack.c.h.b16 %v648
    %v753 = vunpack.c.l.b16 %v649
    %v754 = vunpack.c.h.b16 %v649
    %v755 = vunpack.c.l.b16 %v650
    %v756 = vunpack.c.h.b16 %v650
    %v757 = vunpack.c.l.b16 %v651
    %v758 = vunpack.c.h.b16 %v651
    %v759 = vunpack.c.l.b16 %v652
    %v760 = vunpack.c.h.b16 %v652
    %v761 = vunpack.c.l.b16 %v653
    %v762 = vunpack.c.h.b16 %v653
    %v763 = vpack.c.b16 %v701, %v699
    %v764 = vpack.c.b16 %v702, %v700
    %v765 = vpack.c.b16 %v705, %v703
    %v766 = vpack.c.b16 %v706, %v704
    %v767 = vpack.c.b16 %v709, %v707
    %v768 = vpack.c.b16 %v710, %v708
    %v769 = vpack.c.b16 %v713, %v711
    %v770 = vpack.c.b16 %v714, %v712
    %v771 = vpack.c.b16 %v717, %v715
    %v772 = vpack.c.b16 %v718, %v716
    %v773 = vpack.c.b16 %v721, %v719
    %v774 = vpack.c.b16 %v722, %v720
    %v775 = vpack.c.b16 %v725, %v723
    %v776 = vpack.c.b16 %v726, %v724
    %v777 = vpack.c.b16 %v729, %v727
    %v778 = vpack.c.b16 %v730, %v728
    %v779 = vpack.c.b16 %v733, %v731
    %v780 = vpack.c.b16 %v734, %v732
    %v781 = vpack.c.b16 %v737, %v735
    %v782 = vpack.c.b16 %v738, %v736
    %v783 = vpack.c.b16 %v741, %v739
    %v784 = vpack.c.b16 %v742, %v740
    %v785 = vpack.c.b16 %v745, %v743
    %v786 = vpack.c.b16 %v746, %v744
    %v787 = vpack.c.b16 %v749, %v747
    %v788 = vpack.c.b16 %v750, %v748
    %v789 = vpack.c.b16 %v753, %v751
    %v790 = vpack.c.b16 %v754, %v752
    %v791 = vpack.c.b16 %v757, %v755
    %v792 = vpack.c.b16 %v758, %v756
    %v793 = vpack.c.b16 %v761, %v759
    %v794 = vpack.c.b16 %v762, %v760
    %827 = vmatprep.subr.bf16.mxu0 %v764
    %828 = vmatpush1.bf16.msra.mxu0 %v763
    %829 = vmatprep.subr.bf16.mxu0 %v766
    %830 = vmatpush1.bf16.msra.mxu0 %v765
    %831 = vmatprep.subr.bf16.mxu0 %v768
    %832 = vmatpush1.bf16.msra.mxu0 %v767
    %833 = vmatprep.subr.bf16.mxu0 %v770
    %834 = vmatpush1.bf16.msra.mxu0 %v769
    %835 = vmatprep.subr.bf16.mxu0 %v772
    %836 = vmatpush1.bf16.msra.mxu0 %v771
    %837 = vmatprep.subr.bf16.mxu0 %v774
    %838 = vmatpush1.bf16.msra.mxu0 %v773
    %839 = vmatprep.subr.bf16.mxu0 %v776
    %840 = vmatpush1.bf16.msra.mxu0 %v775
    %841 = vmatprep.subr.bf16.mxu0 %v778
    %842 = vmatpush1.bf16.msra.mxu0 %v777
    %843 = vmatprep.subr.bf16.mxu0 %v780
    %844 = vmatpush1.bf16.msra.mxu0 %v779
    %845 = vmatprep.subr.bf16.mxu0 %v782
    %846 = vmatpush1.bf16.msra.mxu0 %v781
    %847 = vmatprep.subr.bf16.mxu0 %v784
    %848 = vmatpush1.bf16.msra.mxu0 %v783
    %849 = vmatprep.subr.bf16.mxu0 %v786
    %850 = vmatpush1.bf16.msra.mxu0 %v785
    %851 = vmatprep.subr.bf16.mxu0 %v788
    %852 = vmatpush1.bf16.msra.mxu0 %v787
    %853 = vmatprep.subr.bf16.mxu0 %v790
    %854 = vmatpush1.bf16.msra.mxu0 %v789
    %855 = vmatprep.subr.bf16.mxu0 %v792
    %856 = vmatpush1.bf16.msra.mxu0 %v791
    %857 = vmatprep.subr.bf16.mxu0 %v794
    %858 = vmatpush1.bf16.msra.mxu0 %v793
    %859 = vmatprep.mubr.bf16.mxu0 %v621
    %860 = vmatmul.mubr.bf16.gmra.mrb[0].mxu0 %v620
    %v861 = vpop.f32.mrb[0].mxu0
    %v862 = vadd.f32 %v660, %v861
    %v863 = vpop.f32.mrb[0].mxu0
    %v864 = vadd.f32 %v664, %v863
    %v865 = vpop.f32.mrb[0].mxu0
    %v866 = vpop.f32.mrb[0].mxu0
    %867 = vdwg.mxu0
    %v868 = vmul.f32 %v862, %v862
    %v869 = vmul.f32 %v864, %v864
    %v872 = vrot.slane %v868, 6
    %v873 = vrot.slane %v869, 6
    %v876 = vsel %vm392, %v862, %v872
    %v877 = vsel %vm392, %v864, %v873
    %878 = vmatprep.subr.mxu0 %v396
    %879 = vmatpush1.msra.mxu0 %v395
    %880 = vmatprep.subr.mxu0 %v398
    %881 = vmatpush1.msra.mxu0 %v397
    %882 = vmatprep.subr.mxu0 %v400
    %883 = vmatpush1.msra.mxu0 %v399
    %884 = vmatprep.subr.mxu0 %v402
    %885 = vmatpush1.msra.mxu0 %v401
    %886 = vmatprep.subr.mxu0 %v404
    %887 = vmatpush1.msra.mxu0 %v403
    %888 = vmatprep.subr.mxu0 %v406
    %889 = vmatpush1.msra.mxu0 %v405
    %890 = vmatprep.subr.mxu0 %v408
    %891 = vmatpush1.msra.mxu0 %v407
    %892 = vmatprep.subr.mxu0 %v410
    %893 = vmatpush1.msra.mxu0 %v409
    %894 = vmatprep.subr.mxu0 %v412
    %895 = vmatpush1.msra.mxu0 %v411
    %896 = vmatprep.subr.mxu0 %v414
    %897 = vmatpush1.msra.mxu0 %v413
    %898 = vmatprep.subr.mxu0 %v416
    %899 = vmatpush1.msra.mxu0 %v415
    %900 = vmatprep.subr.mxu0 %v418
    %901 = vmatpush1.msra.mxu0 %v417
    %902 = vmatprep.subr.mxu0 %v420
    %903 = vmatpush1.msra.mxu0 %v419
    %904 = vmatprep.subr.mxu0 %v422
    %905 = vmatpush1.msra.mxu0 %v421
    %906 = vmatprep.subr.mxu0 %v424
    %907 = vmatpush1.msra.mxu0 %v423
    %908 = vmatprep.subr.mxu0 %v426
    %909 = vmatpush1.msra.mxu0 %v425
    %910 = vmatprep.subr.mxu0 %v428
    %911 = vmatpush1.msra.mxu0 %v427
    %912 = vmatprep.subr.mxu0 %v430
    %913 = vmatpush1.msra.mxu0 %v429
    %914 = vmatprep.subr.mxu0 %v432
    %915 = vmatpush1.msra.mxu0 %v431
    %916 = vmatprep.subr.mxu0 %v434
    %917 = vmatpush1.msra.mxu0 %v433
    %918 = vmatprep.subr.mxu0 %v436
    %919 = vmatpush1.msra.mxu0 %v435
    %920 = vmatprep.subr.mxu0 %v438
    %921 = vmatpush1.msra.mxu0 %v437
    %922 = vmatprep.subr.mxu0 %v440
    %923 = vmatpush1.msra.mxu0 %v439
    %924 = vmatprep.subr.mxu0 %v442
    %925 = vmatpush1.msra.mxu0 %v441
    %926 = vmatprep.subr.mxu0 %v444
    %927 = vmatpush1.msra.mxu0 %v443
    %928 = vmatprep.subr.mxu0 %v446
    %929 = vmatpush1.msra.mxu0 %v445
    %930 = vmatprep.subr.mxu0 %v448
    %931 = vmatpush1.msra.mxu0 %v447
    %932 = vmatprep.subr.mxu0 %v450
    %933 = vmatpush1.msra.mxu0 %v449
    %934 = vmatprep.subr.mxu0 %v452
    %935 = vmatpush1.msra.mxu0 %v451
    %936 = vmatprep.subr.mxu0 %v454
    %937 = vmatpush1.msra.mxu0 %v453
    %938 = vmatprep.subr.mxu0 %v456
    %939 = vmatpush1.msra.mxu0 %v455
    %940 = vmatprep.subr.mxu0 %v458
    %941 = vmatpush1.msra.mxu0 %v457
    %942 = vmatprep.mubr.f32.mxu0 %v877
    %943 = vmatmul.mubr.f32.gmra.mrb[0].mxu0 %v876
    %v944 = vpop.f32.mrb[0].mxu0
    %v945 = vadd.f32 0.0, %v944
    %v946 = vpop.f32.mrb[0].mxu0
    %v947 = vadd.f32 0.0, %v946
    %948 = vdwg.mxu0
    %v949 = vmul.f32 %v945, %v945
    %v950 = vmul.f32 %v947, %v947
    %v953 = vrot.slane %v949, 6
    %v954 = vrot.slane %v950, 6
    %v957 = vsub.f32 %v945, %v953
    %v958 = vsub.f32 %v947, %v954
    %v959 = vmax.f32 %v957, 0.0
    %v960 = vmax.f32 %v958, 0.0
    %v961 = vsub.f32 %v862, %v945
    %v962 = vsub.f32 %v864, %v947
    %v963 = vadd.f32 %v959, 1e-05
    %v964 = vadd.f32 %v960, 1e-05
    %v965 = vrsqrt.pop %v963
    %v966 = vrsqrt.pop %v964
    %v969 = vrot.slane %v965, 2
    %v970 = vrot.slane %v966, 2
    %v973 = vmul.f32 %v961, %v969
    %v974 = vmul.f32 %v962, %v970
    %s975 = scalar_lea.vmem %s8, 4
    %v976 = vld [vmem:[%s975] ss:$8 sm:$0x3]
    %v978 = vlaneseq
    %v979 = vshrl.u32 %v978, 7
    %v980 = vsub.s32 0, %v979
    %v981 = vrot.slane %v976, %v980
    %v982 = vlaneseq
    %v983 = vshrl.u32 %v982, 7
    %v984 = vsub.s32 1, %v983
    %v985 = vrot.slane %v976, %v984
    %v988 = vmul.f32 %v973, %v981
    %v989 = vmul.f32 %v974, %v985
    %s990 = scalar_lea.vmem %s8, 5
    %v991 = vld [vmem:[%s990] ss:$8 sm:$0x3]
    %v993 = vlaneseq
    %v994 = vshrl.u32 %v993, 7
    %v995 = vsub.s32 0, %v994
    %v996 = vrot.slane %v991, %v995
    %v997 = vlaneseq
    %v998 = vshrl.u32 %v997, 7
    %v999 = vsub.s32 1, %v998
    %v1000 = vrot.slane %v991, %v999
    %v1003 = vadd.f32 %v988, %v996
    %v1004 = vadd.f32 %v989, %v1000
    %v1005 = vmin.f32 %v1003, 20.0
    %v1006 = vmin.f32 %v1004, 20.0
    %v1007 = vmul.f32 %v1005, 1.442695
    %v1008 = vpow.pop %v1007
    %v1009 = vmul.f32 %v1006, 1.442695
    %v1010 = vpow.pop %v1009
    %v1011 = vmul.f32 %v1008, %v1008
    %v1012 = vmul.f32 %v1010, %v1010
    %v1013 = vmul.f32 %v1008, 2.0
    %v1014 = vmul.f32 %v1010, 2.0
    %v1015 = vadd.f32 %v1011, %v1013
    %v1016 = vadd.f32 %v1012, %v1014
    %v1017 = vmul.f32 %v1003, %v1015
    %v1018 = vmul.f32 %v1004, %v1016
    %v1019 = vadd.f32 %v1015, 2.0
    %v1020 = vadd.f32 %v1016, 2.0
    %v1021 = vrcp.pop %v1019
    %v1022 = vrcp.pop %v1020
    %v1023 = vmul.f32 %v1017, %v1021
    %v1024 = vmul.f32 %v1018, %v1022
    %v1025 = vpack.c.bf16 %v1023, %v1023
    %v1026 = vpack.c.bf16 %v1024, %v1024
    %v1027 = vld [vmem:[#allocation11] sm:$0xf]
    %v1028 = vld [vmem:[#allocation11 + $0x4] sm:$0xf]
    %v1029 = vld [vmem:[#allocation11 + $0x8] sm:$0xf]
    %v1030 = vld [vmem:[#allocation11 + $0xc] sm:$0xf]
    %v1031 = vld [vmem:[#allocation11 + $0x10] sm:$0xf]
    %v1032 = vld [vmem:[#allocation11 + $0x14] sm:$0xf]
    %v1033 = vld [vmem:[#allocation11 + $0x18] sm:$0xf]
    %v1034 = vld [vmem:[#allocation11 + $0x1c] sm:$0xf]
    %v1035 = vld [vmem:[#allocation11 + $0x20] sm:$0xf]
    %v1036 = vld [vmem:[#allocation11 + $0x24] sm:$0xf]
    %v1037 = vld [vmem:[#allocation11 + $0x28] sm:$0xf]
    %v1038 = vld [vmem:[#allocation11 + $0x2c] sm:$0xf]
    %v1039 = vld [vmem:[#allocation11 + $0x30] sm:$0xf]
    %v1040 = vld [vmem:[#allocation11 + $0x34] sm:$0xf]
    %v1041 = vld [vmem:[#allocation11 + $0x38] sm:$0xf]
    %v1042 = vld [vmem:[#allocation11 + $0x3c] sm:$0xf]
    %v1043 = vld [vmem:[#allocation11 + $0x40] sm:$0xf]
    %v1044 = vld [vmem:[#allocation11 + $0x44] sm:$0xf]
    %v1045 = vld [vmem:[#allocation11 + $0x48] sm:$0xf]
    %v1046 = vld [vmem:[#allocation11 + $0x4c] sm:$0xf]
    %v1047 = vld [vmem:[#allocation11 + $0x50] sm:$0xf]
    %v1048 = vld [vmem:[#allocation11 + $0x54] sm:$0xf]
    %v1049 = vld [vmem:[#allocation11 + $0x58] sm:$0xf]
    %v1050 = vld [vmem:[#allocation11 + $0x5c] sm:$0xf]
    %v1051 = vld [vmem:[#allocation11 + $0x60] sm:$0xf]
    %v1052 = vld [vmem:[#allocation11 + $0x64] sm:$0xf]
    %v1053 = vld [vmem:[#allocation11 + $0x68] sm:$0xf]
    %v1054 = vld [vmem:[#allocation11 + $0x6c] sm:$0xf]
    %v1055 = vld [vmem:[#allocation11 + $0x70] sm:$0xf]
    %v1056 = vld [vmem:[#allocation11 + $0x74] sm:$0xf]
    %v1057 = vld [vmem:[#allocation11 + $0x78] sm:$0xf]
    %v1058 = vld [vmem:[#allocation11 + $0x7c] sm:$0xf]
    %v1091 = vunpack.c.l.b16 %v1027
    %v1092 = vunpack.c.l.b16 %v1028
    %v1093 = vunpack.c.l.b16 %v1029
    %v1094 = vunpack.c.l.b16 %v1030
    %v1095 = vunpack.c.l.b16 %v1031
    %v1096 = vunpack.c.l.b16 %v1032
    %v1097 = vunpack.c.l.b16 %v1033
    %v1098 = vunpack.c.l.b16 %v1034
    %v1099 = vunpack.c.l.b16 %v1035
    %v1100 = vunpack.c.l.b16 %v1036
    %v1101 = vunpack.c.l.b16 %v1037
    %v1102 = vunpack.c.l.b16 %v1038
    %v1103 = vunpack.c.l.b16 %v1039
    %v1104 = vunpack.c.l.b16 %v1040
    %v1105 = vunpack.c.l.b16 %v1041
    %v1106 = vunpack.c.l.b16 %v1042
    %v1107 = vunpack.c.l.b16 %v1043
    %v1108 = vunpack.c.l.b16 %v1044
    %v1109 = vunpack.c.l.b16 %v1045
    %v1110 = vunpack.c.l.b16 %v1046
    %v1111 = vunpack.c.l.b16 %v1047
    %v1112 = vunpack.c.l.b16 %v1048
    %v1113 = vunpack.c.l.b16 %v1049
    %v1114 = vunpack.c.l.b16 %v1050
    %v1115 = vunpack.c.l.b16 %v1051
    %v1116 = vunpack.c.l.b16 %v1052
    %v1117 = vunpack.c.l.b16 %v1053
    %v1118 = vunpack.c.l.b16 %v1054
    %v1119 = vunpack.c.l.b16 %v1055
    %v1120 = vunpack.c.l.b16 %v1056
    %v1121 = vunpack.c.l.b16 %v1057
    %v1122 = vunpack.c.l.b16 %v1058
    %v1123 = vpack.c.b16 %v1092, %v1091
    %v1124 = vpack.c.b16 %v1094, %v1093
    %v1125 = vpack.c.b16 %v1096, %v1095
    %v1126 = vpack.c.b16 %v1098, %v1097
    %v1127 = vpack.c.b16 %v1100, %v1099
    %v1128 = vpack.c.b16 %v1102, %v1101
    %v1129 = vpack.c.b16 %v1104, %v1103
    %v1130 = vpack.c.b16 %v1106, %v1105
    %v1131 = vpack.c.b16 %v1108, %v1107
    %v1132 = vpack.c.b16 %v1110, %v1109
    %v1133 = vpack.c.b16 %v1112, %v1111
    %v1134 = vpack.c.b16 %v1114, %v1113
    %v1135 = vpack.c.b16 %v1116, %v1115
    %v1136 = vpack.c.b16 %v1118, %v1117
    %v1137 = vpack.c.b16 %v1120, %v1119
    %v1138 = vpack.c.b16 %v1122, %v1121
    %1155 = vmatprep.subr.bf16.mxu0 0
    %1156 = vmatpush1.bf16.msra.mxu0 %v1123
    %1157 = vmatprep.subr.bf16.mxu0 0
    %1158 = vmatpush1.bf16.msra.mxu0 %v1124
    %1159 = vmatprep.subr.bf16.mxu0 0
    %1160 = vmatpush1.bf16.msra.mxu0 %v1125
    %1161 = vmatprep.subr.bf16.mxu0 0
    %1162 = vmatpush1.bf16.msra.mxu0 %v1126
    %1163 = vmatprep.subr.bf16.mxu0 0
    %1164 = vmatpush1.bf16.msra.mxu0 %v1127
    %1165 = vmatprep.subr.bf16.mxu0 0
    %1166 = vmatpush1.bf16.msra.mxu0 %v1128
    %1167 = vmatprep.subr.bf16.mxu0 0
    %1168 = vmatpush1.bf16.msra.mxu0 %v1129
    %1169 = vmatprep.subr.bf16.mxu0 0
    %1170 = vmatpush1.bf16.msra.mxu0 %v1130
    %1171 = vmatprep.subr.bf16.mxu0 0
    %1172 = vmatpush1.bf16.msra.mxu0 %v1131
    %1173 = vmatprep.subr.bf16.mxu0 0
    %1174 = vmatpush1.bf16.msra.mxu0 %v1132
    %1175 = vmatprep.subr.bf16.mxu0 0
    %1176 = vmatpush1.bf16.msra.mxu0 %v1133
    %1177 = vmatprep.subr.bf16.mxu0 0
    %1178 = vmatpush1.bf16.msra.mxu0 %v1134
    %1179 = vmatprep.subr.bf16.mxu0 0
    %1180 = vmatpush1.bf16.msra.mxu0 %v1135
    %1181 = vmatprep.subr.bf16.mxu0 0
    %1182 = vmatpush1.bf16.msra.mxu0 %v1136
    %1183 = vmatprep.subr.bf16.mxu0 0
    %1184 = vmatpush1.bf16.msra.mxu0 %v1137
    %1185 = vmatprep.subr.bf16.mxu0 0
    %1186 = vmatpush1.bf16.msra.mxu0 %v1138
    %1187 = vmatprep.mubr.bf16.mxu0 %v1026
    %1188 = vmatmul.mubr.bf16.gmra.mrb[0].mxu0 %v1025
    %v1189 = vpop.f32.mrb[0].mxu0
    %v1190 = vadd.f32 %v365, %v1189
    %v1191 = vpop.f32.mrb[0].mxu0
    %v1192 = vpop.f32.mrb[0].mxu0
    %v1193 = vpop.f32.mrb[0].mxu0
    %1194 = vdwg.mxu0
    %v1195 = vld [vmem:[%s8 + $0x6] ss:$0 sm:$0xff]
    %v1196 = vadd.f32 %v1190, %v1195
    %v1197 = vmul.f32 %v127, 1.0204644
    %v1198 = vmul.f32 %v1196, 0.20334116
    %v1199 = vsub.f32 %v1197, %v1198
    %v1200 = vmax.f32 %v1199, -1.0
    %v1201 = vmin.f32 %v1200, 1.0
    %v1202 = vmul.f32 %v1201, 0.49861386
    %v1203 = vmul.f32 %v127, 0.50133514
    %v1204 = vadd.f32 %v1202, %v1203
    %v1205 = vld [vmem:[%s3] sm:$0x3]
    %v1206 = vadd.f32 %v1204, %v1205
    %v1207 = vlaneseq
    %v1208 = vshrl.u32 %v1207, 7
    %v1209 = vsub.s32 0, %v1208
    %v1210 = vrot.slane %v125, %v1209
    %v1211 = vmul.f32 %v1206, %v1210
    %v1212 = vadd.f32 %v1211, %v126
    %v1213 = vpack.c.bf16 %v1212, %v1212
    %1214 = vmatprep.subr.bf16.mxu0 %v242
    %1215 = vmatpush1.bf16.msra.mxu0 %v241
    %1216 = vmatprep.subr.bf16.mxu0 %v245
    %1217 = vmatpush1.bf16.msra.mxu0 %v244
    %1218 = vmatprep.subr.bf16.mxu0 %v248
    %1219 = vmatpush1.bf16.msra.mxu0 %v247
    %1220 = vmatprep.subr.bf16.mxu0 %v251
    %1221 = vmatpush1.bf16.msra.mxu0 %v250
    %1222 = vmatprep.subr.bf16.mxu0 %v254
    %1223 = vmatpush1.bf16.msra.mxu0 %v253
    %1224 = vmatprep.subr.bf16.mxu0 %v257
    %1225 = vmatpush1.bf16.msra.mxu0 %v256
    %1226 = vmatprep.subr.bf16.mxu0 %v260
    %1227 = vmatpush1.bf16.msra.mxu0 %v259
    %1228 = vmatprep.subr.bf16.mxu0 %v263
    %1229 = vmatpush1.bf16.msra.mxu0 %v262
    %1230 = vmatprep.subr.bf16.mxu0 0
    %1231 = vmatpush1.bf16.msra.mxu0 0
    %1232 = vmatprep.subr.bf16.mxu0 0
    %1233 = vmatpush1.bf16.msra.mxu0 0
    %1234 = vmatprep.subr.bf16.mxu0 0
    %1235 = vmatpush1.bf16.msra.mxu0 0
    %1236 = vmatprep.subr.bf16.mxu0 0
    %1237 = vmatpush1.bf16.msra.mxu0 0
    %1238 = vmatprep.subr.bf16.mxu0 0
    %1239 = vmatpush1.bf16.msra.mxu0 0
    %1240 = vmatprep.subr.bf16.mxu0 0
    %1241 = vmatpush1.bf16.msra.mxu0 0
    %1242 = vmatprep.subr.bf16.mxu0 0
    %1243 = vmatpush1.bf16.msra.mxu0 0
    %1244 = vmatprep.subr.bf16.mxu0 0
    %1245 = vmatpush1.bf16.msra.mxu0 0
    %1246 = vmatprep.mubr.bf16.mxu0 0
    %1247 = vmatmul.mubr.bf16.gmra.mrb[0].mxu0 %v1213
    %v1248 = vpop.f32.mrb[0].mxu0
    %v1249 = vadd.f32 0.0, %v1248
    %v1250 = vpop.f32.mrb[0].mxu0
    %v1251 = vadd.f32 0.0, %v1250
    %v1252 = vpop.f32.mrb[0].mxu0
    %v1253 = vpop.f32.mrb[0].mxu0
    %1254 = vdwg.mxu0
    %1255 = vmatprep.subr.bf16.mxu0 0
    %1256 = vmatpush1.bf16.msra.mxu0 %v243
    %1257 = vmatprep.subr.bf16.mxu0 0
    %1258 = vmatpush1.bf16.msra.mxu0 %v246
    %1259 = vmatprep.subr.bf16.mxu0 0
    %1260 = vmatpush1.bf16.msra.mxu0 %v249
    %1261 = vmatprep.subr.bf16.mxu0 0
    %1262 = vmatpush1.bf16.msra.mxu0 %v252
    %1263 = vmatprep.subr.bf16.mxu0 0
    %1264 = vmatpush1.bf16.msra.mxu0 %v255
    %1265 = vmatprep.subr.bf16.mxu0 0
    %1266 = vmatpush1.bf16.msra.mxu0 %v258
    %1267 = vmatprep.subr.bf16.mxu0 0
    %1268 = vmatpush1.bf16.msra.mxu0 %v261
    %1269 = vmatprep.subr.bf16.mxu0 0
    %1270 = vmatpush1.bf16.msra.mxu0 %v264
    %1271 = vmatprep.subr.bf16.mxu0 0
    %1272 = vmatpush1.bf16.msra.mxu0 0
    %1273 = vmatprep.subr.bf16.mxu0 0
    %1274 = vmatpush1.bf16.msra.mxu0 0
    %1275 = vmatprep.subr.bf16.mxu0 0
    %1276 = vmatpush1.bf16.msra.mxu0 0
    %1277 = vmatprep.subr.bf16.mxu0 0
    %1278 = vmatpush1.bf16.msra.mxu0 0
    %1279 = vmatprep.subr.bf16.mxu0 0
    %1280 = vmatpush1.bf16.msra.mxu0 0
    %1281 = vmatprep.subr.bf16.mxu0 0
    %1282 = vmatpush1.bf16.msra.mxu0 0
    %1283 = vmatprep.subr.bf16.mxu0 0
    %1284 = vmatpush1.bf16.msra.mxu0 0
    %1285 = vmatprep.subr.bf16.mxu0 0
    %1286 = vmatpush1.bf16.msra.mxu0 0
    %1287 = vmatprep.mubr.bf16.mxu0 0
    %1288 = vmatmul.mubr.bf16.gmra.mrb[0].mxu0 %v1213
    %v1289 = vpop.f32.mrb[0].mxu0
    %v1290 = vadd.f32 0.0, %v1289
    %v1291 = vpop.f32.mrb[0].mxu0
    %v1292 = vpop.f32.mrb[0].mxu0
    %v1293 = vpop.f32.mrb[0].mxu0
    %1294 = vdwg.mxu0
    %v1295 = vadd.f32 %v1249, %v375
    %v1296 = vadd.f32 %v1251, %v379
    %v1297 = vmul.f32 %v1295, %v1295
    %v1298 = vmul.f32 %v1296, %v1296
    %v1301 = vrot.slane %v1297, 6
    %v1302 = vrot.slane %v1298, 6
    %v1305 = vsel %vm392, %v1295, %v1301
    %v1306 = vsel %vm392, %v1296, %v1302
    %1307 = vmatprep.subr.mxu0 %v396
    %1308 = vmatpush1.msra.mxu0 %v395
    %1309 = vmatprep.subr.mxu0 %v398
    %1310 = vmatpush1.msra.mxu0 %v397
    %1311 = vmatprep.subr.mxu0 %v400
    %1312 = vmatpush1.msra.mxu0 %v399
    %1313 = vmatprep.subr.mxu0 %v402
    %1314 = vmatpush1.msra.mxu0 %v401
    %1315 = vmatprep.subr.mxu0 %v404
    %1316 = vmatpush1.msra.mxu0 %v403
    %1317 = vmatprep.subr.mxu0 %v406
    %1318 = vmatpush1.msra.mxu0 %v405
    %1319 = vmatprep.subr.mxu0 %v408
    %1320 = vmatpush1.msra.mxu0 %v407
    %1321 = vmatprep.subr.mxu0 %v410
    %1322 = vmatpush1.msra.mxu0 %v409
    %1323 = vmatprep.subr.mxu0 %v412
    %1324 = vmatpush1.msra.mxu0 %v411
    %1325 = vmatprep.subr.mxu0 %v414
    %1326 = vmatpush1.msra.mxu0 %v413
    %1327 = vmatprep.subr.mxu0 %v416
    %1328 = vmatpush1.msra.mxu0 %v415
    %1329 = vmatprep.subr.mxu0 %v418
    %1330 = vmatpush1.msra.mxu0 %v417
    %1331 = vmatprep.subr.mxu0 %v420
    %1332 = vmatpush1.msra.mxu0 %v419
    %1333 = vmatprep.subr.mxu0 %v422
    %1334 = vmatpush1.msra.mxu0 %v421
    %1335 = vmatprep.subr.mxu0 %v424
    %1336 = vmatpush1.msra.mxu0 %v423
    %1337 = vmatprep.subr.mxu0 %v426
    %1338 = vmatpush1.msra.mxu0 %v425
    %1339 = vmatprep.subr.mxu0 %v428
    %1340 = vmatpush1.msra.mxu0 %v427
    %1341 = vmatprep.subr.mxu0 %v430
    %1342 = vmatpush1.msra.mxu0 %v429
    %1343 = vmatprep.subr.mxu0 %v432
    %1344 = vmatpush1.msra.mxu0 %v431
    %1345 = vmatprep.subr.mxu0 %v434
    %1346 = vmatpush1.msra.mxu0 %v433
    %1347 = vmatprep.subr.mxu0 %v436
    %1348 = vmatpush1.msra.mxu0 %v435
    %1349 = vmatprep.subr.mxu0 %v438
    %1350 = vmatpush1.msra.mxu0 %v437
    %1351 = vmatprep.subr.mxu0 %v440
    %1352 = vmatpush1.msra.mxu0 %v439
    %1353 = vmatprep.subr.mxu0 %v442
    %1354 = vmatpush1.msra.mxu0 %v441
    %1355 = vmatprep.subr.mxu0 %v444
    %1356 = vmatpush1.msra.mxu0 %v443
    %1357 = vmatprep.subr.mxu0 %v446
    %1358 = vmatpush1.msra.mxu0 %v445
    %1359 = vmatprep.subr.mxu0 %v448
    %1360 = vmatpush1.msra.mxu0 %v447
    %1361 = vmatprep.subr.mxu0 %v450
    %1362 = vmatpush1.msra.mxu0 %v449
    %1363 = vmatprep.subr.mxu0 %v452
    %1364 = vmatpush1.msra.mxu0 %v451
    %1365 = vmatprep.subr.mxu0 %v454
    %1366 = vmatpush1.msra.mxu0 %v453
    %1367 = vmatprep.subr.mxu0 %v456
    %1368 = vmatpush1.msra.mxu0 %v455
    %1369 = vmatprep.subr.mxu0 %v458
    %1370 = vmatpush1.msra.mxu0 %v457
    %1371 = vmatprep.mubr.f32.mxu0 %v1306
    %1372 = vmatmul.mubr.f32.gmra.mrb[0].mxu0 %v1305
    %v1373 = vpop.f32.mrb[0].mxu0
    %v1374 = vadd.f32 0.0, %v1373
    %v1375 = vpop.f32.mrb[0].mxu0
    %v1376 = vadd.f32 0.0, %v1375
    %1377 = vdwg.mxu0
    %v1378 = vmul.f32 %v1374, %v1374
    %v1379 = vmul.f32 %v1376, %v1376
    %v1382 = vrot.slane %v1378, 6
    %v1383 = vrot.slane %v1379, 6
    %v1386 = vsub.f32 %v1374, %v1382
    %v1387 = vsub.f32 %v1376, %v1383
    %v1388 = vmax.f32 %v1386, 0.0
    %v1389 = vmax.f32 %v1387, 0.0
    %v1390 = vsub.f32 %v1295, %v1374
    %v1391 = vsub.f32 %v1296, %v1376
    %v1392 = vadd.f32 %v1388, 1e-05
    %v1393 = vadd.f32 %v1389, 1e-05
    %v1394 = vrsqrt.pop %v1392
    %v1395 = vrsqrt.pop %v1393
    %v1398 = vrot.slane %v1394, 2
    %v1399 = vrot.slane %v1395, 2
    %v1402 = vmul.f32 %v1390, %v1398
    %v1403 = vmul.f32 %v1391, %v1399
    %v1404 = vmul.f32 %v1402, %v562
    %v1405 = vmul.f32 %v1403, %v566
    %v1406 = vadd.f32 %v1404, %v577
    %v1407 = vadd.f32 %v1405, %v581
    %v1408 = vmin.f32 %v1406, 20.0
    %v1409 = vmin.f32 %v1407, 20.0
    %v1410 = vmul.f32 %v1408, 1.442695
    %v1411 = vpow.pop %v1410
    %v1412 = vmul.f32 %v1409, 1.442695
    %v1413 = vpow.pop %v1412
    %v1414 = vmul.f32 %v1411, %v1411
    %v1415 = vmul.f32 %v1413, %v1413
    %v1416 = vmul.f32 %v1411, 2.0
    %v1417 = vmul.f32 %v1413, 2.0
    %v1418 = vadd.f32 %v1414, %v1416
    %v1419 = vadd.f32 %v1415, %v1417
    %v1420 = vmul.f32 %v1406, %v1418
    %v1421 = vmul.f32 %v1407, %v1419
    %v1422 = vadd.f32 %v1418, 2.0
    %v1423 = vadd.f32 %v1419, 2.0
    %v1424 = vrcp.pop %v1422
    %v1425 = vrcp.pop %v1423
    %v1426 = vmul.f32 %v1420, %v1424
    %v1427 = vmul.f32 %v1421, %v1425
    %s1428 = scalar_lea.vmem [#allocation7], 4
    %v1429 = vld [vmem:[%s1428] sm:$0xf]
    %v1432 = vunpack.c.l.s4 1983009808
    %v1433 = vunpack.c.0.s8 %v1432
    %v1434 = vlaneseq
    %v1435 = vshrl.u32 %v1434, 7
    %v1436 = vsub.s32 %v1433, %v1435
    %v1437 = vrot.slane %v1429, %v1436
    %v1438 = vcombine.high %v1437, %v1437
    %v1441 = vadd.f32 %v1426, %v1437
    %v1442 = vadd.f32 %v1427, %v1438
    %v1443 = vpack.c.bf16 %v1441, %v1441
    %v1444 = vpack.c.bf16 %v1442, %v1442
    %1445 = vmatprep.subr.bf16.mxu0 %v764
    %1446 = vmatpush1.bf16.msra.mxu0 %v763
    %1447 = vmatprep.subr.bf16.mxu0 %v766
    %1448 = vmatpush1.bf16.msra.mxu0 %v765
    %1449 = vmatprep.subr.bf16.mxu0 %v768
    %1450 = vmatpush1.bf16.msra.mxu0 %v767
    %1451 = vmatprep.subr.bf16.mxu0 %v770
    %1452 = vmatpush1.bf16.msra.mxu0 %v769
    %1453 = vmatprep.subr.bf16.mxu0 %v772
    %1454 = vmatpush1.bf16.msra.mxu0 %v771
    %1455 = vmatprep.subr.bf16.mxu0 %v774
    %1456 = vmatpush1.bf16.msra.mxu0 %v773
    %1457 = vmatprep.subr.bf16.mxu0 %v776
    %1458 = vmatpush1.bf16.msra.mxu0 %v775
    %1459 = vmatprep.subr.bf16.mxu0 %v778
    %1460 = vmatpush1.bf16.msra.mxu0 %v777
    %1461 = vmatprep.subr.bf16.mxu0 %v780
    %1462 = vmatpush1.bf16.msra.mxu0 %v779
    %1463 = vmatprep.subr.bf16.mxu0 %v782
    %1464 = vmatpush1.bf16.msra.mxu0 %v781
    %1465 = vmatprep.subr.bf16.mxu0 %v784
    %1466 = vmatpush1.bf16.msra.mxu0 %v783
    %1467 = vmatprep.subr.bf16.mxu0 %v786
    %1468 = vmatpush1.bf16.msra.mxu0 %v785
    %1469 = vmatprep.subr.bf16.mxu0 %v788
    %1470 = vmatpush1.bf16.msra.mxu0 %v787
    %1471 = vmatprep.subr.bf16.mxu0 %v790
    %1472 = vmatpush1.bf16.msra.mxu0 %v789
    %1473 = vmatprep.subr.bf16.mxu0 %v792
    %1474 = vmatpush1.bf16.msra.mxu0 %v791
    %1475 = vmatprep.subr.bf16.mxu0 %v794
    %1476 = vmatpush1.bf16.msra.mxu0 %v793
    %1477 = vmatprep.mubr.bf16.mxu0 %v1444
    %1478 = vmatmul.mubr.bf16.gmra.mrb[0].mxu0 %v1443
    %v1479 = vpop.f32.mrb[0].mxu0
    %v1480 = vadd.f32 %v660, %v1479
    %v1481 = vpop.f32.mrb[0].mxu0
    %v1482 = vadd.f32 %v664, %v1481
    %v1483 = vpop.f32.mrb[0].mxu0
    %v1484 = vpop.f32.mrb[0].mxu0
    %1485 = vdwg.mxu0
    %v1486 = vmul.f32 %v1480, %v1480
    %v1487 = vmul.f32 %v1482, %v1482
    %v1490 = vrot.slane %v1486, 6
    %v1491 = vrot.slane %v1487, 6
    %v1494 = vsel %vm392, %v1480, %v1490
    %v1495 = vsel %vm392, %v1482, %v1491
    %1496 = vmatprep.subr.mxu0 %v396
    %1497 = vmatpush1.msra.mxu0 %v395
    %1498 = vmatprep.subr.mxu0 %v398
    %1499 = vmatpush1.msra.mxu0 %v397
    %1500 = vmatprep.subr.mxu0 %v400
    %1501 = vmatpush1.msra.mxu0 %v399
    %1502 = vmatprep.subr.mxu0 %v402
    %1503 = vmatpush1.msra.mxu0 %v401
    %1504 = vmatprep.subr.mxu0 %v404
    %1505 = vmatpush1.msra.mxu0 %v403
    %1506 = vmatprep.subr.mxu0 %v406
    %1507 = vmatpush1.msra.mxu0 %v405
    %1508 = vmatprep.subr.mxu0 %v408
    %1509 = vmatpush1.msra.mxu0 %v407
    %1510 = vmatprep.subr.mxu0 %v410
    %1511 = vmatpush1.msra.mxu0 %v409
    %1512 = vmatprep.subr.mxu0 %v412
    %1513 = vmatpush1.msra.mxu0 %v411
    %1514 = vmatprep.subr.mxu0 %v414
    %1515 = vmatpush1.msra.mxu0 %v413
    %1516 = vmatprep.subr.mxu0 %v416
    %1517 = vmatpush1.msra.mxu0 %v415
    %1518 = vmatprep.subr.mxu0 %v418
    %1519 = vmatpush1.msra.mxu0 %v417
    %1520 = vmatprep.subr.mxu0 %v420
    %1521 = vmatpush1.msra.mxu0 %v419
    %1522 = vmatprep.subr.mxu0 %v422
    %1523 = vmatpush1.msra.mxu0 %v421
    %1524 = vmatprep.subr.mxu0 %v424
    %1525 = vmatpush1.msra.mxu0 %v423
    %1526 = vmatprep.subr.mxu0 %v426
    %1527 = vmatpush1.msra.mxu0 %v425
    %1528 = vmatprep.subr.mxu0 %v428
    %1529 = vmatpush1.msra.mxu0 %v427
    %1530 = vmatprep.subr.mxu0 %v430
    %1531 = vmatpush1.msra.mxu0 %v429
    %1532 = vmatprep.subr.mxu0 %v432
    %1533 = vmatpush1.msra.mxu0 %v431
    %1534 = vmatprep.subr.mxu0 %v434
    %1535 = vmatpush1.msra.mxu0 %v433
    %1536 = vmatprep.subr.mxu0 %v436
    %1537 = vmatpush1.msra.mxu0 %v435
    %1538 = vmatprep.subr.mxu0 %v438
    %1539 = vmatpush1.msra.mxu0 %v437
    %1540 = vmatprep.subr.mxu0 %v440
    %1541 = vmatpush1.msra.mxu0 %v439
    %1542 = vmatprep.subr.mxu0 %v442
    %1543 = vmatpush1.msra.mxu0 %v441
    %1544 = vmatprep.subr.mxu0 %v444
    %1545 = vmatpush1.msra.mxu0 %v443
    %1546 = vmatprep.subr.mxu0 %v446
    %1547 = vmatpush1.msra.mxu0 %v445
    %1548 = vmatprep.subr.mxu0 %v448
    %1549 = vmatpush1.msra.mxu0 %v447
    %1550 = vmatprep.subr.mxu0 %v450
    %1551 = vmatpush1.msra.mxu0 %v449
    %1552 = vmatprep.subr.mxu0 %v452
    %1553 = vmatpush1.msra.mxu0 %v451
    %1554 = vmatprep.subr.mxu0 %v454
    %1555 = vmatpush1.msra.mxu0 %v453
    %1556 = vmatprep.subr.mxu0 %v456
    %1557 = vmatpush1.msra.mxu0 %v455
    %1558 = vmatprep.subr.mxu0 %v458
    %1559 = vmatpush1.msra.mxu0 %v457
    %1560 = vmatprep.mubr.f32.mxu0 %v1495
    %1561 = vmatmul.mubr.f32.gmra.mrb[0].mxu0 %v1494
    %v1562 = vpop.f32.mrb[0].mxu0
    %v1563 = vadd.f32 0.0, %v1562
    %v1564 = vpop.f32.mrb[0].mxu0
    %v1565 = vadd.f32 0.0, %v1564
    %1566 = vdwg.mxu0
    %v1567 = vmul.f32 %v1563, %v1563
    %v1568 = vmul.f32 %v1565, %v1565
    %v1571 = vrot.slane %v1567, 6
    %v1572 = vrot.slane %v1568, 6
    %v1575 = vsub.f32 %v1563, %v1571
    %v1576 = vsub.f32 %v1565, %v1572
    %v1577 = vmax.f32 %v1575, 0.0
    %v1578 = vmax.f32 %v1576, 0.0
    %v1579 = vsub.f32 %v1480, %v1563
    %v1580 = vsub.f32 %v1482, %v1565
    %v1581 = vadd.f32 %v1577, 1e-05
    %v1582 = vadd.f32 %v1578, 1e-05
    %v1583 = vrsqrt.pop %v1581
    %v1584 = vrsqrt.pop %v1582
    %v1587 = vrot.slane %v1583, 2
    %v1588 = vrot.slane %v1584, 2
    %v1591 = vmul.f32 %v1579, %v1587
    %v1592 = vmul.f32 %v1580, %v1588
    %v1593 = vmul.f32 %v1591, %v981
    %v1594 = vmul.f32 %v1592, %v985
    %v1595 = vadd.f32 %v1593, %v996
    %v1596 = vadd.f32 %v1594, %v1000
    %v1597 = vmin.f32 %v1595, 20.0
    %v1598 = vmin.f32 %v1596, 20.0
    %v1599 = vmul.f32 %v1597, 1.442695
    %v1600 = vpow.pop %v1599
    %v1601 = vmul.f32 %v1598, 1.442695
    %v1602 = vpow.pop %v1601
    %v1603 = vmul.f32 %v1600, %v1600
    %v1604 = vmul.f32 %v1602, %v1602
    %v1605 = vmul.f32 %v1600, 2.0
    %v1606 = vmul.f32 %v1602, 2.0
    %v1607 = vadd.f32 %v1603, %v1605
    %v1608 = vadd.f32 %v1604, %v1606
    %v1609 = vmul.f32 %v1595, %v1607
    %v1610 = vmul.f32 %v1596, %v1608
    %v1611 = vadd.f32 %v1607, 2.0
    %v1612 = vadd.f32 %v1608, 2.0
    %v1613 = vrcp.pop %v1611
    %v1614 = vrcp.pop %v1612
    %v1615 = vmul.f32 %v1609, %v1613
    %v1616 = vmul.f32 %v1610, %v1614
    %v1617 = vpack.c.bf16 %v1615, %v1615
    %v1618 = vpack.c.bf16 %v1616, %v1616
    %1619 = vmatprep.subr.bf16.mxu0 0
    %1620 = vmatpush1.bf16.msra.mxu0 %v1123
    %1621 = vmatprep.subr.bf16.mxu0 0
    %1622 = vmatpush1.bf16.msra.mxu0 %v1124
    %1623 = vmatprep.subr.bf16.mxu0 0
    %1624 = vmatpush1.bf16.msra.mxu0 %v1125
    %1625 = vmatprep.subr.bf16.mxu0 0
    %1626 = vmatpush1.bf16.msra.mxu0 %v1126
    %1627 = vmatprep.subr.bf16.mxu0 0
    %1628 = vmatpush1.bf16.msra.mxu0 %v1127
    %1629 = vmatprep.subr.bf16.mxu0 0
    %1630 = vmatpush1.bf16.msra.mxu0 %v1128
    %1631 = vmatprep.subr.bf16.mxu0 0
    %1632 = vmatpush1.bf16.msra.mxu0 %v1129
    %1633 = vmatprep.subr.bf16.mxu0 0
    %1634 = vmatpush1.bf16.msra.mxu0 %v1130
    %1635 = vmatprep.subr.bf16.mxu0 0
    %1636 = vmatpush1.bf16.msra.mxu0 %v1131
    %1637 = vmatprep.subr.bf16.mxu0 0
    %1638 = vmatpush1.bf16.msra.mxu0 %v1132
    %1639 = vmatprep.subr.bf16.mxu0 0
    %1640 = vmatpush1.bf16.msra.mxu0 %v1133
    %1641 = vmatprep.subr.bf16.mxu0 0
    %1642 = vmatpush1.bf16.msra.mxu0 %v1134
    %1643 = vmatprep.subr.bf16.mxu0 0
    %1644 = vmatpush1.bf16.msra.mxu0 %v1135
    %1645 = vmatprep.subr.bf16.mxu0 0
    %1646 = vmatpush1.bf16.msra.mxu0 %v1136
    %1647 = vmatprep.subr.bf16.mxu0 0
    %1648 = vmatpush1.bf16.msra.mxu0 %v1137
    %1649 = vmatprep.subr.bf16.mxu0 0
    %1650 = vmatpush1.bf16.msra.mxu0 %v1138
    %1651 = vmatprep.mubr.bf16.mxu0 %v1618
    %1652 = vmatmul.mubr.bf16.gmra.mrb[0].mxu0 %v1617
    %v1653 = vpop.f32.mrb[0].mxu0
    %v1654 = vadd.f32 %v1290, %v1653
    %v1655 = vpop.f32.mrb[0].mxu0
    %v1656 = vpop.f32.mrb[0].mxu0
    %v1657 = vpop.f32.mrb[0].mxu0
    %1658 = vdwg.mxu0
    %v1659 = vadd.f32 %v1654, %v1195
    %v1660 = vmul.f32 %v1212, 1.0102082
    %v1661 = vmul.f32 %v1659, 0.14325044
    %v1662 = vsub.f32 %v1660, %v1661
    %v1663 = vmax.f32 %v1662, -1.0
    %v1664 = vmin.f32 %v1663, 1.0
    %v1665 = vmul.f32 %v1664, 0.66246736
    %v1666 = vmul.f32 %v1212, 0.3375216
    %v1667 = vadd.f32 %v1665, %v1666
    %s1668 = scalar_lea.vmem %s3, 2
    %v1669 = vld [vmem:[%s1668] sm:$0x3]
    %v1670 = vadd.f32 %v1667, %v1669
    %v1671 = vmul.f32 %v1670, %v1210
    %v1672 = vadd.f32 %v1671, %v126
    %v1673 = vpack.c.bf16 %v1672, %v1672
    %1674 = vmatprep.subr.bf16.mxu0 %v242
    %1675 = vmatpush1.bf16.msra.mxu0 %v241
    %1676 = vmatprep.subr.bf16.mxu0 %v245
    %1677 = vmatpush1.bf16.msra.mxu0 %v244
    %1678 = vmatprep.subr.bf16.mxu0 %v248
    %1679 = vmatpush1.bf16.msra.mxu0 %v247
    %1680 = vmatprep.subr.bf16.mxu0 %v251
    %1681 = vmatpush1.bf16.msra.mxu0 %v250
    %1682 = vmatprep.subr.bf16.mxu0 %v254
    %1683 = vmatpush1.bf16.msra.mxu0 %v253
    %1684 = vmatprep.subr.bf16.mxu0 %v257
    %1685 = vmatpush1.bf16.msra.mxu0 %v256
    %1686 = vmatprep.subr.bf16.mxu0 %v260
    %1687 = vmatpush1.bf16.msra.mxu0 %v259
    %1688 = vmatprep.subr.bf16.mxu0 %v263
    %1689 = vmatpush1.bf16.msra.mxu0 %v262
    %1690 = vmatprep.subr.bf16.mxu0 0
    %1691 = vmatpush1.bf16.msra.mxu0 0
    %1692 = vmatprep.subr.bf16.mxu0 0
    %1693 = vmatpush1.bf16.msra.mxu0 0
    %1694 = vmatprep.subr.bf16.mxu0 0
    %1695 = vmatpush1.bf16.msra.mxu0 0
    %1696 = vmatprep.subr.bf16.mxu0 0
    %1697 = vmatpush1.bf16.msra.mxu0 0
    %1698 = vmatprep.subr.bf16.mxu0 0
    %1699 = vmatpush1.bf16.msra.mxu0 0
    %1700 = vmatprep.subr.bf16.mxu0 0
    %1701 = vmatpush1.bf16.msra.mxu0 0
    %1702 = vmatprep.subr.bf16.mxu0 0
    %1703 = vmatpush1.bf16.msra.mxu0 0
    %1704 = vmatprep.subr.bf16.mxu0 0
    %1705 = vmatpush1.bf16.msra.mxu0 0
    %1706 = vmatprep.mubr.bf16.mxu0 0
    %1707 = vmatmul.mubr.bf16.gmra.mrb[0].mxu0 %v1673
    %v1708 = vpop.f32.mrb[0].mxu0
    %v1709 = vadd.f32 0.0, %v1708
    %v1710 = vpop.f32.mrb[0].mxu0
    %v1711 = vadd.f32 0.0, %v1710
    %v1712 = vpop.f32.mrb[0].mxu0
    %v1713 = vpop.f32.mrb[0].mxu0
    %1714 = vdwg.mxu0
    %1715 = vmatprep.subr.bf16.mxu0 0
    %1716 = vmatpush1.bf16.msra.mxu0 %v243
    %1717 = vmatprep.subr.bf16.mxu0 0
    %1718 = vmatpush1.bf16.msra.mxu0 %v246
    %1719 = vmatprep.subr.bf16.mxu0 0
    %1720 = vmatpush1.bf16.msra.mxu0 %v249
    %1721 = vmatprep.subr.bf16.mxu0 0
    %1722 = vmatpush1.bf16.msra.mxu0 %v252
    %1723 = vmatprep.subr.bf16.mxu0 0
    %1724 = vmatpush1.bf16.msra.mxu0 %v255
    %1725 = vmatprep.subr.bf16.mxu0 0
    %1726 = vmatpush1.bf16.msra.mxu0 %v258
    %1727 = vmatprep.subr.bf16.mxu0 0
    %1728 = vmatpush1.bf16.msra.mxu0 %v261
    %1729 = vmatprep.subr.bf16.mxu0 0
    %1730 = vmatpush1.bf16.msra.mxu0 %v264
    %1731 = vmatprep.subr.bf16.mxu0 0
    %1732 = vmatpush1.bf16.msra.mxu0 0
    %1733 = vmatprep.subr.bf16.mxu0 0
    %1734 = vmatpush1.bf16.msra.mxu0 0
    %1735 = vmatprep.subr.bf16.mxu0 0
    %1736 = vmatpush1.bf16.msra.mxu0 0
    %1737 = vmatprep.subr.bf16.mxu0 0
    %1738 = vmatpush1.bf16.msra.mxu0 0
    %1739 = vmatprep.subr.bf16.mxu0 0
    %1740 = vmatpush1.bf16.msra.mxu0 0
    %1741 = vmatprep.subr.bf16.mxu0 0
    %1742 = vmatpush1.bf16.msra.mxu0 0
    %1743 = vmatprep.subr.bf16.mxu0 0
    %1744 = vmatpush1.bf16.msra.mxu0 0
    %1745 = vmatprep.subr.bf16.mxu0 0
    %1746 = vmatpush1.bf16.msra.mxu0 0
    %1747 = vmatprep.mubr.bf16.mxu0 0
    %1748 = vmatmul.mubr.bf16.gmra.mrb[0].mxu0 %v1673
    %v1749 = vpop.f32.mrb[0].mxu0
    %v1750 = vadd.f32 0.0, %v1749
    %v1751 = vpop.f32.mrb[0].mxu0
    %v1752 = vpop.f32.mrb[0].mxu0
    %v1753 = vpop.f32.mrb[0].mxu0
    %1754 = vdwg.mxu0
    %v1755 = vadd.f32 %v1709, %v375
    %v1756 = vadd.f32 %v1711, %v379
    %v1757 = vmul.f32 %v1755, %v1755
    %v1758 = vmul.f32 %v1756, %v1756
    %v1761 = vrot.slane %v1757, 6
    %v1762 = vrot.slane %v1758, 6
    %v1765 = vsel %vm392, %v1755, %v1761
    %v1766 = vsel %vm392, %v1756, %v1762
    %1767 = vmatprep.subr.mxu0 %v396
    %1768 = vmatpush1.msra.mxu0 %v395
    %1769 = vmatprep.subr.mxu0 %v398
    %1770 = vmatpush1.msra.mxu0 %v397
    %1771 = vmatprep.subr.mxu0 %v400
    %1772 = vmatpush1.msra.mxu0 %v399
    %1773 = vmatprep.subr.mxu0 %v402
    %1774 = vmatpush1.msra.mxu0 %v401
    %1775 = vmatprep.subr.mxu0 %v404
    %1776 = vmatpush1.msra.mxu0 %v403
    %1777 = vmatprep.subr.mxu0 %v406
    %1778 = vmatpush1.msra.mxu0 %v405
    %1779 = vmatprep.subr.mxu0 %v408
    %1780 = vmatpush1.msra.mxu0 %v407
    %1781 = vmatprep.subr.mxu0 %v410
    %1782 = vmatpush1.msra.mxu0 %v409
    %1783 = vmatprep.subr.mxu0 %v412
    %1784 = vmatpush1.msra.mxu0 %v411
    %1785 = vmatprep.subr.mxu0 %v414
    %1786 = vmatpush1.msra.mxu0 %v413
    %1787 = vmatprep.subr.mxu0 %v416
    %1788 = vmatpush1.msra.mxu0 %v415
    %1789 = vmatprep.subr.mxu0 %v418
    %1790 = vmatpush1.msra.mxu0 %v417
    %1791 = vmatprep.subr.mxu0 %v420
    %1792 = vmatpush1.msra.mxu0 %v419
    %1793 = vmatprep.subr.mxu0 %v422
    %1794 = vmatpush1.msra.mxu0 %v421
    %1795 = vmatprep.subr.mxu0 %v424
    %1796 = vmatpush1.msra.mxu0 %v423
    %1797 = vmatprep.subr.mxu0 %v426
    %1798 = vmatpush1.msra.mxu0 %v425
    %1799 = vmatprep.subr.mxu0 %v428
    %1800 = vmatpush1.msra.mxu0 %v427
    %1801 = vmatprep.subr.mxu0 %v430
    %1802 = vmatpush1.msra.mxu0 %v429
    %1803 = vmatprep.subr.mxu0 %v432
    %1804 = vmatpush1.msra.mxu0 %v431
    %1805 = vmatprep.subr.mxu0 %v434
    %1806 = vmatpush1.msra.mxu0 %v433
    %1807 = vmatprep.subr.mxu0 %v436
    %1808 = vmatpush1.msra.mxu0 %v435
    %1809 = vmatprep.subr.mxu0 %v438
    %1810 = vmatpush1.msra.mxu0 %v437
    %1811 = vmatprep.subr.mxu0 %v440
    %1812 = vmatpush1.msra.mxu0 %v439
    %1813 = vmatprep.subr.mxu0 %v442
    %1814 = vmatpush1.msra.mxu0 %v441
    %1815 = vmatprep.subr.mxu0 %v444
    %1816 = vmatpush1.msra.mxu0 %v443
    %1817 = vmatprep.subr.mxu0 %v446
    %1818 = vmatpush1.msra.mxu0 %v445
    %1819 = vmatprep.subr.mxu0 %v448
    %1820 = vmatpush1.msra.mxu0 %v447
    %1821 = vmatprep.subr.mxu0 %v450
    %1822 = vmatpush1.msra.mxu0 %v449
    %1823 = vmatprep.subr.mxu0 %v452
    %1824 = vmatpush1.msra.mxu0 %v451
    %1825 = vmatprep.subr.mxu0 %v454
    %1826 = vmatpush1.msra.mxu0 %v453
    %1827 = vmatprep.subr.mxu0 %v456
    %1828 = vmatpush1.msra.mxu0 %v455
    %1829 = vmatprep.subr.mxu0 %v458
    %1830 = vmatpush1.msra.mxu0 %v457
    %1831 = vmatprep.mubr.f32.mxu0 %v1766
    %1832 = vmatmul.mubr.f32.gmra.mrb[0].mxu0 %v1765
    %v1833 = vpop.f32.mrb[0].mxu0
    %v1834 = vadd.f32 0.0, %v1833
    %v1835 = vpop.f32.mrb[0].mxu0
    %v1836 = vadd.f32 0.0, %v1835
    %1837 = vdwg.mxu0
    %v1838 = vmul.f32 %v1834, %v1834
    %v1839 = vmul.f32 %v1836, %v1836
    %v1842 = vrot.slane %v1838, 6
    %v1843 = vrot.slane %v1839, 6
    %v1846 = vsub.f32 %v1834, %v1842
    %v1847 = vsub.f32 %v1836, %v1843
    %v1848 = vmax.f32 %v1846, 0.0
    %v1849 = vmax.f32 %v1847, 0.0
    %v1850 = vsub.f32 %v1755, %v1834
    %v1851 = vsub.f32 %v1756, %v1836
    %v1852 = vadd.f32 %v1848, 1e-05
    %v1853 = vadd.f32 %v1849, 1e-05
    %v1854 = vrsqrt.pop %v1852
    %v1855 = vrsqrt.pop %v1853
    %v1858 = vrot.slane %v1854, 2
    %v1859 = vrot.slane %v1855, 2
    %v1862 = vmul.f32 %v1850, %v1858
    %v1863 = vmul.f32 %v1851, %v1859
    %v1864 = vmul.f32 %v1862, %v562
    %v1865 = vmul.f32 %v1863, %v566
    %v1866 = vadd.f32 %v1864, %v577
    %v1867 = vadd.f32 %v1865, %v581
    %v1868 = vmin.f32 %v1866, 20.0
    %v1869 = vmin.f32 %v1867, 20.0
    %v1870 = vmul.f32 %v1868, 1.442695
    %v1871 = vpow.pop %v1870
    %v1872 = vmul.f32 %v1869, 1.442695
    %v1873 = vpow.pop %v1872
    %v1874 = vmul.f32 %v1871, %v1871
    %v1875 = vmul.f32 %v1873, %v1873
    %v1876 = vmul.f32 %v1871, 2.0
    %v1877 = vmul.f32 %v1873, 2.0
    %v1878 = vadd.f32 %v1874, %v1876
    %v1879 = vadd.f32 %v1875, %v1877
    %v1880 = vmul.f32 %v1866, %v1878
    %v1881 = vmul.f32 %v1867, %v1879
    %v1882 = vadd.f32 %v1878, 2.0
    %v1883 = vadd.f32 %v1879, 2.0
    %v1884 = vrcp.pop %v1882
    %v1885 = vrcp.pop %v1883
    %v1886 = vmul.f32 %v1880, %v1884
    %v1887 = vmul.f32 %v1881, %v1885
    %s1888 = scalar_lea.vmem [#allocation7], 8
    %v1889 = vld [vmem:[%s1888] sm:$0xf]
    %v1892 = vunpack.c.l.s4 1983009808
    %v1893 = vunpack.c.0.s8 %v1892
    %v1894 = vlaneseq
    %v1895 = vshrl.u32 %v1894, 7
    %v1896 = vsub.s32 %v1893, %v1895
    %v1897 = vrot.slane %v1889, %v1896
    %v1898 = vcombine.high %v1897, %v1897
    %v1901 = vadd.f32 %v1886, %v1897
    %v1902 = vadd.f32 %v1887, %v1898
    %v1903 = vpack.c.bf16 %v1901, %v1901
    %v1904 = vpack.c.bf16 %v1902, %v1902
    %1905 = vmatprep.subr.bf16.mxu0 %v764
    %1906 = vmatpush1.bf16.msra.mxu0 %v763
    %1907 = vmatprep.subr.bf16.mxu0 %v766
    %1908 = vmatpush1.bf16.msra.mxu0 %v765
    %1909 = vmatprep.subr.bf16.mxu0 %v768
    %1910 = vmatpush1.bf16.msra.mxu0 %v767
    %1911 = vmatprep.subr.bf16.mxu0 %v770
    %1912 = vmatpush1.bf16.msra.mxu0 %v769
    %1913 = vmatprep.subr.bf16.mxu0 %v772
    %1914 = vmatpush1.bf16.msra.mxu0 %v771
    %1915 = vmatprep.subr.bf16.mxu0 %v774
    %1916 = vmatpush1.bf16.msra.mxu0 %v773
    %1917 = vmatprep.subr.bf16.mxu0 %v776
    %1918 = vmatpush1.bf16.msra.mxu0 %v775
    %1919 = vmatprep.subr.bf16.mxu0 %v778
    %1920 = vmatpush1.bf16.msra.mxu0 %v777
    %1921 = vmatprep.subr.bf16.mxu0 %v780
    %1922 = vmatpush1.bf16.msra.mxu0 %v779
    %1923 = vmatprep.subr.bf16.mxu0 %v782
    %1924 = vmatpush1.bf16.msra.mxu0 %v781
    %1925 = vmatprep.subr.bf16.mxu0 %v784
    %1926 = vmatpush1.bf16.msra.mxu0 %v783
    %1927 = vmatprep.subr.bf16.mxu0 %v786
    %1928 = vmatpush1.bf16.msra.mxu0 %v785
    %1929 = vmatprep.subr.bf16.mxu0 %v788
    %1930 = vmatpush1.bf16.msra.mxu0 %v787
    %1931 = vmatprep.subr.bf16.mxu0 %v790
    %1932 = vmatpush1.bf16.msra.mxu0 %v789
    %1933 = vmatprep.subr.bf16.mxu0 %v792
    %1934 = vmatpush1.bf16.msra.mxu0 %v791
    %1935 = vmatprep.subr.bf16.mxu0 %v794
    %1936 = vmatpush1.bf16.msra.mxu0 %v793
    %1937 = vmatprep.mubr.bf16.mxu0 %v1904
    %1938 = vmatmul.mubr.bf16.gmra.mrb[0].mxu0 %v1903
    %v1939 = vpop.f32.mrb[0].mxu0
    %v1940 = vadd.f32 %v660, %v1939
    %v1941 = vpop.f32.mrb[0].mxu0
    %v1942 = vadd.f32 %v664, %v1941
    %v1943 = vpop.f32.mrb[0].mxu0
    %v1944 = vpop.f32.mrb[0].mxu0
    %1945 = vdwg.mxu0
    %v1946 = vmul.f32 %v1940, %v1940
    %v1947 = vmul.f32 %v1942, %v1942
    %v1950 = vrot.slane %v1946, 6
    %v1951 = vrot.slane %v1947, 6
    %v1954 = vsel %vm392, %v1940, %v1950
    %v1955 = vsel %vm392, %v1942, %v1951
    %1956 = vmatprep.subr.mxu0 %v396
    %1957 = vmatpush1.msra.mxu0 %v395
    %1958 = vmatprep.subr.mxu0 %v398
    %1959 = vmatpush1.msra.mxu0 %v397
    %1960 = vmatprep.subr.mxu0 %v400
    %1961 = vmatpush1.msra.mxu0 %v399
    %1962 = vmatprep.subr.mxu0 %v402
    %1963 = vmatpush1.msra.mxu0 %v401
    %1964 = vmatprep.subr.mxu0 %v404
    %1965 = vmatpush1.msra.mxu0 %v403
    %1966 = vmatprep.subr.mxu0 %v406
    %1967 = vmatpush1.msra.mxu0 %v405
    %1968 = vmatprep.subr.mxu0 %v408
    %1969 = vmatpush1.msra.mxu0 %v407
    %1970 = vmatprep.subr.mxu0 %v410
    %1971 = vmatpush1.msra.mxu0 %v409
    %1972 = vmatprep.subr.mxu0 %v412
    %1973 = vmatpush1.msra.mxu0 %v411
    %1974 = vmatprep.subr.mxu0 %v414
    %1975 = vmatpush1.msra.mxu0 %v413
    %1976 = vmatprep.subr.mxu0 %v416
    %1977 = vmatpush1.msra.mxu0 %v415
    %1978 = vmatprep.subr.mxu0 %v418
    %1979 = vmatpush1.msra.mxu0 %v417
    %1980 = vmatprep.subr.mxu0 %v420
    %1981 = vmatpush1.msra.mxu0 %v419
    %1982 = vmatprep.subr.mxu0 %v422
    %1983 = vmatpush1.msra.mxu0 %v421
    %1984 = vmatprep.subr.mxu0 %v424
    %1985 = vmatpush1.msra.mxu0 %v423
    %1986 = vmatprep.subr.mxu0 %v426
    %1987 = vmatpush1.msra.mxu0 %v425
    %1988 = vmatprep.subr.mxu0 %v428
    %1989 = vmatpush1.msra.mxu0 %v427
    %1990 = vmatprep.subr.mxu0 %v430
    %1991 = vmatpush1.msra.mxu0 %v429
    %1992 = vmatprep.subr.mxu0 %v432
    %1993 = vmatpush1.msra.mxu0 %v431
    %1994 = vmatprep.subr.mxu0 %v434
    %1995 = vmatpush1.msra.mxu0 %v433
    %1996 = vmatprep.subr.mxu0 %v436
    %1997 = vmatpush1.msra.mxu0 %v435
    %1998 = vmatprep.subr.mxu0 %v438
    %1999 = vmatpush1.msra.mxu0 %v437
    %2000 = vmatprep.subr.mxu0 %v440
    %2001 = vmatpush1.msra.mxu0 %v439
    %2002 = vmatprep.subr.mxu0 %v442
    %2003 = vmatpush1.msra.mxu0 %v441
    %2004 = vmatprep.subr.mxu0 %v444
    %2005 = vmatpush1.msra.mxu0 %v443
    %2006 = vmatprep.subr.mxu0 %v446
    %2007 = vmatpush1.msra.mxu0 %v445
    %2008 = vmatprep.subr.mxu0 %v448
    %2009 = vmatpush1.msra.mxu0 %v447
    %2010 = vmatprep.subr.mxu0 %v450
    %2011 = vmatpush1.msra.mxu0 %v449
    %2012 = vmatprep.subr.mxu0 %v452
    %2013 = vmatpush1.msra.mxu0 %v451
    %2014 = vmatprep.subr.mxu0 %v454
    %2015 = vmatpush1.msra.mxu0 %v453
    %2016 = vmatprep.subr.mxu0 %v456
    %2017 = vmatpush1.msra.mxu0 %v455
    %2018 = vmatprep.subr.mxu0 %v458
    %2019 = vmatpush1.msra.mxu0 %v457
    %2020 = vmatprep.mubr.f32.mxu0 %v1955
    %2021 = vmatmul.mubr.f32.gmra.mrb[0].mxu0 %v1954
    %v2022 = vpop.f32.mrb[0].mxu0
    %v2023 = vadd.f32 0.0, %v2022
    %v2024 = vpop.f32.mrb[0].mxu0
    %v2025 = vadd.f32 0.0, %v2024
    %2026 = vdwg.mxu0
    %v2027 = vmul.f32 %v2023, %v2023
    %v2028 = vmul.f32 %v2025, %v2025
    %v2031 = vrot.slane %v2027, 6
    %v2032 = vrot.slane %v2028, 6
    %v2035 = vsub.f32 %v2023, %v2031
    %v2036 = vsub.f32 %v2025, %v2032
    %v2037 = vmax.f32 %v2035, 0.0
    %v2038 = vmax.f32 %v2036, 0.0
    %v2039 = vsub.f32 %v1940, %v2023
    %v2040 = vsub.f32 %v1942, %v2025
    %v2041 = vadd.f32 %v2037, 1e-05
    %v2042 = vadd.f32 %v2038, 1e-05
    %v2043 = vrsqrt.pop %v2041
    %v2044 = vrsqrt.pop %v2042
    %v2047 = vrot.slane %v2043, 2
    %v2048 = vrot.slane %v2044, 2
    %v2051 = vmul.f32 %v2039, %v2047
    %v2052 = vmul.f32 %v2040, %v2048
    %v2053 = vmul.f32 %v2051, %v981
    %v2054 = vmul.f32 %v2052, %v985
    %v2055 = vadd.f32 %v2053, %v996
    %v2056 = vadd.f32 %v2054, %v1000
    %v2057 = vmin.f32 %v2055, 20.0
    %v2058 = vmin.f32 %v2056, 20.0
    %v2059 = vmul.f32 %v2057, 1.442695
    %v2060 = vpow.pop %v2059
    %v2061 = vmul.f32 %v2058, 1.442695
    %v2062 = vpow.pop %v2061
    %v2063 = vmul.f32 %v2060, %v2060
    %v2064 = vmul.f32 %v2062, %v2062
    %v2065 = vmul.f32 %v2060, 2.0
    %v2066 = vmul.f32 %v2062, 2.0
    %v2067 = vadd.f32 %v2063, %v2065
    %v2068 = vadd.f32 %v2064, %v2066
    %v2069 = vmul.f32 %v2055, %v2067
    %v2070 = vmul.f32 %v2056, %v2068
    %v2071 = vadd.f32 %v2067, 2.0
    %v2072 = vadd.f32 %v2068, 2.0
    %v2073 = vrcp.pop %v2071
    %v2074 = vrcp.pop %v2072
    %v2075 = vmul.f32 %v2069, %v2073
    %v2076 = vmul.f32 %v2070, %v2074
    %v2077 = vpack.c.bf16 %v2075, %v2075
    %v2078 = vpack.c.bf16 %v2076, %v2076
    %2079 = vmatprep.subr.bf16.mxu0 0
    %2080 = vmatpush1.bf16.msra.mxu0 %v1123
    %2081 = vmatprep.subr.bf16.mxu0 0
    %2082 = vmatpush1.bf16.msra.mxu0 %v1124
    %2083 = vmatprep.subr.bf16.mxu0 0
    %2084 = vmatpush1.bf16.msra.mxu0 %v1125
    %2085 = vmatprep.subr.bf16.mxu0 0
    %2086 = vmatpush1.bf16.msra.mxu0 %v1126
    %2087 = vmatprep.subr.bf16.mxu0 0
    %2088 = vmatpush1.bf16.msra.mxu0 %v1127
    %2089 = vmatprep.subr.bf16.mxu0 0
    %2090 = vmatpush1.bf16.msra.mxu0 %v1128
    %2091 = vmatprep.subr.bf16.mxu0 0
    %2092 = vmatpush1.bf16.msra.mxu0 %v1129
    %2093 = vmatprep.subr.bf16.mxu0 0
    %2094 = vmatpush1.bf16.msra.mxu0 %v1130
    %2095 = vmatprep.subr.bf16.mxu0 0
    %2096 = vmatpush1.bf16.msra.mxu0 %v1131
    %2097 = vmatprep.subr.bf16.mxu0 0
    %2098 = vmatpush1.bf16.msra.mxu0 %v1132
    %2099 = vmatprep.subr.bf16.mxu0 0
    %2100 = vmatpush1.bf16.msra.mxu0 %v1133
    %2101 = vmatprep.subr.bf16.mxu0 0
    %2102 = vmatpush1.bf16.msra.mxu0 %v1134
    %2103 = vmatprep.subr.bf16.mxu0 0
    %2104 = vmatpush1.bf16.msra.mxu0 %v1135
    %2105 = vmatprep.subr.bf16.mxu0 0
    %2106 = vmatpush1.bf16.msra.mxu0 %v1136
    %2107 = vmatprep.subr.bf16.mxu0 0
    %2108 = vmatpush1.bf16.msra.mxu0 %v1137
    %2109 = vmatprep.subr.bf16.mxu0 0
    %2110 = vmatpush1.bf16.msra.mxu0 %v1138
    %2111 = vmatprep.mubr.bf16.mxu0 %v2078
    %2112 = vmatmul.mubr.bf16.gmra.mrb[0].mxu0 %v2077
    %v2113 = vpop.f32.mrb[0].mxu0
    %v2114 = vadd.f32 %v1750, %v2113
    %v2115 = vpop.f32.mrb[0].mxu0
    %v2116 = vpop.f32.mrb[0].mxu0
    %v2117 = vpop.f32.mrb[0].mxu0
    %2118 = vdwg.mxu0
    %v2119 = vadd.f32 %v2114, %v1195
    %v2120 = vmul.f32 %v1672, 1.003434
    %v2121 = vmul.f32 %v2119, 0.08294388
    %v2122 = vsub.f32 %v2120, %v2121
    %v2123 = vmax.f32 %v2122, -1.0
    %v2124 = vmin.f32 %v2123, 1.0
    %v2125 = vmul.f32 %v2124, 0.9854052
    %v2126 = vmul.f32 %v1672, 0.014588526
    %v2127 = vadd.f32 %v2125, %v2126
    %s2128 = scalar_lea.vmem %s3, 4
    %v2129 = vld [vmem:[%s2128] sm:$0x3]
    %v2130 = vadd.f32 %v2127, %v2129
    %v2131 = vmul.f32 %v2130, %v1210
    %v2132 = vadd.f32 %v2131, %v126
    %v2133 = vpack.c.bf16 %v2132, %v2132
    %2134 = vmatprep.subr.bf16.mxu0 %v242
    %2135 = vmatpush1.bf16.msra.mxu0 %v241
    %2136 = vmatprep.subr.bf16.mxu0 %v245
    %2137 = vmatpush1.bf16.msra.mxu0 %v244
    %2138 = vmatprep.subr.bf16.mxu0 %v248
    %2139 = vmatpush1.bf16.msra.mxu0 %v247
    %2140 = vmatprep.subr.bf16.mxu0 %v251
    %2141 = vmatpush1.bf16.msra.mxu0 %v250
    %2142 = vmatprep.subr.bf16.mxu0 %v254
    %2143 = vmatpush1.bf16.msra.mxu0 %v253
    %2144 = vmatprep.subr.bf16.mxu0 %v257
    %2145 = vmatpush1.bf16.msra.mxu0 %v256
    %2146 = vmatprep.subr.bf16.mxu0 %v260
    %2147 = vmatpush1.bf16.msra.mxu0 %v259
    %2148 = vmatprep.subr.bf16.mxu0 %v263
    %2149 = vmatpush1.bf16.msra.mxu0 %v262
    %2150 = vmatprep.subr.bf16.mxu0 0
    %2151 = vmatpush1.bf16.msra.mxu0 0
    %2152 = vmatprep.subr.bf16.mxu0 0
    %2153 = vmatpush1.bf16.msra.mxu0 0
    %2154 = vmatprep.subr.bf16.mxu0 0
    %2155 = vmatpush1.bf16.msra.mxu0 0
    %2156 = vmatprep.subr.bf16.mxu0 0
    %2157 = vmatpush1.bf16.msra.mxu0 0
    %2158 = vmatprep.subr.bf16.mxu0 0
    %2159 = vmatpush1.bf16.msra.mxu0 0
    %2160 = vmatprep.subr.bf16.mxu0 0
    %2161 = vmatpush1.bf16.msra.mxu0 0
    %2162 = vmatprep.subr.bf16.mxu0 0
    %2163 = vmatpush1.bf16.msra.mxu0 0
    %2164 = vmatprep.subr.bf16.mxu0 0
    %2165 = vmatpush1.bf16.msra.mxu0 0
    %2166 = vmatprep.mubr.bf16.mxu0 0
    %2167 = vmatmul.mubr.bf16.gmra.mrb[0].mxu0 %v2133
    %v2168 = vpop.f32.mrb[0].mxu0
    %v2169 = vadd.f32 0.0, %v2168
    %v2170 = vpop.f32.mrb[0].mxu0
    %v2171 = vadd.f32 0.0, %v2170
    %v2172 = vpop.f32.mrb[0].mxu0
    %v2173 = vpop.f32.mrb[0].mxu0
    %2174 = vdwg.mxu0
    %2175 = vmatprep.subr.bf16.mxu0 0
    %2176 = vmatpush1.bf16.msra.mxu0 %v243
    %2177 = vmatprep.subr.bf16.mxu0 0
    %2178 = vmatpush1.bf16.msra.mxu0 %v246
    %2179 = vmatprep.subr.bf16.mxu0 0
    %2180 = vmatpush1.bf16.msra.mxu0 %v249
    %2181 = vmatprep.subr.bf16.mxu0 0
    %2182 = vmatpush1.bf16.msra.mxu0 %v252
    %2183 = vmatprep.subr.bf16.mxu0 0
    %2184 = vmatpush1.bf16.msra.mxu0 %v255
    %2185 = vmatprep.subr.bf16.mxu0 0
    %2186 = vmatpush1.bf16.msra.mxu0 %v258
    %2187 = vmatprep.subr.bf16.mxu0 0
    %2188 = vmatpush1.bf16.msra.mxu0 %v261
    %2189 = vmatprep.subr.bf16.mxu0 0
    %2190 = vmatpush1.bf16.msra.mxu0 %v264
    %2191 = vmatprep.subr.bf16.mxu0 0
    %2192 = vmatpush1.bf16.msra.mxu0 0
    %2193 = vmatprep.subr.bf16.mxu0 0
    %2194 = vmatpush1.bf16.msra.mxu0 0
    %2195 = vmatprep.subr.bf16.mxu0 0
    %2196 = vmatpush1.bf16.msra.mxu0 0
    %2197 = vmatprep.subr.bf16.mxu0 0
    %2198 = vmatpush1.bf16.msra.mxu0 0
    %2199 = vmatprep.subr.bf16.mxu0 0
    %2200 = vmatpush1.bf16.msra.mxu0 0
    %2201 = vmatprep.subr.bf16.mxu0 0
    %2202 = vmatpush1.bf16.msra.mxu0 0
    %2203 = vmatprep.subr.bf16.mxu0 0
    %2204 = vmatpush1.bf16.msra.mxu0 0
    %2205 = vmatprep.subr.bf16.mxu0 0
    %2206 = vmatpush1.bf16.msra.mxu0 0
    %2207 = vmatprep.mubr.bf16.mxu0 0
    %2208 = vmatmul.mubr.bf16.gmra.mrb[0].mxu0 %v2133
    %v2209 = vpop.f32.mrb[0].mxu0
    %v2210 = vadd.f32 0.0, %v2209
    %v2211 = vpop.f32.mrb[0].mxu0
    %v2212 = vpop.f32.mrb[0].mxu0
    %v2213 = vpop.f32.mrb[0].mxu0
    %2214 = vdwg.mxu0
    %v2215 = vadd.f32 %v2169, %v375
    %v2216 = vadd.f32 %v2171, %v379
    %v2217 = vmul.f32 %v2215, %v2215
    %v2218 = vmul.f32 %v2216, %v2216
    %v2221 = vrot.slane %v2217, 6
    %v2222 = vrot.slane %v2218, 6
    %v2225 = vsel %vm392, %v2215, %v2221
    %v2226 = vsel %vm392, %v2216, %v2222
    %2227 = vmatprep.subr.mxu0 %v396
    %2228 = vmatpush1.msra.mxu0 %v395
    %2229 = vmatprep.subr.mxu0 %v398
    %2230 = vmatpush1.msra.mxu0 %v397
    %2231 = vmatprep.subr.mxu0 %v400
    %2232 = vmatpush1.msra.mxu0 %v399
    %2233 = vmatprep.subr.mxu0 %v402
    %2234 = vmatpush1.msra.mxu0 %v401
    %2235 = vmatprep.subr.mxu0 %v404
    %2236 = vmatpush1.msra.mxu0 %v403
    %2237 = vmatprep.subr.mxu0 %v406
    %2238 = vmatpush1.msra.mxu0 %v405
    %2239 = vmatprep.subr.mxu0 %v408
    %2240 = vmatpush1.msra.mxu0 %v407
    %2241 = vmatprep.subr.mxu0 %v410
    %2242 = vmatpush1.msra.mxu0 %v409
    %2243 = vmatprep.subr.mxu0 %v412
    %2244 = vmatpush1.msra.mxu0 %v411
    %2245 = vmatprep.subr.mxu0 %v414
    %2246 = vmatpush1.msra.mxu0 %v413
    %2247 = vmatprep.subr.mxu0 %v416
    %2248 = vmatpush1.msra.mxu0 %v415
    %2249 = vmatprep.subr.mxu0 %v418
    %2250 = vmatpush1.msra.mxu0 %v417
    %2251 = vmatprep.subr.mxu0 %v420
    %2252 = vmatpush1.msra.mxu0 %v419
    %2253 = vmatprep.subr.mxu0 %v422
    %2254 = vmatpush1.msra.mxu0 %v421
    %2255 = vmatprep.subr.mxu0 %v424
    %2256 = vmatpush1.msra.mxu0 %v423
    %2257 = vmatprep.subr.mxu0 %v426
    %2258 = vmatpush1.msra.mxu0 %v425
    %2259 = vmatprep.subr.mxu0 %v428
    %2260 = vmatpush1.msra.mxu0 %v427
    %2261 = vmatprep.subr.mxu0 %v430
    %2262 = vmatpush1.msra.mxu0 %v429
    %2263 = vmatprep.subr.mxu0 %v432
    %2264 = vmatpush1.msra.mxu0 %v431
    %2265 = vmatprep.subr.mxu0 %v434
    %2266 = vmatpush1.msra.mxu0 %v433
    %2267 = vmatprep.subr.mxu0 %v436
    %2268 = vmatpush1.msra.mxu0 %v435
    %2269 = vmatprep.subr.mxu0 %v438
    %2270 = vmatpush1.msra.mxu0 %v437
    %2271 = vmatprep.subr.mxu0 %v440
    %2272 = vmatpush1.msra.mxu0 %v439
    %2273 = vmatprep.subr.mxu0 %v442
    %2274 = vmatpush1.msra.mxu0 %v441
    %2275 = vmatprep.subr.mxu0 %v444
    %2276 = vmatpush1.msra.mxu0 %v443
    %2277 = vmatprep.subr.mxu0 %v446
    %2278 = vmatpush1.msra.mxu0 %v445
    %2279 = vmatprep.subr.mxu0 %v448
    %2280 = vmatpush1.msra.mxu0 %v447
    %2281 = vmatprep.subr.mxu0 %v450
    %2282 = vmatpush1.msra.mxu0 %v449
    %2283 = vmatprep.subr.mxu0 %v452
    %2284 = vmatpush1.msra.mxu0 %v451
    %2285 = vmatprep.subr.mxu0 %v454
    %2286 = vmatpush1.msra.mxu0 %v453
    %2287 = vmatprep.subr.mxu0 %v456
    %2288 = vmatpush1.msra.mxu0 %v455
    %2289 = vmatprep.subr.mxu0 %v458
    %2290 = vmatpush1.msra.mxu0 %v457
    %2291 = vmatprep.mubr.f32.mxu0 %v2226
    %2292 = vmatmul.mubr.f32.gmra.mrb[0].mxu0 %v2225
    %v2293 = vpop.f32.mrb[0].mxu0
    %v2294 = vadd.f32 0.0, %v2293
    %v2295 = vpop.f32.mrb[0].mxu0
    %v2296 = vadd.f32 0.0, %v2295
    %2297 = vdwg.mxu0
    %v2298 = vmul.f32 %v2294, %v2294
    %v2299 = vmul.f32 %v2296, %v2296
    %v2302 = vrot.slane %v2298, 6
    %v2303 = vrot.slane %v2299, 6
    %v2306 = vsub.f32 %v2294, %v2302
    %v2307 = vsub.f32 %v2296, %v2303
    %v2308 = vmax.f32 %v2306, 0.0
    %v2309 = vmax.f32 %v2307, 0.0
    %v2310 = vsub.f32 %v2215, %v2294
    %v2311 = vsub.f32 %v2216, %v2296
    %v2312 = vadd.f32 %v2308, 1e-05
    %v2313 = vadd.f32 %v2309, 1e-05
    %v2314 = vrsqrt.pop %v2312
    %v2315 = vrsqrt.pop %v2313
    %v2318 = vrot.slane %v2314, 2
    %v2319 = vrot.slane %v2315, 2
    %v2322 = vmul.f32 %v2310, %v2318
    %v2323 = vmul.f32 %v2311, %v2319
    %v2324 = vmul.f32 %v2322, %v562
    %v2325 = vmul.f32 %v2323, %v566
    %v2326 = vadd.f32 %v2324, %v577
    %v2327 = vadd.f32 %v2325, %v581
    %v2328 = vmin.f32 %v2326, 20.0
    %v2329 = vmin.f32 %v2327, 20.0
    %v2330 = vmul.f32 %v2328, 1.442695
    %v2331 = vpow.pop %v2330
    %v2332 = vmul.f32 %v2329, 1.442695
    %v2333 = vpow.pop %v2332
    %v2334 = vmul.f32 %v2331, %v2331
    %v2335 = vmul.f32 %v2333, %v2333
    %v2336 = vmul.f32 %v2331, 2.0
    %v2337 = vmul.f32 %v2333, 2.0
    %v2338 = vadd.f32 %v2334, %v2336
    %v2339 = vadd.f32 %v2335, %v2337
    %v2340 = vmul.f32 %v2326, %v2338
    %v2341 = vmul.f32 %v2327, %v2339
    %v2342 = vadd.f32 %v2338, 2.0
    %v2343 = vadd.f32 %v2339, 2.0
    %v2344 = vrcp.pop %v2342
    %v2345 = vrcp.pop %v2343
    %v2346 = vmul.f32 %v2340, %v2344
    %v2347 = vmul.f32 %v2341, %v2345
    %s2348 = scalar_lea.vmem [#allocation7], 12
    %v2349 = vld [vmem:[%s2348] sm:$0xf]
    %v2352 = vunpack.c.l.s4 1983009808
    %v2353 = vunpack.c.0.s8 %v2352
    %v2354 = vlaneseq
    %v2355 = vshrl.u32 %v2354, 7
    %v2356 = vsub.s32 %v2353, %v2355
    %v2357 = vrot.slane %v2349, %v2356
    %v2358 = vcombine.high %v2357, %v2357
    %v2361 = vadd.f32 %v2346, %v2357
    %v2362 = vadd.f32 %v2347, %v2358
    %v2363 = vpack.c.bf16 %v2361, %v2361
    %v2364 = vpack.c.bf16 %v2362, %v2362
    %2365 = vmatprep.subr.bf16.mxu0 %v764
    %2366 = vmatpush1.bf16.msra.mxu0 %v763
    %2367 = vmatprep.subr.bf16.mxu0 %v766
    %2368 = vmatpush1.bf16.msra.mxu0 %v765
    %2369 = vmatprep.subr.bf16.mxu0 %v768
    %2370 = vmatpush1.bf16.msra.mxu0 %v767
    %2371 = vmatprep.subr.bf16.mxu0 %v770
    %2372 = vmatpush1.bf16.msra.mxu0 %v769
    %2373 = vmatprep.subr.bf16.mxu0 %v772
    %2374 = vmatpush1.bf16.msra.mxu0 %v771
    %2375 = vmatprep.subr.bf16.mxu0 %v774
    %2376 = vmatpush1.bf16.msra.mxu0 %v773
    %2377 = vmatprep.subr.bf16.mxu0 %v776
    %2378 = vmatpush1.bf16.msra.mxu0 %v775
    %2379 = vmatprep.subr.bf16.mxu0 %v778
    %2380 = vmatpush1.bf16.msra.mxu0 %v777
    %2381 = vmatprep.subr.bf16.mxu0 %v780
    %2382 = vmatpush1.bf16.msra.mxu0 %v779
    %2383 = vmatprep.subr.bf16.mxu0 %v782
    %2384 = vmatpush1.bf16.msra.mxu0 %v781
    %2385 = vmatprep.subr.bf16.mxu0 %v784
    %2386 = vmatpush1.bf16.msra.mxu0 %v783
    %2387 = vmatprep.subr.bf16.mxu0 %v786
    %2388 = vmatpush1.bf16.msra.mxu0 %v785
    %2389 = vmatprep.subr.bf16.mxu0 %v788
    %2390 = vmatpush1.bf16.msra.mxu0 %v787
    %2391 = vmatprep.subr.bf16.mxu0 %v790
    %2392 = vmatpush1.bf16.msra.mxu0 %v789
    %2393 = vmatprep.subr.bf16.mxu0 %v792
    %2394 = vmatpush1.bf16.msra.mxu0 %v791
    %2395 = vmatprep.subr.bf16.mxu0 %v794
    %2396 = vmatpush1.bf16.msra.mxu0 %v793
    %2397 = vmatprep.mubr.bf16.mxu0 %v2364
    %2398 = vmatmul.mubr.bf16.gmra.mrb[0].mxu0 %v2363
    %v2399 = vpop.f32.mrb[0].mxu0
    %v2400 = vadd.f32 %v660, %v2399
    %v2401 = vpop.f32.mrb[0].mxu0
    %v2402 = vadd.f32 %v664, %v2401
    %v2403 = vpop.f32.mrb[0].mxu0
    %v2404 = vpop.f32.mrb[0].mxu0
    %2405 = vdwg.mxu0
    %v2406 = vmul.f32 %v2400, %v2400
    %v2407 = vmul.f32 %v2402, %v2402
    %v2410 = vrot.slane %v2406, 6
    %v2411 = vrot.slane %v2407, 6
    %v2414 = vsel %vm392, %v2400, %v2410
    %v2415 = vsel %vm392, %v2402, %v2411
    %2416 = vmatprep.subr.mxu0 %v396
    %2417 = vmatpush1.msra.mxu0 %v395
    %2418 = vmatprep.subr.mxu0 %v398
    %2419 = vmatpush1.msra.mxu0 %v397
    %2420 = vmatprep.subr.mxu0 %v400
    %2421 = vmatpush1.msra.mxu0 %v399
    %2422 = vmatprep.subr.mxu0 %v402
    %2423 = vmatpush1.msra.mxu0 %v401
    %2424 = vmatprep.subr.mxu0 %v404
    %2425 = vmatpush1.msra.mxu0 %v403
    %2426 = vmatprep.subr.mxu0 %v406
    %2427 = vmatpush1.msra.mxu0 %v405
    %2428 = vmatprep.subr.mxu0 %v408
    %2429 = vmatpush1.msra.mxu0 %v407
    %2430 = vmatprep.subr.mxu0 %v410
    %2431 = vmatpush1.msra.mxu0 %v409
    %2432 = vmatprep.subr.mxu0 %v412
    %2433 = vmatpush1.msra.mxu0 %v411
    %2434 = vmatprep.subr.mxu0 %v414
    %2435 = vmatpush1.msra.mxu0 %v413
    %2436 = vmatprep.subr.mxu0 %v416
    %2437 = vmatpush1.msra.mxu0 %v415
    %2438 = vmatprep.subr.mxu0 %v418
    %2439 = vmatpush1.msra.mxu0 %v417
    %2440 = vmatprep.subr.mxu0 %v420
    %2441 = vmatpush1.msra.mxu0 %v419
    %2442 = vmatprep.subr.mxu0 %v422
    %2443 = vmatpush1.msra.mxu0 %v421
    %2444 = vmatprep.subr.mxu0 %v424
    %2445 = vmatpush1.msra.mxu0 %v423
    %2446 = vmatprep.subr.mxu0 %v426
    %2447 = vmatpush1.msra.mxu0 %v425
    %2448 = vmatprep.subr.mxu0 %v428
    %2449 = vmatpush1.msra.mxu0 %v427
    %2450 = vmatprep.subr.mxu0 %v430
    %2451 = vmatpush1.msra.mxu0 %v429
    %2452 = vmatprep.subr.mxu0 %v432
    %2453 = vmatpush1.msra.mxu0 %v431
    %2454 = vmatprep.subr.mxu0 %v434
    %2455 = vmatpush1.msra.mxu0 %v433
    %2456 = vmatprep.subr.mxu0 %v436
    %2457 = vmatpush1.msra.mxu0 %v435
    %2458 = vmatprep.subr.mxu0 %v438
    %2459 = vmatpush1.msra.mxu0 %v437
    %2460 = vmatprep.subr.mxu0 %v440
    %2461 = vmatpush1.msra.mxu0 %v439
    %2462 = vmatprep.subr.mxu0 %v442
    %2463 = vmatpush1.msra.mxu0 %v441
    %2464 = vmatprep.subr.mxu0 %v444
    %2465 = vmatpush1.msra.mxu0 %v443
    %2466 = vmatprep.subr.mxu0 %v446
    %2467 = vmatpush1.msra.mxu0 %v445
    %2468 = vmatprep.subr.mxu0 %v448
    %2469 = vmatpush1.msra.mxu0 %v447
    %2470 = vmatprep.subr.mxu0 %v450
    %2471 = vmatpush1.msra.mxu0 %v449
    %2472 = vmatprep.subr.mxu0 %v452
    %2473 = vmatpush1.msra.mxu0 %v451
    %2474 = vmatprep.subr.mxu0 %v454
    %2475 = vmatpush1.msra.mxu0 %v453
    %2476 = vmatprep.subr.mxu0 %v456
    %2477 = vmatpush1.msra.mxu0 %v455
    %2478 = vmatprep.subr.mxu0 %v458
    %2479 = vmatpush1.msra.mxu0 %v457
    %2480 = vmatprep.mubr.f32.mxu0 %v2415
    %2481 = vmatmul.mubr.f32.gmra.mrb[0].mxu0 %v2414
    %v2482 = vpop.f32.mrb[0].mxu0
    %v2483 = vadd.f32 0.0, %v2482
    %v2484 = vpop.f32.mrb[0].mxu0
    %v2485 = vadd.f32 0.0, %v2484
    %2486 = vdwg.mxu0
    %v2487 = vmul.f32 %v2483, %v2483
    %v2488 = vmul.f32 %v2485, %v2485
    %v2491 = vrot.slane %v2487, 6
    %v2492 = vrot.slane %v2488, 6
    %v2495 = vsub.f32 %v2483, %v2491
    %v2496 = vsub.f32 %v2485, %v2492
    %v2497 = vmax.f32 %v2495, 0.0
    %v2498 = vmax.f32 %v2496, 0.0
    %v2499 = vsub.f32 %v2400, %v2483
    %v2500 = vsub.f32 %v2402, %v2485
    %v2501 = vadd.f32 %v2497, 1e-05
    %v2502 = vadd.f32 %v2498, 1e-05
    %v2503 = vrsqrt.pop %v2501
    %v2504 = vrsqrt.pop %v2502
    %v2507 = vrot.slane %v2503, 2
    %v2508 = vrot.slane %v2504, 2
    %v2511 = vmul.f32 %v2499, %v2507
    %v2512 = vmul.f32 %v2500, %v2508
    %v2513 = vmul.f32 %v2511, %v981
    %v2514 = vmul.f32 %v2512, %v985
    %v2515 = vadd.f32 %v2513, %v996
    %v2516 = vadd.f32 %v2514, %v1000
    %v2517 = vmin.f32 %v2515, 20.0
    %v2518 = vmin.f32 %v2516, 20.0
    %v2519 = vmul.f32 %v2517, 1.442695
    %v2520 = vpow.pop %v2519
    %v2521 = vmul.f32 %v2518, 1.442695
    %v2522 = vpow.pop %v2521
    %v2523 = vmul.f32 %v2520, %v2520
    %v2524 = vmul.f32 %v2522, %v2522
    %v2525 = vmul.f32 %v2520, 2.0
    %v2526 = vmul.f32 %v2522, 2.0
    %v2527 = vadd.f32 %v2523, %v2525
    %v2528 = vadd.f32 %v2524, %v2526
    %v2529 = vmul.f32 %v2515, %v2527
    %v2530 = vmul.f32 %v2516, %v2528
    %v2531 = vadd.f32 %v2527, 2.0
    %v2532 = vadd.f32 %v2528, 2.0
    %v2533 = vrcp.pop %v2531
    %v2534 = vrcp.pop %v2532
    %v2535 = vmul.f32 %v2529, %v2533
    %v2536 = vmul.f32 %v2530, %v2534
    %v2537 = vpack.c.bf16 %v2535, %v2535
    %v2538 = vpack.c.bf16 %v2536, %v2536
    %2539 = vmatprep.subr.bf16.mxu0 0
    %2540 = vmatpush1.bf16.msra.mxu0 %v1123
    %2541 = vmatprep.subr.bf16.mxu0 0
    %2542 = vmatpush1.bf16.msra.mxu0 %v1124
    %2543 = vmatprep.subr.bf16.mxu0 0
    %2544 = vmatpush1.bf16.msra.mxu0 %v1125
    %2545 = vmatprep.subr.bf16.mxu0 0
    %2546 = vmatpush1.bf16.msra.mxu0 %v1126
    %2547 = vmatprep.subr.bf16.mxu0 0
    %2548 = vmatpush1.bf16.msra.mxu0 %v1127
    %2549 = vmatprep.subr.bf16.mxu0 0
    %2550 = vmatpush1.bf16.msra.mxu0 %v1128
    %2551 = vmatprep.subr.bf16.mxu0 0
    %2552 = vmatpush1.bf16.msra.mxu0 %v1129
    %2553 = vmatprep.subr.bf16.mxu0 0
    %2554 = vmatpush1.bf16.msra.mxu0 %v1130
    %2555 = vmatprep.subr.bf16.mxu0 0
    %2556 = vmatpush1.bf16.msra.mxu0 %v1131
    %2557 = vmatprep.subr.bf16.mxu0 0
    %2558 = vmatpush1.bf16.msra.mxu0 %v1132
    %2559 = vmatprep.subr.bf16.mxu0 0
    %2560 = vmatpush1.bf16.msra.mxu0 %v1133
    %2561 = vmatprep.subr.bf16.mxu0 0
    %2562 = vmatpush1.bf16.msra.mxu0 %v1134
    %2563 = vmatprep.subr.bf16.mxu0 0
    %2564 = vmatpush1.bf16.msra.mxu0 %v1135
    %2565 = vmatprep.subr.bf16.mxu0 0
    %2566 = vmatpush1.bf16.msra.mxu0 %v1136
    %2567 = vmatprep.subr.bf16.mxu0 0
    %2568 = vmatpush1.bf16.msra.mxu0 %v1137
    %2569 = vmatprep.subr.bf16.mxu0 0
    %2570 = vmatpush1.bf16.msra.mxu0 %v1138
    %2571 = vmatprep.mubr.bf16.mxu0 %v2538
    %2572 = vmatmul.mubr.bf16.gmra.mrb[0].mxu0 %v2537
    %v2573 = vpop.f32.mrb[0].mxu0
    %v2574 = vadd.f32 %v2210, %v2573
    %v2575 = vpop.f32.mrb[0].mxu0
    %v2576 = vpop.f32.mrb[0].mxu0
    %v2577 = vpop.f32.mrb[0].mxu0
    %2578 = vdwg.mxu0
    %v2579 = vadd.f32 %v2574, %v1195
    %v2580 = vmul.f32 %v2132, 1.0000501
    %v2581 = vmul.f32 %v2579, 0.01000083
    %v2582 = vsub.f32 %v2580, %v2581
    %v2583 = vmax.f32 %v2582, -1.0
    %v2584 = vmin.f32 %v2583, 1.0
    %v2585 = vmul.f32 %v2584, 0.99983406
    %v2586 = vmul.f32 %v2132, 0.0
    %v2587 = vadd.f32 %v2585, %v2586
    %v2588 = vmul.f32 %v2587, %v1210
    %v2589 = vadd.f32 %v2588, %v126
    %2590 = vst [vmem:[#allocation14] sm:$0x3] %v2589
    // Predicated region
    $region66: #{tpu_custom_call.1} parent=1 // pred_check
      _
    $region67: #{tpu_custom_call.1} parent=1 // pred_check_branch
      %2592 = sbr.rel (0) target = $region69
    $region68: #{tpu_custom_call.1} parent=1 // pred_region
      %s2594 = ssub.s32 32, 32
      %2595 = vsyncadd [#allocation4], %s2594
      %s2597 = sshll.u32 [#allocation14], 4
      %s2598 = int_to_ptr.vmem [resolvable:$true] %s2597
      %2600 = dma.vmem_to_hbm [thread:$0]  %s2598, 32, %s9, [#allocation4]
    $region69: #{tpu_custom_call.1} parent=1 // pred_fallthru
      _
    // Predicated region
    $region70: #{tpu_custom_call.1} parent=1 // pred_check
      _
    $region71: #{tpu_custom_call.1} parent=1 // pred_check_branch
      %2602 = sbr.rel (0) target = $region73
    $region72: #{tpu_custom_call.1} parent=1 // pred_region
      %2603 = dma.done [#allocation4], 32
    $region73: #{tpu_custom_call.1} parent=1 // pred_fallthru
      _
    %2604 = vsyncpa [#allocation3], 1
    %2605 = vsyncpa [#allocation6], 1
    %2606 = vsyncpa [#allocation9], 1
    %2607 = vsyncpa [#allocation12], 1
    %2608 = vsyncpa [#allocation4], 1

</llo_original>
